<compile_context>
chip_gen: v7x
topology: tpu7x:2x2x1
jax: 0.10.0
libtpu: 0.0.40
codegen_flags: <defaults>
</compile_context>

<pallas_src>
import functools

import jax
import jax.numpy as jnp
from jax.experimental import pallas as pl
from jax.experimental.pallas import tpu as pltpu


# ----------------------------- config ---------------------------------------
class Cfg:
    vocab_size = 50
    max_position = 16
    type_vocab = 2
    hidden_size = 32
    num_heads = 2
    num_layers = 2
    intermediate = 64
    num_type = 4
    ln_eps = 1e-12


CFG = Cfg()
HEAD_W = 128   # lane-dense width of the fused head-output slab (multiple of 128)


# --------------------------- kernel helpers ----------------------------------
def _layernorm(x, gamma, beta, eps):
    mu = jnp.mean(x, axis=-1, keepdims=True)
    var = jnp.mean((x - mu) ** 2, axis=-1, keepdims=True)
    return (x - mu) * jax.lax.rsqrt(var + eps) * gamma + beta


# ------------------------ fused BERT-for-QA kernel ---------------------------
def fused_bert_kernel(emb_ref, mask_ref, eg_ref, eb_ref,
                      wqkvT_ref, bqkvT_ref, wo_ref, bo_ref,
                      ln1g_ref, ln1b_ref, w1_ref, b1_ref, w2_ref, b2_ref,
                      ln2g_ref, ln2b_ref,
                      wqa_ref, bqa_ref, wt_ref, bt_ref, sel_ref,
                      head_ref, *, S, NH, NL):
    """One grid step == one full sequence (embedding LN -> L layers -> heads).

    emb_ref  : (S, H)      raw (pre-LN) embedding sum for this sequence.
    mask_ref : (1, 1, S)   additive attention bias over keys for this sequence.
    head_ref : (S, HEAD_W) lane-dense output slab for this sequence.
    weights  : full L-stacked arrays, VMEM-resident (constant index_map).
    """
    H = emb_ref.shape[-1]
    DH = H // NH
    eps = CFG.ln_eps

    # ---- embedding LayerNorm -> hidden_states[0] ------------------------------
    h0 = _layernorm(emb_ref[...], eg_ref[...], eb_ref[...], eps)      # (S, H)

    # Additive key mask, broadcast ONCE and reused by every head of every layer
    # (hoisted: JAX does not CSE broadcast_in_dim).  Kept in f32 (+-1e9 bias).
    mask_bc = jnp.broadcast_to(mask_ref[0], (S, S))                    # (Sq, Sk)

    x = h0                                                             # f32 carry
    for l in range(NL):           # layers unrolled in-kernel (toy depth; see note)
        x_bf = x.astype(jnp.bfloat16)

        # ---- fused QKV projection in transposed space: (3H,H)x(S,H)^T -> (3H,S)
        # Rows are head-major [Q|K|V]; 1/sqrt(DH) is pre-folded into the Q rows.
        qkvT = jax.lax.dot_general(
            wqkvT_ref[l], x_bf, (((1,), (1,)), ((), ())),
            preferred_element_type=jnp.float32) + bqkvT_ref[l]         # (3H, S)
        qkvT_bf = qkvT.astype(jnp.bfloat16)

        # ---- attention: per-head views are free 8-aligned SUBLANE slices ------
        ctxT_heads = []
        for h in range(NH):
            qT = qkvT_bf[h * DH:(h + 1) * DH, :]                       # (DH, S)
            kT = qkvT_bf[H + h * DH:H + (h + 1) * DH, :]               # (DH, S)
            vT = qkvT_bf[2 * H + h * DH:2 * H + (h + 1) * DH, :]       # (DH, S)

            s = jax.lax.dot_general(            # q @ k^T   ('ds,dt->st')
                qT, kT, (((0,), (0,)), ((), ())),
                preferred_element_type=jnp.float32)                    # (Sq, Sk)
            s = s + mask_bc
            m = jnp.max(s, axis=-1, keepdims=True)
            e = jnp.exp(s - m)
            p = e * pl.reciprocal(jnp.sum(e, axis=-1, keepdims=True), approx=True)

            ctxT_heads.append(jax.lax.dot_general(   # ctx^T ('dk,qk->dq')
                vT, p.astype(jnp.bfloat16), (((1,), (1,)), ((), ())),
                preferred_element_type=jnp.float32))                   # (DH, S)

        # head merge = sublane concat of vreg-aligned (DH,S) blocks -> (H, S)
        ctxT = jnp.concatenate(ctxT_heads, axis=0).astype(jnp.bfloat16)

        attn = jax.lax.dot_general(                 # ('hs,ho->so')
            ctxT, wo_ref[l], (((0,), (0,)), ((), ())),
            preferred_element_type=jnp.float32) + bo_ref[l]            # (S, H)

        h1 = _layernorm(x + attn, ln1g_ref[l], ln1b_ref[l], eps)

        # ---- FFN ---------------------------------------------------------------
        ff = jnp.dot(h1.astype(jnp.bfloat16), w1_ref[l],
                     preferred_element_type=jnp.float32) + b1_ref[l]
        # TODO(synk): HF BERT uses exact erf GELU; tanh approximation kept for
        # robust TPU (EUP) lowering -- small numerical divergence from PyTorch.
        ff = jax.nn.gelu(ff, approximate=True)
        ff = jnp.dot(ff.astype(jnp.bfloat16), w2_ref[l],
                     preferred_element_type=jnp.float32) + b2_ref[l]

        x = _layernorm(h1 + ff, ln2g_ref[l], ln2b_ref[l], eps)

    # ---- fused QA head + type head -> one lane-dense (S, HEAD_W) slab ---------
    # qa_outputs Linear(H,2), weight lane-padded to HEAD_W -> full-width store.
    qa_pad = jnp.dot(x.astype(jnp.bfloat16), wqa_ref[...],
                     preferred_element_type=jnp.float32) + bqa_ref[...]
    # type head on hidden_states[0][:, 0:] (== all tokens of the embedding-LN
    # output, per HF's hidden_states[0] convention).
    tl = jnp.dot(h0.astype(jnp.bfloat16), wt_ref[...],
                 preferred_element_type=jnp.float32) + bt_ref[...]     # (S, NT)
    te = jnp.exp(tl - jnp.max(tl, axis=-1, keepdims=True))
    tp = te / jnp.sum(te, axis=-1, keepdims=True)      # exact divide: model output
    # place type probabilities at lanes 2:2+NT via a constant selector matmul.
    # kept in f32 so the returned probabilities stay f32-exact (negligible cost).
    head_ref[...] = qa_pad + jnp.dot(tp, sel_ref[...],
                                     preferred_element_type=jnp.float32)


def bert_stack_and_heads(params, emb2d, mask_bias, B, S):
    c = CFG
    L, H, I, NT = c.num_layers, c.hidden_size, c.intermediate, c.num_type

    kernel = functools.partial(fused_bert_kernel, S=S, NH=c.num_heads, NL=L)

    def _full(ndim):                 # resident input: constant block index
        return lambda b: (0,) * ndim

    # NOTE(v7x): at production sizes the constant-index resident inputs below
    # should be single-buffered (pipeline_mode=pl.Buffered(1)); at toy sizes the
    # double-buffer waste is a few tens of KB, so the default is kept.
    in_specs = [
        pl.BlockSpec((S, H), lambda b: (b, 0)),          # emb rows of sequence b
        pl.BlockSpec((1, 1, S), lambda b: (b, 0, 0)),    # additive key mask of b
        pl.BlockSpec((1, H), _full(2)),                  # emb LN gamma
        pl.BlockSpec((1, H), _full(2)),                  # emb LN beta
        pl.BlockSpec((L, 3 * H, H), _full(3)),           # Wqkv^T (bf16, Q-scaled)
        pl.BlockSpec((L, 3 * H, 1), _full(3)),           # bqkv^T
        pl.BlockSpec((L, H, H), _full(3)),               # Wo (bf16)
        pl.BlockSpec((L, 1, H), _full(3)),               # bo
        pl.BlockSpec((L, 1, H), _full(3)),               # LN1 gamma
        pl.BlockSpec((L, 1, H), _full(3)),               # LN1 beta
        pl.BlockSpec((L, H, I), _full(3)),               # W1 (bf16)
        pl.BlockSpec((L, 1, I), _full(3)),               # b1
        pl.BlockSpec((L, I, H), _full(3)),               # W2 (bf16)
        pl.BlockSpec((L, 1, H), _full(3)),               # b2
        pl.BlockSpec((L, 1, H), _full(3)),               # LN2 gamma
        pl.BlockSpec((L, 1, H), _full(3)),               # LN2 beta
        pl.BlockSpec((H, HEAD_W), _full(2)),             # QA head weight (bf16, padded)
        pl.BlockSpec((1, HEAD_W), _full(2)),             # QA head bias   (padded)
        pl.BlockSpec((H, NT), _full(2)),                 # type head weight (bf16)
        pl.BlockSpec((1, NT), _full(2)),                 # type head bias
        pl.BlockSpec((NT, HEAD_W), _full(2)),            # type-prob lane selector (f32)
    ]

    head = pl.pallas_call(
        kernel,
        out_shape=jax.ShapeDtypeStruct((B * S, HEAD_W), jnp.float32),
        grid_spec=pltpu.PrefetchScalarGridSpec(
            num_scalar_prefetch=0,
            grid=(B,),                                   # one sequence per step
            in_specs=in_specs,
            out_specs=pl.BlockSpec((S, HEAD_W), lambda b: (b, 0))),
        compiler_params=pltpu.CompilerParams(
            dimension_semantics=("parallel",),           # megacore sharding (v7x)
            vmem_limit_bytes=48 * 1024 * 1024),          # > 16/32 MiB defaults, < 64 MiB
    )(emb2d, mask_bias,
      params['emb_ln_g'], params['emb_ln_b'],
      params['wqkvT'], params['bqkvT'], params['wo'], params['bo'],
      params['ln1_g'], params['ln1_b'], params['w1'], params['b1'],
      params['w2'], params['b2'], params['ln2_g'], params['ln2_b'],
      params['wqa'], params['bqa'], params['wtype'], params['btype'],
      params['type_sel'])
    return head


# ----------------------------- parameters ------------------------------------
def init_params(key):
    c = CFG
    H, I, L = c.hidden_size, c.intermediate, c.num_layers
    NT, NH = c.num_type, c.num_heads
    DH = H // NH

    def nrm(k, shape):
        return (jax.random.normal(k, shape) * 0.02).astype(jnp.float32)

    keys = iter(jax.random.split(key, 12))
    wqa_cols = nrm(next(keys), (H, 2))

    # 1/sqrt(DH) folded into the Q rows of the transposed fused QKV weight+bias.
    q_row_scale = jnp.concatenate(
        [jnp.full((H,), 1.0 / float(DH) ** 0.5, jnp.float32),
         jnp.ones((2 * H,), jnp.float32)]).reshape(1, 3 * H, 1)

    params = {
        'word_emb': nrm(next(keys), (c.vocab_size, H)),
        'pos_emb': nrm(next(keys), (c.max_position, H)),
        'type_emb': nrm(next(keys), (c.type_vocab, H)),
        'emb_ln_g': jnp.ones((1, H), jnp.float32),
        'emb_ln_b': jnp.zeros((1, H), jnp.float32),
        # Wqkv stored TRANSPOSED (rows = head-major [Q|K|V] output features) so the
        # in-kernel projection yields a head-major (3H, S) slab; bf16 MXU operand.
        'wqkvT': (nrm(next(keys), (L, 3 * H, H)) * q_row_scale).astype(jnp.bfloat16),
        'bqkvT': jnp.zeros((L, 3 * H, 1), jnp.float32) * q_row_scale,
        'wo': nrm(next(keys), (L, H, H)).astype(jnp.bfloat16),
        'bo': jnp.zeros((L, 1, H), jnp.float32),
        'ln1_g': jnp.ones((L, 1, H), jnp.float32),
        'ln1_b': jnp.zeros((L, 1, H), jnp.float32),
        'w1': nrm(next(keys), (L, H, I)).astype(jnp.bfloat16),
        'b1': jnp.zeros((L, 1, I), jnp.float32),
        'w2': nrm(next(keys), (L, I, H)).astype(jnp.bfloat16),
        'b2': jnp.zeros((L, 1, H), jnp.float32),
        'ln2_g': jnp.ones((L, 1, H), jnp.float32),
        'ln2_b': jnp.zeros((L, 1, H), jnp.float32),
        # qa_outputs Linear(H, 2) padded to a lane-dense (H, HEAD_W) slab (bf16).
        'wqa': jnp.zeros((H, HEAD_W), jnp.float32).at[:, 0:2].set(wqa_cols)
                  .astype(jnp.bfloat16),
        'bqa': jnp.zeros((1, HEAD_W), jnp.float32),
        # type_linear Linear(H, num_type) + selector placing probs at cols 2:2+NT.
        'wtype': nrm(next(keys), (H, NT)).astype(jnp.bfloat16),
        'btype': jnp.zeros((1, NT), jnp.float32),
        'type_sel': jnp.zeros((NT, HEAD_W), jnp.float32)
                       .at[jnp.arange(NT), 2 + jnp.arange(NT)].set(1.0),
    }
    return params


# ------------------------------ forward --------------------------------------
def bert_for_qa_forward(params, inputs):
    c = CFG
    input_ids = inputs['input_ids']                       # (B, S) int32
    attention_mask = inputs['attention_mask'].astype(jnp.float32)
    token_type_ids = inputs['token_type_ids']
    B, S = input_ids.shape

    # Embedding gathers are glue; everything else runs in one fused Pallas call.
    emb = (params['word_emb'][input_ids]
           + params['pos_emb'][jnp.arange(S)][None, :, :]
           + params['type_emb'][token_type_ids])          # (B, S, H) pre-LN
    emb2d = emb.reshape(B * S, c.hidden_size)
    mask_bias = ((attention_mask - 1.0) * 1e9).reshape(B, 1, S)   # additive, f32

    head = bert_stack_and_heads(params, emb2d, mask_bias, B, S)   # (B*S, HEAD_W)

    start_logits = head[:, 0].reshape(B, S)
    end_logits = head[:, 1].reshape(B, S)
    type_prob = head[:, 2:2 + c.num_type].reshape(B, S, c.num_type)

    # TODO(synk): no start/end labels are supplied, so like HF the loss defaults to
    # an empty tensor (torch.tensor([])) -> empty array placeholder here.
    loss = jnp.zeros((0,), jnp.float32)
    return loss, start_logits, end_logits, type_prob


# -------------------------------- main ---------------------------------------
if __name__ == "__main__":
    key = jax.random.PRNGKey(0)
    k_param, k_ids = jax.random.split(key)

    B, S = 2, 8
    params = init_params(k_param)
    inputs = {
        'input_ids': jax.random.randint(k_ids, (B, S), 0, CFG.vocab_size,
                                        dtype=jnp.int32),
        'attention_mask': jnp.ones((B, S), jnp.int32),
        'token_type_ids': jnp.zeros((B, S), jnp.int32),
    }

    loss, start_logits, end_logits, type_prob = bert_for_qa_forward(params, inputs)
    jax.block_until_ready((loss, start_logits, end_logits, type_prob))

    assert start_logits.shape == (B, S)
    assert end_logits.shape == (B, S)
    assert type_prob.shape == (B, S, CFG.num_type)
    assert bool(jnp.allclose(jnp.sum(type_prob, axis=-1), 1.0, atol=1e-4))

    print("KERNEL_OK")
</pallas_src>

<mosaic_0001>
module attributes {stable_mosaic.version = 11 : i64} {
  func.func @fused_bert_kernel(%arg0: i32, %arg1: memref<8x32xf32, #tpu.memory_space<vmem>>, %arg2: memref<1x1x8xf32, #tpu.memory_space<vmem>>, %arg3: memref<1x32xf32, #tpu.memory_space<vmem>>, %arg4: memref<1x32xf32, #tpu.memory_space<vmem>>, %arg5: memref<2x96x32xbf16, #tpu.memory_space<vmem>>, %arg6: memref<2x96x1xf32, #tpu.memory_space<vmem>>, %arg7: memref<2x32x32xbf16, #tpu.memory_space<vmem>>, %arg8: memref<2x1x32xf32, #tpu.memory_space<vmem>>, %arg9: memref<2x1x32xf32, #tpu.memory_space<vmem>>, %arg10: memref<2x1x32xf32, #tpu.memory_space<vmem>>, %arg11: memref<2x32x64xbf16, #tpu.memory_space<vmem>>, %arg12: memref<2x1x64xf32, #tpu.memory_space<vmem>>, %arg13: memref<2x64x32xbf16, #tpu.memory_space<vmem>>, %arg14: memref<2x1x32xf32, #tpu.memory_space<vmem>>, %arg15: memref<2x1x32xf32, #tpu.memory_space<vmem>>, %arg16: memref<2x1x32xf32, #tpu.memory_space<vmem>>, %arg17: memref<32x128xbf16, #tpu.memory_space<vmem>>, %arg18: memref<1x128xf32, #tpu.memory_space<vmem>>, %arg19: memref<32x4xbf16, #tpu.memory_space<vmem>>, %arg20: memref<1x4xf32, #tpu.memory_space<vmem>>, %arg21: memref<4x128xf32, #tpu.memory_space<vmem>>, %arg22: memref<8x128xf32, #tpu.memory_space<vmem>>) attributes {dimension_semantics = [#tpu.dimension_semantics<parallel>], iteration_bounds = array<i64: 2>, scalar_prefetch = 0 : i64, scratch_operands = 0 : i64, tpu.core_type = #tpu.core_type<tc>, window_params = [{transform_indices = @transform_0, window_bounds = array<i64: 8, 32>}, {transform_indices = @transform_1, window_bounds = array<i64: 1, 1, 8>}, {pipeline_mode = #tpu.pipeline_mode<synchronous>, transform_indices = @transform_2, window_bounds = array<i64: 1, 32>}, {pipeline_mode = #tpu.pipeline_mode<synchronous>, transform_indices = @transform_3, window_bounds = array<i64: 1, 32>}, {pipeline_mode = #tpu.pipeline_mode<synchronous>, transform_indices = @transform_4, window_bounds = array<i64: 2, 96, 32>}, {pipeline_mode = #tpu.pipeline_mode<synchronous>, transform_indices = @transform_5, window_bounds = array<i64: 2, 96, 1>}, {pipeline_mode = #tpu.pipeline_mode<synchronous>, transform_indices = @transform_6, window_bounds = array<i64: 2, 32, 32>}, {pipeline_mode = #tpu.pipeline_mode<synchronous>, transform_indices = @transform_7, window_bounds = array<i64: 2, 1, 32>}, {pipeline_mode = #tpu.pipeline_mode<synchronous>, transform_indices = @transform_8, window_bounds = array<i64: 2, 1, 32>}, {pipeline_mode = #tpu.pipeline_mode<synchronous>, transform_indices = @transform_9, window_bounds = array<i64: 2, 1, 32>}, {pipeline_mode = #tpu.pipeline_mode<synchronous>, transform_indices = @transform_10, window_bounds = array<i64: 2, 32, 64>}, {pipeline_mode = #tpu.pipeline_mode<synchronous>, transform_indices = @transform_11, window_bounds = array<i64: 2, 1, 64>}, {pipeline_mode = #tpu.pipeline_mode<synchronous>, transform_indices = @transform_12, window_bounds = array<i64: 2, 64, 32>}, {pipeline_mode = #tpu.pipeline_mode<synchronous>, transform_indices = @transform_13, window_bounds = array<i64: 2, 1, 32>}, {pipeline_mode = #tpu.pipeline_mode<synchronous>, transform_indices = @transform_14, window_bounds = array<i64: 2, 1, 32>}, {pipeline_mode = #tpu.pipeline_mode<synchronous>, transform_indices = @transform_15, window_bounds = array<i64: 2, 1, 32>}, {pipeline_mode = #tpu.pipeline_mode<synchronous>, transform_indices = @transform_16, window_bounds = array<i64: 32, 128>}, {pipeline_mode = #tpu.pipeline_mode<synchronous>, transform_indices = @transform_17, window_bounds = array<i64: 1, 128>}, {pipeline_mode = #tpu.pipeline_mode<synchronous>, transform_indices = @transform_18, window_bounds = array<i64: 32, 4>}, {pipeline_mode = #tpu.pipeline_mode<synchronous>, transform_indices = @transform_19, window_bounds = array<i64: 1, 4>}, {pipeline_mode = #tpu.pipeline_mode<synchronous>, transform_indices = @transform_20, window_bounds = array<i64: 4, 128>}, {transform_indices = @transform_21, window_bounds = array<i64: 8, 128>}]} {
    %c0 = arith.constant 0 : index
    %c0_0 = arith.constant 0 : index
    %0 = vector.load %arg1[%c0, %c0_0] : memref<8x32xf32, #tpu.memory_space<vmem>>, vector<8x32xf32>
    %c0_1 = arith.constant 0 : index
    %c0_2 = arith.constant 0 : index
    %1 = vector.load %arg3[%c0_1, %c0_2] : memref<1x32xf32, #tpu.memory_space<vmem>>, vector<1x32xf32>
    %c0_3 = arith.constant 0 : index
    %c0_4 = arith.constant 0 : index
    %2 = vector.load %arg4[%c0_3, %c0_4] : memref<1x32xf32, #tpu.memory_space<vmem>>, vector<1x32xf32>
    %cst = arith.constant dense<0.000000e+00> : vector<8xf32>
    %3 = vector.multi_reduction <add>, %0, %cst [1] : vector<8x32xf32> to vector<8xf32>
    %4 = vector.shape_cast %3 : vector<8xf32> to vector<8x1xf32>
    %cst_5 = arith.constant 3.200000e+01 : f32
    %5 = vector.broadcast %cst_5 : f32 to vector<8x1xf32>
    %6 = arith.divf %4, %5 : vector<8x1xf32>
    %7 = vector.broadcast %6 : vector<8x1xf32> to vector<8x32xf32>
    %8 = arith.subf %0, %7 : vector<8x32xf32>
    %9 = arith.mulf %8, %8 : vector<8x32xf32>
    %cst_6 = arith.constant dense<0.000000e+00> : vector<8xf32>
    %10 = vector.multi_reduction <add>, %9, %cst_6 [1] : vector<8x32xf32> to vector<8xf32>
    %11 = vector.shape_cast %10 : vector<8xf32> to vector<8x1xf32>
    %cst_7 = arith.constant 3.200000e+01 : f32
    %12 = vector.broadcast %cst_7 : f32 to vector<8x1xf32>
    %13 = arith.divf %11, %12 : vector<8x1xf32>
    %14 = vector.broadcast %6 : vector<8x1xf32> to vector<8x32xf32>
    %15 = arith.subf %0, %14 : vector<8x32xf32>
    %cst_8 = arith.constant 9.99999996E-13 : f32
    %16 = vector.broadcast %cst_8 : f32 to vector<8x1xf32>
    %17 = arith.addf %13, %16 : vector<8x1xf32>
    %18 = math.rsqrt %17 : vector<8x1xf32>
    %19 = vector.broadcast %18 : vector<8x1xf32> to vector<8x32xf32>
    %20 = arith.mulf %15, %19 : vector<8x32xf32>
    %21 = vector.broadcast %1 : vector<1x32xf32> to vector<8x32xf32>
    %22 = arith.mulf %20, %21 : vector<8x32xf32>
    %23 = vector.broadcast %2 : vector<1x32xf32> to vector<8x32xf32>
    %24 = arith.addf %22, %23 : vector<8x32xf32>
    %c0_9 = arith.constant 0 : index
    %c0_10 = arith.constant 0 : index
    %c0_11 = arith.constant 0 : index
    %25 = vector.load %arg2[%c0_9, %c0_10, %c0_11] : memref<1x1x8xf32, #tpu.memory_space<vmem>>, vector<1x1x8xf32>
    %26 = vector.shape_cast %25 : vector<1x1x8xf32> to vector<1x8xf32>
    %27 = vector.shape_cast %26 : vector<1x8xf32> to vector<1x8xf32>
    %28 = vector.broadcast %27 : vector<1x8xf32> to vector<8x8xf32>
    %29 = arith.truncf %24 : vector<8x32xf32> to vector<8x32xbf16>
    %c0_12 = arith.constant 0 : index
    %c0_13 = arith.constant 0 : index
    %c0_14 = arith.constant 0 : index
    %30 = vector.load %arg5[%c0_12, %c0_13, %c0_14] : memref<2x96x32xbf16, #tpu.memory_space<vmem>>, vector<1x96x32xbf16>
    %31 = vector.shape_cast %30 : vector<1x96x32xbf16> to vector<96x32xbf16>
    %cst_15 = arith.constant dense<0.000000e+00> : vector<96x8xf32>
    %32 = tpu.matmul %31, %29, %cst_15 {dimension_numbers = #tpu.dot_dimension_numbers<[1], [1], [0], [0], [0, 0, 1, 0], [], []>} : vector<96x32xbf16>, vector<8x32xbf16>, vector<96x8xf32> -> vector<96x8xf32>
    %c0_16 = arith.constant 0 : index
    %c0_17 = arith.constant 0 : index
    %c0_18 = arith.constant 0 : index
    %33 = vector.load %arg6[%c0_16, %c0_17, %c0_18] : memref<2x96x1xf32, #tpu.memory_space<vmem>>, vector<1x96x1xf32>
    %34 = vector.shape_cast %33 : vector<1x96x1xf32> to vector<96x1xf32>
    %35 = vector.broadcast %34 : vector<96x1xf32> to vector<96x8xf32>
    %36 = arith.addf %32, %35 : vector<96x8xf32>
    %37 = arith.truncf %36 : vector<96x8xf32> to vector<96x8xbf16>
    %38 = vector.extract_strided_slice %37 {offsets = [0, 0], sizes = [16, 8], strides = [1, 1]} : vector<96x8xbf16> to vector<16x8xbf16>
    %39 = vector.extract_strided_slice %37 {offsets = [32, 0], sizes = [16, 8], strides = [1, 1]} : vector<96x8xbf16> to vector<16x8xbf16>
    %40 = vector.extract_strided_slice %37 {offsets = [64, 0], sizes = [16, 8], strides = [1, 1]} : vector<96x8xbf16> to vector<16x8xbf16>
    %cst_19 = arith.constant dense<0.000000e+00> : vector<8x8xf32>
    %41 = tpu.matmul %38, %39, %cst_19 {dimension_numbers = #tpu.dot_dimension_numbers<[0], [0], [1], [1], [0, 1, 1, 1], [], []>} : vector<16x8xbf16>, vector<16x8xbf16>, vector<8x8xf32> -> vector<8x8xf32>
    %42 = arith.addf %41, %28 : vector<8x8xf32>
    %cst_20 = arith.constant dense<0xFF800000> : vector<8xf32>
    %43 = vector.multi_reduction <maximumf>, %42, %cst_20 [1] : vector<8x8xf32> to vector<8xf32>
    %44 = vector.shape_cast %43 : vector<8xf32> to vector<8x1xf32>
    %45 = vector.broadcast %44 : vector<8x1xf32> to vector<8x8xf32>
    %46 = arith.subf %42, %45 : vector<8x8xf32>
    %47 = math.exp %46 : vector<8x8xf32>
    %cst_21 = arith.constant dense<0.000000e+00> : vector<8xf32>
    %48 = vector.multi_reduction <add>, %47, %cst_21 [1] : vector<8x8xf32> to vector<8xf32>
    %49 = vector.shape_cast %48 : vector<8xf32> to vector<8x1xf32>
    %50 = tpu.reciprocal %49 {approx = true} : vector<8x1xf32> -> vector<8x1xf32>
    %51 = vector.broadcast %50 : vector<8x1xf32> to vector<8x8xf32>
    %52 = arith.mulf %47, %51 : vector<8x8xf32>
    %53 = arith.truncf %52 : vector<8x8xf32> to vector<8x8xbf16>
    %cst_22 = arith.constant dense<0.000000e+00> : vector<16x8xf32>
    %54 = tpu.matmul %40, %53, %cst_22 {dimension_numbers = #tpu.dot_dimension_numbers<[1], [1], [0], [0], [0, 0, 1, 0], [], []>} : vector<16x8xbf16>, vector<8x8xbf16>, vector<16x8xf32> -> vector<16x8xf32>
    %55 = vector.extract_strided_slice %37 {offsets = [16, 0], sizes = [16, 8], strides = [1, 1]} : vector<96x8xbf16> to vector<16x8xbf16>
    %56 = vector.extract_strided_slice %37 {offsets = [48, 0], sizes = [16, 8], strides = [1, 1]} : vector<96x8xbf16> to vector<16x8xbf16>
    %57 = vector.extract_strided_slice %37 {offsets = [80, 0], sizes = [16, 8], strides = [1, 1]} : vector<96x8xbf16> to vector<16x8xbf16>
    %cst_23 = arith.constant dense<0.000000e+00> : vector<8x8xf32>
    %58 = tpu.matmul %55, %56, %cst_23 {dimension_numbers = #tpu.dot_dimension_numbers<[0], [0], [1], [1], [0, 1, 1, 1], [], []>} : vector<16x8xbf16>, vector<16x8xbf16>, vector<8x8xf32> -> vector<8x8xf32>
    %59 = arith.addf %58, %28 : vector<8x8xf32>
    %cst_24 = arith.constant dense<0xFF800000> : vector<8xf32>
    %60 = vector.multi_reduction <maximumf>, %59, %cst_24 [1] : vector<8x8xf32> to vector<8xf32>
    %61 = vector.shape_cast %60 : vector<8xf32> to vector<8x1xf32>
    %62 = vector.broadcast %61 : vector<8x1xf32> to vector<8x8xf32>
    %63 = arith.subf %59, %62 : vector<8x8xf32>
    %64 = math.exp %63 : vector<8x8xf32>
    %cst_25 = arith.constant dense<0.000000e+00> : vector<8xf32>
    %65 = vector.multi_reduction <add>, %64, %cst_25 [1] : vector<8x8xf32> to vector<8xf32>
    %66 = vector.shape_cast %65 : vector<8xf32> to vector<8x1xf32>
    %67 = tpu.reciprocal %66 {approx = true} : vector<8x1xf32> -> vector<8x1xf32>
    %68 = vector.broadcast %67 : vector<8x1xf32> to vector<8x8xf32>
    %69 = arith.mulf %64, %68 : vector<8x8xf32>
    %70 = arith.truncf %69 : vector<8x8xf32> to vector<8x8xbf16>
    %cst_26 = arith.constant dense<0.000000e+00> : vector<16x8xf32>
    %71 = tpu.matmul %57, %70, %cst_26 {dimension_numbers = #tpu.dot_dimension_numbers<[1], [1], [0], [0], [0, 0, 1, 0], [], []>} : vector<16x8xbf16>, vector<8x8xbf16>, vector<16x8xf32> -> vector<16x8xf32>
    %72 = tpu.concatenate %54, %71 in 0 : vector<16x8xf32>, vector<16x8xf32> -> vector<32x8xf32>
    %73 = arith.truncf %72 : vector<32x8xf32> to vector<32x8xbf16>
    %c0_27 = arith.constant 0 : index
    %c0_28 = arith.constant 0 : index
    %c0_29 = arith.constant 0 : index
    %74 = vector.load %arg7[%c0_27, %c0_28, %c0_29] : memref<2x32x32xbf16, #tpu.memory_space<vmem>>, vector<1x32x32xbf16>
    %75 = vector.shape_cast %74 : vector<1x32x32xbf16> to vector<32x32xbf16>
    %cst_30 = arith.constant dense<0.000000e+00> : vector<8x32xf32>
    %76 = tpu.matmul %73, %75, %cst_30 {dimension_numbers = #tpu.dot_dimension_numbers<[0], [0], [1], [1], [0, 1, 1, 1], [], []>} : vector<32x8xbf16>, vector<32x32xbf16>, vector<8x32xf32> -> vector<8x32xf32>
    %c0_31 = arith.constant 0 : index
    %c0_32 = arith.constant 0 : index
    %c0_33 = arith.constant 0 : index
    %77 = vector.load %arg8[%c0_31, %c0_32, %c0_33] : memref<2x1x32xf32, #tpu.memory_space<vmem>>, vector<1x1x32xf32>
    %78 = vector.shape_cast %77 : vector<1x1x32xf32> to vector<1x32xf32>
    %79 = vector.broadcast %78 : vector<1x32xf32> to vector<8x32xf32>
    %80 = arith.addf %76, %79 : vector<8x32xf32>
    %81 = arith.addf %24, %80 : vector<8x32xf32>
    %c0_34 = arith.constant 0 : index
    %c0_35 = arith.constant 0 : index
    %c0_36 = arith.constant 0 : index
    %82 = vector.load %arg9[%c0_34, %c0_35, %c0_36] : memref<2x1x32xf32, #tpu.memory_space<vmem>>, vector<1x1x32xf32>
    %83 = vector.shape_cast %82 : vector<1x1x32xf32> to vector<1x32xf32>
    %c0_37 = arith.constant 0 : index
    %c0_38 = arith.constant 0 : index
    %c0_39 = arith.constant 0 : index
    %84 = vector.load %arg10[%c0_37, %c0_38, %c0_39] : memref<2x1x32xf32, #tpu.memory_space<vmem>>, vector<1x1x32xf32>
    %85 = vector.shape_cast %84 : vector<1x1x32xf32> to vector<1x32xf32>
    %cst_40 = arith.constant dense<0.000000e+00> : vector<8xf32>
    %86 = vector.multi_reduction <add>, %81, %cst_40 [1] : vector<8x32xf32> to vector<8xf32>
    %87 = vector.shape_cast %86 : vector<8xf32> to vector<8x1xf32>
    %cst_41 = arith.constant 3.200000e+01 : f32
    %88 = vector.broadcast %cst_41 : f32 to vector<8x1xf32>
    %89 = arith.divf %87, %88 : vector<8x1xf32>
    %90 = vector.broadcast %89 : vector<8x1xf32> to vector<8x32xf32>
    %91 = arith.subf %81, %90 : vector<8x32xf32>
    %92 = arith.mulf %91, %91 : vector<8x32xf32>
    %cst_42 = arith.constant dense<0.000000e+00> : vector<8xf32>
    %93 = vector.multi_reduction <add>, %92, %cst_42 [1] : vector<8x32xf32> to vector<8xf32>
    %94 = vector.shape_cast %93 : vector<8xf32> to vector<8x1xf32>
    %cst_43 = arith.constant 3.200000e+01 : f32
    %95 = vector.broadcast %cst_43 : f32 to vector<8x1xf32>
    %96 = arith.divf %94, %95 : vector<8x1xf32>
    %97 = vector.broadcast %89 : vector<8x1xf32> to vector<8x32xf32>
    %98 = arith.subf %81, %97 : vector<8x32xf32>
    %cst_44 = arith.constant 9.99999996E-13 : f32
    %99 = vector.broadcast %cst_44 : f32 to vector<8x1xf32>
    %100 = arith.addf %96, %99 : vector<8x1xf32>
    %101 = math.rsqrt %100 : vector<8x1xf32>
    %102 = vector.broadcast %101 : vector<8x1xf32> to vector<8x32xf32>
    %103 = arith.mulf %98, %102 : vector<8x32xf32>
    %104 = vector.broadcast %83 : vector<1x32xf32> to vector<8x32xf32>
    %105 = arith.mulf %103, %104 : vector<8x32xf32>
    %106 = vector.broadcast %85 : vector<1x32xf32> to vector<8x32xf32>
    %107 = arith.addf %105, %106 : vector<8x32xf32>
    %108 = arith.truncf %107 : vector<8x32xf32> to vector<8x32xbf16>
    %c0_45 = arith.constant 0 : index
    %c0_46 = arith.constant 0 : index
    %c0_47 = arith.constant 0 : index
    %109 = vector.load %arg11[%c0_45, %c0_46, %c0_47] : memref<2x32x64xbf16, #tpu.memory_space<vmem>>, vector<1x32x64xbf16>
    %110 = vector.shape_cast %109 : vector<1x32x64xbf16> to vector<32x64xbf16>
    %cst_48 = arith.constant dense<0.000000e+00> : vector<8x64xf32>
    %111 = tpu.matmul %108, %110, %cst_48 {dimension_numbers = #tpu.dot_dimension_numbers<[1], [0], [0], [1], [0, 0, 1, 1], [], []>} : vector<8x32xbf16>, vector<32x64xbf16>, vector<8x64xf32> -> vector<8x64xf32>
    %c0_49 = arith.constant 0 : index
    %c0_50 = arith.constant 0 : index
    %c0_51 = arith.constant 0 : index
    %112 = vector.load %arg12[%c0_49, %c0_50, %c0_51] : memref<2x1x64xf32, #tpu.memory_space<vmem>>, vector<1x1x64xf32>
    %113 = vector.shape_cast %112 : vector<1x1x64xf32> to vector<1x64xf32>
    %114 = vector.broadcast %113 : vector<1x64xf32> to vector<8x64xf32>
    %115 = arith.addf %111, %114 : vector<8x64xf32>
    %116 = arith.mulf %115, %115 : vector<8x64xf32>
    %117 = arith.mulf %115, %116 : vector<8x64xf32>
    %cst_52 = arith.constant 4.471500e-02 : f32
    %118 = vector.broadcast %cst_52 : f32 to vector<8x64xf32>
    %119 = arith.mulf %118, %117 : vector<8x64xf32>
    %120 = arith.addf %115, %119 : vector<8x64xf32>
    %cst_53 = arith.constant 0.797884583 : f32
    %121 = vector.broadcast %cst_53 : f32 to vector<8x64xf32>
    %122 = arith.mulf %121, %120 : vector<8x64xf32>
    %123 = math.tanh %122 : vector<8x64xf32>
    %cst_54 = arith.constant 1.000000e+00 : f32
    %124 = vector.broadcast %cst_54 : f32 to vector<8x64xf32>
    %125 = arith.addf %124, %123 : vector<8x64xf32>
    %cst_55 = arith.constant 5.000000e-01 : f32
    %126 = vector.broadcast %cst_55 : f32 to vector<8x64xf32>
    %127 = arith.mulf %126, %125 : vector<8x64xf32>
    %128 = arith.mulf %115, %127 : vector<8x64xf32>
    %129 = arith.truncf %128 : vector<8x64xf32> to vector<8x64xbf16>
    %c0_56 = arith.constant 0 : index
    %c0_57 = arith.constant 0 : index
    %c0_58 = arith.constant 0 : index
    %130 = vector.load %arg13[%c0_56, %c0_57, %c0_58] : memref<2x64x32xbf16, #tpu.memory_space<vmem>>, vector<1x64x32xbf16>
    %131 = vector.shape_cast %130 : vector<1x64x32xbf16> to vector<64x32xbf16>
    %cst_59 = arith.constant dense<0.000000e+00> : vector<8x32xf32>
    %132 = tpu.matmul %129, %131, %cst_59 {dimension_numbers = #tpu.dot_dimension_numbers<[1], [0], [0], [1], [0, 0, 1, 1], [], []>} : vector<8x64xbf16>, vector<64x32xbf16>, vector<8x32xf32> -> vector<8x32xf32>
    %c0_60 = arith.constant 0 : index
    %c0_61 = arith.constant 0 : index
    %c0_62 = arith.constant 0 : index
    %133 = vector.load %arg14[%c0_60, %c0_61, %c0_62] : memref<2x1x32xf32, #tpu.memory_space<vmem>>, vector<1x1x32xf32>
    %134 = vector.shape_cast %133 : vector<1x1x32xf32> to vector<1x32xf32>
    %135 = vector.broadcast %134 : vector<1x32xf32> to vector<8x32xf32>
    %136 = arith.addf %132, %135 : vector<8x32xf32>
    %137 = arith.addf %107, %136 : vector<8x32xf32>
    %c0_63 = arith.constant 0 : index
    %c0_64 = arith.constant 0 : index
    %c0_65 = arith.constant 0 : index
    %138 = vector.load %arg15[%c0_63, %c0_64, %c0_65] : memref<2x1x32xf32, #tpu.memory_space<vmem>>, vector<1x1x32xf32>
    %139 = vector.shape_cast %138 : vector<1x1x32xf32> to vector<1x32xf32>
    %c0_66 = arith.constant 0 : index
    %c0_67 = arith.constant 0 : index
    %c0_68 = arith.constant 0 : index
    %140 = vector.load %arg16[%c0_66, %c0_67, %c0_68] : memref<2x1x32xf32, #tpu.memory_space<vmem>>, vector<1x1x32xf32>
    %141 = vector.shape_cast %140 : vector<1x1x32xf32> to vector<1x32xf32>
    %cst_69 = arith.constant dense<0.000000e+00> : vector<8xf32>
    %142 = vector.multi_reduction <add>, %137, %cst_69 [1] : vector<8x32xf32> to vector<8xf32>
    %143 = vector.shape_cast %142 : vector<8xf32> to vector<8x1xf32>
    %cst_70 = arith.constant 3.200000e+01 : f32
    %144 = vector.broadcast %cst_70 : f32 to vector<8x1xf32>
    %145 = arith.divf %143, %144 : vector<8x1xf32>
    %146 = vector.broadcast %145 : vector<8x1xf32> to vector<8x32xf32>
    %147 = arith.subf %137, %146 : vector<8x32xf32>
    %148 = arith.mulf %147, %147 : vector<8x32xf32>
    %cst_71 = arith.constant dense<0.000000e+00> : vector<8xf32>
    %149 = vector.multi_reduction <add>, %148, %cst_71 [1] : vector<8x32xf32> to vector<8xf32>
    %150 = vector.shape_cast %149 : vector<8xf32> to vector<8x1xf32>
    %cst_72 = arith.constant 3.200000e+01 : f32
    %151 = vector.broadcast %cst_72 : f32 to vector<8x1xf32>
    %152 = arith.divf %150, %151 : vector<8x1xf32>
    %153 = vector.broadcast %145 : vector<8x1xf32> to vector<8x32xf32>
    %154 = arith.subf %137, %153 : vector<8x32xf32>
    %cst_73 = arith.constant 9.99999996E-13 : f32
    %155 = vector.broadcast %cst_73 : f32 to vector<8x1xf32>
    %156 = arith.addf %152, %155 : vector<8x1xf32>
    %157 = math.rsqrt %156 : vector<8x1xf32>
    %158 = vector.broadcast %157 : vector<8x1xf32> to vector<8x32xf32>
    %159 = arith.mulf %154, %158 : vector<8x32xf32>
    %160 = vector.broadcast %139 : vector<1x32xf32> to vector<8x32xf32>
    %161 = arith.mulf %159, %160 : vector<8x32xf32>
    %162 = vector.broadcast %141 : vector<1x32xf32> to vector<8x32xf32>
    %163 = arith.addf %161, %162 : vector<8x32xf32>
    %164 = arith.truncf %163 : vector<8x32xf32> to vector<8x32xbf16>
    %c1 = arith.constant 1 : index
    %c0_74 = arith.constant 0 : index
    %c0_75 = arith.constant 0 : index
    %165 = vector.load %arg5[%c1, %c0_74, %c0_75] : memref<2x96x32xbf16, #tpu.memory_space<vmem>>, vector<1x96x32xbf16>
    %166 = vector.shape_cast %165 : vector<1x96x32xbf16> to vector<96x32xbf16>
    %cst_76 = arith.constant dense<0.000000e+00> : vector<96x8xf32>
    %167 = tpu.matmul %166, %164, %cst_76 {dimension_numbers = #tpu.dot_dimension_numbers<[1], [1], [0], [0], [0, 0, 1, 0], [], []>} : vector<96x32xbf16>, vector<8x32xbf16>, vector<96x8xf32> -> vector<96x8xf32>
    %c1_77 = arith.constant 1 : index
    %c0_78 = arith.constant 0 : index
    %c0_79 = arith.constant 0 : index
    %168 = vector.load %arg6[%c1_77, %c0_78, %c0_79] : memref<2x96x1xf32, #tpu.memory_space<vmem>>, vector<1x96x1xf32>
    %169 = vector.shape_cast %168 : vector<1x96x1xf32> to vector<96x1xf32>
    %170 = vector.broadcast %169 : vector<96x1xf32> to vector<96x8xf32>
    %171 = arith.addf %167, %170 : vector<96x8xf32>
    %172 = arith.truncf %171 : vector<96x8xf32> to vector<96x8xbf16>
    %173 = vector.extract_strided_slice %172 {offsets = [0, 0], sizes = [16, 8], strides = [1, 1]} : vector<96x8xbf16> to vector<16x8xbf16>
    %174 = vector.extract_strided_slice %172 {offsets = [32, 0], sizes = [16, 8], strides = [1, 1]} : vector<96x8xbf16> to vector<16x8xbf16>
    %175 = vector.extract_strided_slice %172 {offsets = [64, 0], sizes = [16, 8], strides = [1, 1]} : vector<96x8xbf16> to vector<16x8xbf16>
    %cst_80 = arith.constant dense<0.000000e+00> : vector<8x8xf32>
    %176 = tpu.matmul %173, %174, %cst_80 {dimension_numbers = #tpu.dot_dimension_numbers<[0], [0], [1], [1], [0, 1, 1, 1], [], []>} : vector<16x8xbf16>, vector<16x8xbf16>, vector<8x8xf32> -> vector<8x8xf32>
    %177 = arith.addf %176, %28 : vector<8x8xf32>
    %cst_81 = arith.constant dense<0xFF800000> : vector<8xf32>
    %178 = vector.multi_reduction <maximumf>, %177, %cst_81 [1] : vector<8x8xf32> to vector<8xf32>
    %179 = vector.shape_cast %178 : vector<8xf32> to vector<8x1xf32>
    %180 = vector.broadcast %179 : vector<8x1xf32> to vector<8x8xf32>
    %181 = arith.subf %177, %180 : vector<8x8xf32>
    %182 = math.exp %181 : vector<8x8xf32>
    %cst_82 = arith.constant dense<0.000000e+00> : vector<8xf32>
    %183 = vector.multi_reduction <add>, %182, %cst_82 [1] : vector<8x8xf32> to vector<8xf32>
    %184 = vector.shape_cast %183 : vector<8xf32> to vector<8x1xf32>
    %185 = tpu.reciprocal %184 {approx = true} : vector<8x1xf32> -> vector<8x1xf32>
    %186 = vector.broadcast %185 : vector<8x1xf32> to vector<8x8xf32>
    %187 = arith.mulf %182, %186 : vector<8x8xf32>
    %188 = arith.truncf %187 : vector<8x8xf32> to vector<8x8xbf16>
    %cst_83 = arith.constant dense<0.000000e+00> : vector<16x8xf32>
    %189 = tpu.matmul %175, %188, %cst_83 {dimension_numbers = #tpu.dot_dimension_numbers<[1], [1], [0], [0], [0, 0, 1, 0], [], []>} : vector<16x8xbf16>, vector<8x8xbf16>, vector<16x8xf32> -> vector<16x8xf32>
    %190 = vector.extract_strided_slice %172 {offsets = [16, 0], sizes = [16, 8], strides = [1, 1]} : vector<96x8xbf16> to vector<16x8xbf16>
    %191 = vector.extract_strided_slice %172 {offsets = [48, 0], sizes = [16, 8], strides = [1, 1]} : vector<96x8xbf16> to vector<16x8xbf16>
    %192 = vector.extract_strided_slice %172 {offsets = [80, 0], sizes = [16, 8], strides = [1, 1]} : vector<96x8xbf16> to vector<16x8xbf16>
    %cst_84 = arith.constant dense<0.000000e+00> : vector<8x8xf32>
    %193 = tpu.matmul %190, %191, %cst_84 {dimension_numbers = #tpu.dot_dimension_numbers<[0], [0], [1], [1], [0, 1, 1, 1], [], []>} : vector<16x8xbf16>, vector<16x8xbf16>, vector<8x8xf32> -> vector<8x8xf32>
    %194 = arith.addf %193, %28 : vector<8x8xf32>
    %cst_85 = arith.constant dense<0xFF800000> : vector<8xf32>
    %195 = vector.multi_reduction <maximumf>, %194, %cst_85 [1] : vector<8x8xf32> to vector<8xf32>
    %196 = vector.shape_cast %195 : vector<8xf32> to vector<8x1xf32>
    %197 = vector.broadcast %196 : vector<8x1xf32> to vector<8x8xf32>
    %198 = arith.subf %194, %197 : vector<8x8xf32>
    %199 = math.exp %198 : vector<8x8xf32>
    %cst_86 = arith.constant dense<0.000000e+00> : vector<8xf32>
    %200 = vector.multi_reduction <add>, %199, %cst_86 [1] : vector<8x8xf32> to vector<8xf32>
    %201 = vector.shape_cast %200 : vector<8xf32> to vector<8x1xf32>
    %202 = tpu.reciprocal %201 {approx = true} : vector<8x1xf32> -> vector<8x1xf32>
    %203 = vector.broadcast %202 : vector<8x1xf32> to vector<8x8xf32>
    %204 = arith.mulf %199, %203 : vector<8x8xf32>
    %205 = arith.truncf %204 : vector<8x8xf32> to vector<8x8xbf16>
    %cst_87 = arith.constant dense<0.000000e+00> : vector<16x8xf32>
    %206 = tpu.matmul %192, %205, %cst_87 {dimension_numbers = #tpu.dot_dimension_numbers<[1], [1], [0], [0], [0, 0, 1, 0], [], []>} : vector<16x8xbf16>, vector<8x8xbf16>, vector<16x8xf32> -> vector<16x8xf32>
    %207 = tpu.concatenate %189, %206 in 0 : vector<16x8xf32>, vector<16x8xf32> -> vector<32x8xf32>
    %208 = arith.truncf %207 : vector<32x8xf32> to vector<32x8xbf16>
    %c1_88 = arith.constant 1 : index
    %c0_89 = arith.constant 0 : index
    %c0_90 = arith.constant 0 : index
    %209 = vector.load %arg7[%c1_88, %c0_89, %c0_90] : memref<2x32x32xbf16, #tpu.memory_space<vmem>>, vector<1x32x32xbf16>
    %210 = vector.shape_cast %209 : vector<1x32x32xbf16> to vector<32x32xbf16>
    %cst_91 = arith.constant dense<0.000000e+00> : vector<8x32xf32>
    %211 = tpu.matmul %208, %210, %cst_91 {dimension_numbers = #tpu.dot_dimension_numbers<[0], [0], [1], [1], [0, 1, 1, 1], [], []>} : vector<32x8xbf16>, vector<32x32xbf16>, vector<8x32xf32> -> vector<8x32xf32>
    %c1_92 = arith.constant 1 : index
    %c0_93 = arith.constant 0 : index
    %c0_94 = arith.constant 0 : index
    %212 = vector.load %arg8[%c1_92, %c0_93, %c0_94] : memref<2x1x32xf32, #tpu.memory_space<vmem>>, vector<1x1x32xf32>
    %213 = vector.shape_cast %212 : vector<1x1x32xf32> to vector<1x32xf32>
    %214 = vector.broadcast %213 : vector<1x32xf32> to vector<8x32xf32>
    %215 = arith.addf %211, %214 : vector<8x32xf32>
    %216 = arith.addf %163, %215 : vector<8x32xf32>
    %c1_95 = arith.constant 1 : index
    %c0_96 = arith.constant 0 : index
    %c0_97 = arith.constant 0 : index
    %217 = vector.load %arg9[%c1_95, %c0_96, %c0_97] : memref<2x1x32xf32, #tpu.memory_space<vmem>>, vector<1x1x32xf32>
    %218 = vector.shape_cast %217 : vector<1x1x32xf32> to vector<1x32xf32>
    %c1_98 = arith.constant 1 : index
    %c0_99 = arith.constant 0 : index
    %c0_100 = arith.constant 0 : index
    %219 = vector.load %arg10[%c1_98, %c0_99, %c0_100] : memref<2x1x32xf32, #tpu.memory_space<vmem>>, vector<1x1x32xf32>
    %220 = vector.shape_cast %219 : vector<1x1x32xf32> to vector<1x32xf32>
    %cst_101 = arith.constant dense<0.000000e+00> : vector<8xf32>
    %221 = vector.multi_reduction <add>, %216, %cst_101 [1] : vector<8x32xf32> to vector<8xf32>
    %222 = vector.shape_cast %221 : vector<8xf32> to vector<8x1xf32>
    %cst_102 = arith.constant 3.200000e+01 : f32
    %223 = vector.broadcast %cst_102 : f32 to vector<8x1xf32>
    %224 = arith.divf %222, %223 : vector<8x1xf32>
    %225 = vector.broadcast %224 : vector<8x1xf32> to vector<8x32xf32>
    %226 = arith.subf %216, %225 : vector<8x32xf32>
    %227 = arith.mulf %226, %226 : vector<8x32xf32>
    %cst_103 = arith.constant dense<0.000000e+00> : vector<8xf32>
    %228 = vector.multi_reduction <add>, %227, %cst_103 [1] : vector<8x32xf32> to vector<8xf32>
    %229 = vector.shape_cast %228 : vector<8xf32> to vector<8x1xf32>
    %cst_104 = arith.constant 3.200000e+01 : f32
    %230 = vector.broadcast %cst_104 : f32 to vector<8x1xf32>
    %231 = arith.divf %229, %230 : vector<8x1xf32>
    %232 = vector.broadcast %224 : vector<8x1xf32> to vector<8x32xf32>
    %233 = arith.subf %216, %232 : vector<8x32xf32>
    %cst_105 = arith.constant 9.99999996E-13 : f32
    %234 = vector.broadcast %cst_105 : f32 to vector<8x1xf32>
    %235 = arith.addf %231, %234 : vector<8x1xf32>
    %236 = math.rsqrt %235 : vector<8x1xf32>
    %237 = vector.broadcast %236 : vector<8x1xf32> to vector<8x32xf32>
    %238 = arith.mulf %233, %237 : vector<8x32xf32>
    %239 = vector.broadcast %218 : vector<1x32xf32> to vector<8x32xf32>
    %240 = arith.mulf %238, %239 : vector<8x32xf32>
    %241 = vector.broadcast %220 : vector<1x32xf32> to vector<8x32xf32>
    %242 = arith.addf %240, %241 : vector<8x32xf32>
    %243 = arith.truncf %242 : vector<8x32xf32> to vector<8x32xbf16>
    %c1_106 = arith.constant 1 : index
    %c0_107 = arith.constant 0 : index
    %c0_108 = arith.constant 0 : index
    %244 = vector.load %arg11[%c1_106, %c0_107, %c0_108] : memref<2x32x64xbf16, #tpu.memory_space<vmem>>, vector<1x32x64xbf16>
    %245 = vector.shape_cast %244 : vector<1x32x64xbf16> to vector<32x64xbf16>
    %cst_109 = arith.constant dense<0.000000e+00> : vector<8x64xf32>
    %246 = tpu.matmul %243, %245, %cst_109 {dimension_numbers = #tpu.dot_dimension_numbers<[1], [0], [0], [1], [0, 0, 1, 1], [], []>} : vector<8x32xbf16>, vector<32x64xbf16>, vector<8x64xf32> -> vector<8x64xf32>
    %c1_110 = arith.constant 1 : index
    %c0_111 = arith.constant 0 : index
    %c0_112 = arith.constant 0 : index
    %247 = vector.load %arg12[%c1_110, %c0_111, %c0_112] : memref<2x1x64xf32, #tpu.memory_space<vmem>>, vector<1x1x64xf32>
    %248 = vector.shape_cast %247 : vector<1x1x64xf32> to vector<1x64xf32>
    %249 = vector.broadcast %248 : vector<1x64xf32> to vector<8x64xf32>
    %250 = arith.addf %246, %249 : vector<8x64xf32>
    %251 = arith.mulf %250, %250 : vector<8x64xf32>
    %252 = arith.mulf %250, %251 : vector<8x64xf32>
    %cst_113 = arith.constant 4.471500e-02 : f32
    %253 = vector.broadcast %cst_113 : f32 to vector<8x64xf32>
    %254 = arith.mulf %253, %252 : vector<8x64xf32>
    %255 = arith.addf %250, %254 : vector<8x64xf32>
    %cst_114 = arith.constant 0.797884583 : f32
    %256 = vector.broadcast %cst_114 : f32 to vector<8x64xf32>
    %257 = arith.mulf %256, %255 : vector<8x64xf32>
    %258 = math.tanh %257 : vector<8x64xf32>
    %cst_115 = arith.constant 1.000000e+00 : f32
    %259 = vector.broadcast %cst_115 : f32 to vector<8x64xf32>
    %260 = arith.addf %259, %258 : vector<8x64xf32>
    %cst_116 = arith.constant 5.000000e-01 : f32
    %261 = vector.broadcast %cst_116 : f32 to vector<8x64xf32>
    %262 = arith.mulf %261, %260 : vector<8x64xf32>
    %263 = arith.mulf %250, %262 : vector<8x64xf32>
    %264 = arith.truncf %263 : vector<8x64xf32> to vector<8x64xbf16>
    %c1_117 = arith.constant 1 : index
    %c0_118 = arith.constant 0 : index
    %c0_119 = arith.constant 0 : index
    %265 = vector.load %arg13[%c1_117, %c0_118, %c0_119] : memref<2x64x32xbf16, #tpu.memory_space<vmem>>, vector<1x64x32xbf16>
    %266 = vector.shape_cast %265 : vector<1x64x32xbf16> to vector<64x32xbf16>
    %cst_120 = arith.constant dense<0.000000e+00> : vector<8x32xf32>
    %267 = tpu.matmul %264, %266, %cst_120 {dimension_numbers = #tpu.dot_dimension_numbers<[1], [0], [0], [1], [0, 0, 1, 1], [], []>} : vector<8x64xbf16>, vector<64x32xbf16>, vector<8x32xf32> -> vector<8x32xf32>
    %c1_121 = arith.constant 1 : index
    %c0_122 = arith.constant 0 : index
    %c0_123 = arith.constant 0 : index
    %268 = vector.load %arg14[%c1_121, %c0_122, %c0_123] : memref<2x1x32xf32, #tpu.memory_space<vmem>>, vector<1x1x32xf32>
    %269 = vector.shape_cast %268 : vector<1x1x32xf32> to vector<1x32xf32>
    %270 = vector.broadcast %269 : vector<1x32xf32> to vector<8x32xf32>
    %271 = arith.addf %267, %270 : vector<8x32xf32>
    %272 = arith.addf %242, %271 : vector<8x32xf32>
    %c1_124 = arith.constant 1 : index
    %c0_125 = arith.constant 0 : index
    %c0_126 = arith.constant 0 : index
    %273 = vector.load %arg15[%c1_124, %c0_125, %c0_126] : memref<2x1x32xf32, #tpu.memory_space<vmem>>, vector<1x1x32xf32>
    %274 = vector.shape_cast %273 : vector<1x1x32xf32> to vector<1x32xf32>
    %c1_127 = arith.constant 1 : index
    %c0_128 = arith.constant 0 : index
    %c0_129 = arith.constant 0 : index
    %275 = vector.load %arg16[%c1_127, %c0_128, %c0_129] : memref<2x1x32xf32, #tpu.memory_space<vmem>>, vector<1x1x32xf32>
    %276 = vector.shape_cast %275 : vector<1x1x32xf32> to vector<1x32xf32>
    %cst_130 = arith.constant dense<0.000000e+00> : vector<8xf32>
    %277 = vector.multi_reduction <add>, %272, %cst_130 [1] : vector<8x32xf32> to vector<8xf32>
    %278 = vector.shape_cast %277 : vector<8xf32> to vector<8x1xf32>
    %cst_131 = arith.constant 3.200000e+01 : f32
    %279 = vector.broadcast %cst_131 : f32 to vector<8x1xf32>
    %280 = arith.divf %278, %279 : vector<8x1xf32>
    %281 = vector.broadcast %280 : vector<8x1xf32> to vector<8x32xf32>
    %282 = arith.subf %272, %281 : vector<8x32xf32>
    %283 = arith.mulf %282, %282 : vector<8x32xf32>
    %cst_132 = arith.constant dense<0.000000e+00> : vector<8xf32>
    %284 = vector.multi_reduction <add>, %283, %cst_132 [1] : vector<8x32xf32> to vector<8xf32>
    %285 = vector.shape_cast %284 : vector<8xf32> to vector<8x1xf32>
    %cst_133 = arith.constant 3.200000e+01 : f32
    %286 = vector.broadcast %cst_133 : f32 to vector<8x1xf32>
    %287 = arith.divf %285, %286 : vector<8x1xf32>
    %288 = vector.broadcast %280 : vector<8x1xf32> to vector<8x32xf32>
    %289 = arith.subf %272, %288 : vector<8x32xf32>
    %cst_134 = arith.constant 9.99999996E-13 : f32
    %290 = vector.broadcast %cst_134 : f32 to vector<8x1xf32>
    %291 = arith.addf %287, %290 : vector<8x1xf32>
    %292 = math.rsqrt %291 : vector<8x1xf32>
    %293 = vector.broadcast %292 : vector<8x1xf32> to vector<8x32xf32>
    %294 = arith.mulf %289, %293 : vector<8x32xf32>
    %295 = vector.broadcast %274 : vector<1x32xf32> to vector<8x32xf32>
    %296 = arith.mulf %294, %295 : vector<8x32xf32>
    %297 = vector.broadcast %276 : vector<1x32xf32> to vector<8x32xf32>
    %298 = arith.addf %296, %297 : vector<8x32xf32>
    %299 = arith.truncf %298 : vector<8x32xf32> to vector<8x32xbf16>
    %c0_135 = arith.constant 0 : index
    %c0_136 = arith.constant 0 : index
    %300 = vector.load %arg17[%c0_135, %c0_136] : memref<32x128xbf16, #tpu.memory_space<vmem>>, vector<32x128xbf16>
    %cst_137 = arith.constant dense<0.000000e+00> : vector<8x128xf32>
    %301 = tpu.matmul %299, %300, %cst_137 {dimension_numbers = #tpu.dot_dimension_numbers<[1], [0], [0], [1], [0, 0, 1, 1], [], []>} : vector<8x32xbf16>, vector<32x128xbf16>, vector<8x128xf32> -> vector<8x128xf32>
    %c0_138 = arith.constant 0 : index
    %c0_139 = arith.constant 0 : index
    %302 = vector.load %arg18[%c0_138, %c0_139] : memref<1x128xf32, #tpu.memory_space<vmem>>, vector<1x128xf32>
    %303 = vector.broadcast %302 : vector<1x128xf32> to vector<8x128xf32>
    %304 = arith.addf %301, %303 : vector<8x128xf32>
    %305 = arith.truncf %24 : vector<8x32xf32> to vector<8x32xbf16>
    %c0_140 = arith.constant 0 : index
    %c0_141 = arith.constant 0 : index
    %306 = vector.load %arg19[%c0_140, %c0_141] : memref<32x4xbf16, #tpu.memory_space<vmem>>, vector<32x4xbf16>
    %cst_142 = arith.constant dense<0.000000e+00> : vector<8x4xf32>
    %307 = tpu.matmul %305, %306, %cst_142 {dimension_numbers = #tpu.dot_dimension_numbers<[1], [0], [0], [1], [0, 0, 1, 1], [], []>} : vector<8x32xbf16>, vector<32x4xbf16>, vector<8x4xf32> -> vector<8x4xf32>
    %c0_143 = arith.constant 0 : index
    %c0_144 = arith.constant 0 : index
    %308 = vector.load %arg20[%c0_143, %c0_144] : memref<1x4xf32, #tpu.memory_space<vmem>>, vector<1x4xf32>
    %309 = vector.broadcast %308 : vector<1x4xf32> to vector<8x4xf32>
    %310 = arith.addf %307, %309 : vector<8x4xf32>
    %cst_145 = arith.constant dense<0xFF800000> : vector<8xf32>
    %311 = vector.multi_reduction <maximumf>, %310, %cst_145 [1] : vector<8x4xf32> to vector<8xf32>
    %312 = vector.shape_cast %311 : vector<8xf32> to vector<8x1xf32>
    %313 = vector.broadcast %312 : vector<8x1xf32> to vector<8x4xf32>
    %314 = arith.subf %310, %313 : vector<8x4xf32>
    %315 = math.exp %314 : vector<8x4xf32>
    %cst_146 = arith.constant dense<0.000000e+00> : vector<8xf32>
    %316 = vector.multi_reduction <add>, %315, %cst_146 [1] : vector<8x4xf32> to vector<8xf32>
    %317 = vector.shape_cast %316 : vector<8xf32> to vector<8x1xf32>
    %318 = vector.broadcast %317 : vector<8x1xf32> to vector<8x4xf32>
    %319 = arith.divf %315, %318 : vector<8x4xf32>
    %c0_147 = arith.constant 0 : index
    %c0_148 = arith.constant 0 : index
    %320 = vector.load %arg21[%c0_147, %c0_148] : memref<4x128xf32, #tpu.memory_space<vmem>>, vector<4x128xf32>
    %cst_149 = arith.constant dense<0.000000e+00> : vector<8x128xf32>
    %321 = tpu.matmul %319, %320, %cst_149 {dimension_numbers = #tpu.dot_dimension_numbers<[1], [0], [0], [1], [0, 0, 1, 1], [], []>} : vector<8x4xf32>, vector<4x128xf32>, vector<8x128xf32> -> vector<8x128xf32>
    %322 = arith.addf %304, %321 : vector<8x128xf32>
    %c0_150 = arith.constant 0 : index
    %c0_151 = arith.constant 0 : index
    %323 = vector.load %arg22[%c0_150, %c0_151] : memref<8x128xf32, #tpu.memory_space<vmem>>, vector<8x128xf32>
    tpu.vector_store %arg22[%c0_150, %c0_151], %322 {strides = array<i32>} : memref<8x128xf32, #tpu.memory_space<vmem>>, vector<8x128xf32>,
    return
  }
  func.func @transform_0(%arg0: i32) -> (i32, i32) {
    %c0_i32 = arith.constant 0 : i32
    %c0_i32_0 = arith.constant 0 : i32
    return %arg0, %c0_i32 : i32, i32
  }
  func.func @transform_1(%arg0: i32) -> (i32, i32, i32) {
    %c0_i32 = arith.constant 0 : i32
    %c0_i32_0 = arith.constant 0 : i32
    %c0_i32_1 = arith.constant 0 : i32
    return %arg0, %c0_i32, %c0_i32_0 : i32, i32, i32
  }
  func.func @transform_2(%arg0: i32) -> (i32, i32) {
    %c0_i32 = arith.constant 0 : i32
    %c0_i32_0 = arith.constant 0 : i32
    %c0_i32_1 = arith.constant 0 : i32
    return %c0_i32, %c0_i32_0 : i32, i32
  }
  func.func @transform_3(%arg0: i32) -> (i32, i32) {
    %c0_i32 = arith.constant 0 : i32
    %c0_i32_0 = arith.constant 0 : i32
    %c0_i32_1 = arith.constant 0 : i32
    return %c0_i32, %c0_i32_0 : i32, i32
  }
  func.func @transform_4(%arg0: i32) -> (i32, i32, i32) {
    %c0_i32 = arith.constant 0 : i32
    %c0_i32_0 = arith.constant 0 : i32
    %c0_i32_1 = arith.constant 0 : i32
    %c0_i32_2 = arith.constant 0 : i32
    return %c0_i32, %c0_i32_0, %c0_i32_1 : i32, i32, i32
  }
  func.func @transform_5(%arg0: i32) -> (i32, i32, i32) {
    %c0_i32 = arith.constant 0 : i32
    %c0_i32_0 = arith.constant 0 : i32
    %c0_i32_1 = arith.constant 0 : i32
    %c0_i32_2 = arith.constant 0 : i32
    return %c0_i32, %c0_i32_0, %c0_i32_1 : i32, i32, i32
  }
  func.func @transform_6(%arg0: i32) -> (i32, i32, i32) {
    %c0_i32 = arith.constant 0 : i32
    %c0_i32_0 = arith.constant 0 : i32
    %c0_i32_1 = arith.constant 0 : i32
    %c0_i32_2 = arith.constant 0 : i32
    return %c0_i32, %c0_i32_0, %c0_i32_1 : i32, i32, i32
  }
  func.func @transform_7(%arg0: i32) -> (i32, i32, i32) {
    %c0_i32 = arith.constant 0 : i32
    %c0_i32_0 = arith.constant 0 : i32
    %c0_i32_1 = arith.constant 0 : i32
    %c0_i32_2 = arith.constant 0 : i32
    return %c0_i32, %c0_i32_0, %c0_i32_1 : i32, i32, i32
  }
  func.func @transform_8(%arg0: i32) -> (i32, i32, i32) {
    %c0_i32 = arith.constant 0 : i32
    %c0_i32_0 = arith.constant 0 : i32
    %c0_i32_1 = arith.constant 0 : i32
    %c0_i32_2 = arith.constant 0 : i32
    return %c0_i32, %c0_i32_0, %c0_i32_1 : i32, i32, i32
  }
  func.func @transform_9(%arg0: i32) -> (i32, i32, i32) {
    %c0_i32 = arith.constant 0 : i32
    %c0_i32_0 = arith.constant 0 : i32
    %c0_i32_1 = arith.constant 0 : i32
    %c0_i32_2 = arith.constant 0 : i32
    return %c0_i32, %c0_i32_0, %c0_i32_1 : i32, i32, i32
  }
  func.func @transform_10(%arg0: i32) -> (i32, i32, i32) {
    %c0_i32 = arith.constant 0 : i32
    %c0_i32_0 = arith.constant 0 : i32
    %c0_i32_1 = arith.constant 0 : i32
    %c0_i32_2 = arith.constant 0 : i32
    return %c0_i32, %c0_i32_0, %c0_i32_1 : i32, i32, i32
  }
  func.func @transform_11(%arg0: i32) -> (i32, i32, i32) {
    %c0_i32 = arith.constant 0 : i32
    %c0_i32_0 = arith.constant 0 : i32
    %c0_i32_1 = arith.constant 0 : i32
    %c0_i32_2 = arith.constant 0 : i32
    return %c0_i32, %c0_i32_0, %c0_i32_1 : i32, i32, i32
  }
  func.func @transform_12(%arg0: i32) -> (i32, i32, i32) {
    %c0_i32 = arith.constant 0 : i32
    %c0_i32_0 = arith.constant 0 : i32
    %c0_i32_1 = arith.constant 0 : i32
    %c0_i32_2 = arith.constant 0 : i32
    return %c0_i32, %c0_i32_0, %c0_i32_1 : i32, i32, i32
  }
  func.func @transform_13(%arg0: i32) -> (i32, i32, i32) {
    %c0_i32 = arith.constant 0 : i32
    %c0_i32_0 = arith.constant 0 : i32
    %c0_i32_1 = arith.constant 0 : i32
    %c0_i32_2 = arith.constant 0 : i32
    return %c0_i32, %c0_i32_0, %c0_i32_1 : i32, i32, i32
  }
  func.func @transform_14(%arg0: i32) -> (i32, i32, i32) {
    %c0_i32 = arith.constant 0 : i32
    %c0_i32_0 = arith.constant 0 : i32
    %c0_i32_1 = arith.constant 0 : i32
    %c0_i32_2 = arith.constant 0 : i32
    return %c0_i32, %c0_i32_0, %c0_i32_1 : i32, i32, i32
  }
  func.func @transform_15(%arg0: i32) -> (i32, i32, i32) {
    %c0_i32 = arith.constant 0 : i32
    %c0_i32_0 = arith.constant 0 : i32
    %c0_i32_1 = arith.constant 0 : i32
    %c0_i32_2 = arith.constant 0 : i32
    return %c0_i32, %c0_i32_0, %c0_i32_1 : i32, i32, i32
  }
  func.func @transform_16(%arg0: i32) -> (i32, i32) {
    %c0_i32 = arith.constant 0 : i32
    %c0_i32_0 = arith.constant 0 : i32
    %c0_i32_1 = arith.constant 0 : i32
    return %c0_i32, %c0_i32_0 : i32, i32
  }
  func.func @transform_17(%arg0: i32) -> (i32, i32) {
    %c0_i32 = arith.constant 0 : i32
    %c0_i32_0 = arith.constant 0 : i32
    %c0_i32_1 = arith.constant 0 : i32
    return %c0_i32, %c0_i32_0 : i32, i32
  }
  func.func @transform_18(%arg0: i32) -> (i32, i32) {
    %c0_i32 = arith.constant 0 : i32
    %c0_i32_0 = arith.constant 0 : i32
    %c0_i32_1 = arith.constant 0 : i32
    return %c0_i32, %c0_i32_0 : i32, i32
  }
  func.func @transform_19(%arg0: i32) -> (i32, i32) {
    %c0_i32 = arith.constant 0 : i32
    %c0_i32_0 = arith.constant 0 : i32
    %c0_i32_1 = arith.constant 0 : i32
    return %c0_i32, %c0_i32_0 : i32, i32
  }
  func.func @transform_20(%arg0: i32) -> (i32, i32) {
    %c0_i32 = arith.constant 0 : i32
    %c0_i32_0 = arith.constant 0 : i32
    %c0_i32_1 = arith.constant 0 : i32
    return %c0_i32, %c0_i32_0 : i32, i32
  }
  func.func @transform_21(%arg0: i32) -> (i32, i32) {
    %c0_i32 = arith.constant 0 : i32
    %c0_i32_0 = arith.constant 0 : i32
    return %arg0, %c0_i32 : i32, i32
  }
}

</mosaic_0001>

<llo_original>
// kernel: tpu_custom_call.1
$region0: #{tpu_custom_call.1}
  #allocation0 [shape = 'u32[]', space=smem, size = 0x4, offset = 0x4, fixed_abs, tag = 'smem constant byte address 0x4 - core index']
  #allocation1 [shape = 'u32[144,128]{1,0:T(1,128)}', space=vmem, size = 0x12000, scoped, tag = 'internal scratch']
  %s0 = inlined_call_operand.vmem [shape: f32[16,32], index: 0, kind: input, shape index: {}]
  %s1 = inlined_call_operand.vmem [shape: f32[2,1,8], index: 1, kind: input, shape index: {}]
  %s2 = inlined_call_operand.vmem [shape: f32[1,32], index: 2, kind: input, shape index: {}]
  %s3 = inlined_call_operand.vmem [shape: f32[1,32], index: 3, kind: input, shape index: {}]
  %s4 = inlined_call_operand.vmem [shape: bf16[2,96,32], index: 4, kind: input, shape index: {}]
  %s5 = inlined_call_operand.vmem [shape: f32[2,96,1], index: 5, kind: input, shape index: {}]
  %s6 = inlined_call_operand.vmem [shape: bf16[2,32,32], index: 6, kind: input, shape index: {}]
  %s7 = inlined_call_operand.vmem [shape: f32[2,1,32], index: 7, kind: input, shape index: {}]
  %s8 = inlined_call_operand.vmem [shape: f32[2,1,32], index: 8, kind: input, shape index: {}]
  %s9 = inlined_call_operand.vmem [shape: f32[2,1,32], index: 9, kind: input, shape index: {}]
  %s10 = inlined_call_operand.vmem [shape: bf16[2,32,64], index: 10, kind: input, shape index: {}]
  %s11 = inlined_call_operand.vmem [shape: f32[2,1,64], index: 11, kind: input, shape index: {}]
  %s12 = inlined_call_operand.vmem [shape: bf16[2,64,32], index: 12, kind: input, shape index: {}]
  %s13 = inlined_call_operand.vmem [shape: f32[2,1,32], index: 13, kind: input, shape index: {}]
  %s14 = inlined_call_operand.vmem [shape: f32[2,1,32], index: 14, kind: input, shape index: {}]
  %s15 = inlined_call_operand.vmem [shape: f32[2,1,32], index: 15, kind: input, shape index: {}]
  %s16 = inlined_call_operand.vmem [shape: bf16[32,128], index: 16, kind: input, shape index: {}]
  %s17 = inlined_call_operand.vmem [shape: f32[1,128], index: 17, kind: input, shape index: {}]
  %s18 = inlined_call_operand.vmem [shape: bf16[32,4], index: 18, kind: input, shape index: {}]
  %s19 = inlined_call_operand.vmem [shape: f32[1,4], index: 19, kind: input, shape index: {}]
  %s20 = inlined_call_operand.vmem [shape: f32[4,128], index: 20, kind: input, shape index: {}]
  %s21 = inlined_call_operand.hbm [shape: f32[16,128], index: 21, kind: output, shape index: {}]
  %s22 = sld [smem:[#allocation0]]
  $region117: #{tpu_custom_call.1} parent=0
    _
  %s24 = ssub.s32 1, %s22
  %s25 = scalar_select 0, %s24, %s22
  $region1: #{tpu_custom_call.1} parent=0
    #allocation2 [shape = 'u8[8192]{0}', space=vmem, size = 0x2000, scoped, tag = 'output window, operand 0']
    #allocation3 [shape = 's32[2]{0}', space=sflag, size = 0x8, scoped, tag = 'scoped memory for tpu_custom_call.1']
    %26 = vsyncpa [#allocation3], 0
    %s27 = scalar_lea.sflag [#allocation3], 1
    %28 = vsyncpa %s27, 0
    loop: start=0, step=1, limit=4
    $region2: #{tpu_custom_call.1} parent=1 // loop_pre_header
      _
    $region3: #{tpu_custom_call.1} parent=1 // loop_header
      %s30 = sphi 0, %s34
      %p31 = scmp.ge.s32.totalorder %s30, 4
      %s40 = sphi 0, %s42
      %s43 = sphi 0, %s40
      %s44 = sphi 0, %s43
      %s60 = sphi 0, %s44
      %s66 = sphi 0, %s68
      %s69 = sphi 0, %s66
      %s70 = sphi 0, %s69
      %s86 = sphi 0, %s70
      %s90 = sphi 0, %s90
      %s92 = sphi 0, %s90
      %s93 = sphi 0, %s92
      %s107 = sphi 0, %s93
      %s111 = sphi 0, %s111
      %s113 = sphi 0, %s111
      %s114 = sphi 0, %s113
      %s128 = sphi 0, %s114
      %s132 = sphi 0, %s132
      %s134 = sphi 0, %s132
      %s135 = sphi 0, %s134
      %s149 = sphi 0, %s135
      %s153 = sphi 0, %s153
      %s155 = sphi 0, %s153
      %s156 = sphi 0, %s155
      %s170 = sphi 0, %s156
      %s174 = sphi 0, %s174
      %s176 = sphi 0, %s174
      %s177 = sphi 0, %s176
      %s191 = sphi 0, %s177
      %s195 = sphi 0, %s195
      %s197 = sphi 0, %s195
      %s198 = sphi 0, %s197
      %s212 = sphi 0, %s198
      %s216 = sphi 0, %s216
      %s218 = sphi 0, %s216
      %s219 = sphi 0, %s218
      %s233 = sphi 0, %s219
      %s237 = sphi 0, %s237
      %s239 = sphi 0, %s237
      %s240 = sphi 0, %s239
      %s254 = sphi 0, %s240
      %s258 = sphi 0, %s258
      %s260 = sphi 0, %s258
      %s261 = sphi 0, %s260
      %s275 = sphi 0, %s261
      %s279 = sphi 0, %s279
      %s281 = sphi 0, %s279
      %s282 = sphi 0, %s281
      %s296 = sphi 0, %s282
      %s300 = sphi 0, %s300
      %s302 = sphi 0, %s300
      %s303 = sphi 0, %s302
      %s317 = sphi 0, %s303
      %s321 = sphi 0, %s321
      %s323 = sphi 0, %s321
      %s324 = sphi 0, %s323
      %s338 = sphi 0, %s324
      %s342 = sphi 0, %s342
      %s344 = sphi 0, %s342
      %s345 = sphi 0, %s344
      %s359 = sphi 0, %s345
      %s363 = sphi 0, %s363
      %s365 = sphi 0, %s363
      %s366 = sphi 0, %s365
      %s380 = sphi 0, %s366
      %s384 = sphi 0, %s384
      %s386 = sphi 0, %s384
      %s387 = sphi 0, %s386
      %s401 = sphi 0, %s387
      %s405 = sphi 0, %s405
      %s407 = sphi 0, %s405
      %s408 = sphi 0, %s407
      %s422 = sphi 0, %s408
      %s426 = sphi 0, %s426
      %s428 = sphi 0, %s426
      %s429 = sphi 0, %s428
      %s443 = sphi 0, %s429
      %s447 = sphi 0, %s447
      %s449 = sphi 0, %s447
      %s450 = sphi 0, %s449
      %s464 = sphi 0, %s450
      %s468 = sphi 0, %s468
      %s470 = sphi 0, %s468
      %s471 = sphi 0, %s470
      %s485 = sphi 0, %s471
      %s491 = sphi 0, %s493
      %s494 = sphi 0, %s491
      %s495 = sphi 0, %s494
      %s511 = sphi 0, %s495
    $region4: #{tpu_custom_call.1} parent=1 // loop_header_branch
      %33 = sbr.rel (%p31) target = $region8
    $region5: #{tpu_custom_call.1} parent=1 // loop_body
      %s35 = ssub.s32 %s30, 1
      %s36 = ssub.s32 %s30, 2
      %s37 = sadd.s32 %s30, 1
      %s38 = ssub.s32 %s30, %s37
      %p39 = scmp.eq.s32.totalorder %s38, 0
      %s41 = sadd.s32 %s40, 1
      %s42 = scalar_select %p39, %s40, %s41
      %p45 = pneg %p39
      %p46 = scmp.eq.s32.totalorder %s30, 1
      %p47 = por %p45, %p46
      %p48 = scmp.ne.s32.totalorder %s40, %s43
      %p49 = scmp.eq.s32.totalorder %s30, 0
      %p50 = por %p48, %p49
      %p51 = scmp.ne.s32.totalorder %s40, %s43
      %p52 = scmp.eq.s32.totalorder %s35, 1
      %p53 = por %p51, %p52
      %p54 = scmp.ne.s32.totalorder %s43, %s44
      %p55 = scmp.eq.s32.totalorder %s35, 0
      %p56 = por %p54, %p55
      %p57 = scmp.ne.s32.totalorder %s43, %s44
      %p58 = scmp.eq.s32.totalorder %s36, 1
      %p59 = por %p57, %p58
      %p61 = scmp.ne.s32.totalorder %s44, %s60
      %p62 = scmp.eq.s32.totalorder %s36, 0
      %p63 = por %p61, %p62
      %s64 = ssub.s32 %s30, %s37
      %p65 = scmp.eq.s32.totalorder %s64, 0
      %s67 = sadd.s32 %s66, 1
      %s68 = scalar_select %p65, %s66, %s67
      %p71 = pneg %p65
      %p72 = scmp.eq.s32.totalorder %s30, 1
      %p73 = por %p71, %p72
      %p74 = scmp.ne.s32.totalorder %s66, %s69
      %p75 = scmp.eq.s32.totalorder %s30, 0
      %p76 = por %p74, %p75
      %p77 = scmp.ne.s32.totalorder %s66, %s69
      %p78 = scmp.eq.s32.totalorder %s35, 1
      %p79 = por %p77, %p78
      %p80 = scmp.ne.s32.totalorder %s69, %s70
      %p81 = scmp.eq.s32.totalorder %s35, 0
      %p82 = por %p80, %p81
      %p83 = scmp.ne.s32.totalorder %s69, %s70
      %p84 = scmp.eq.s32.totalorder %s36, 1
      %p85 = por %p83, %p84
      %p87 = scmp.ne.s32.totalorder %s70, %s86
      %p88 = scmp.eq.s32.totalorder %s36, 0
      %p89 = por %p87, %p88
      %s91 = sadd.s32 %s90, 1
      %p94 = scmp.eq.s32.totalorder %s30, 1
      %p95 = scmp.ne.s32.totalorder %s90, %s92
      %p96 = scmp.eq.s32.totalorder %s30, 0
      %p97 = por %p95, %p96
      %p98 = scmp.ne.s32.totalorder %s90, %s92
      %p99 = scmp.eq.s32.totalorder %s35, 1
      %p100 = por %p98, %p99
      %p101 = scmp.ne.s32.totalorder %s92, %s93
      %p102 = scmp.eq.s32.totalorder %s35, 0
      %p103 = por %p101, %p102
      %p104 = scmp.ne.s32.totalorder %s92, %s93
      %p105 = scmp.eq.s32.totalorder %s36, 1
      %p106 = por %p104, %p105
      %p108 = scmp.ne.s32.totalorder %s93, %s107
      %p109 = scmp.eq.s32.totalorder %s36, 0
      %p110 = por %p108, %p109
      %s112 = sadd.s32 %s111, 1
      %p115 = scmp.eq.s32.totalorder %s30, 1
      %p116 = scmp.ne.s32.totalorder %s111, %s113
      %p117 = scmp.eq.s32.totalorder %s30, 0
      %p118 = por %p116, %p117
      %p119 = scmp.ne.s32.totalorder %s111, %s113
      %p120 = scmp.eq.s32.totalorder %s35, 1
      %p121 = por %p119, %p120
      %p122 = scmp.ne.s32.totalorder %s113, %s114
      %p123 = scmp.eq.s32.totalorder %s35, 0
      %p124 = por %p122, %p123
      %p125 = scmp.ne.s32.totalorder %s113, %s114
      %p126 = scmp.eq.s32.totalorder %s36, 1
      %p127 = por %p125, %p126
      %p129 = scmp.ne.s32.totalorder %s114, %s128
      %p130 = scmp.eq.s32.totalorder %s36, 0
      %p131 = por %p129, %p130
      %s133 = sadd.s32 %s132, 1
      %p136 = scmp.eq.s32.totalorder %s30, 1
      %p137 = scmp.ne.s32.totalorder %s132, %s134
      %p138 = scmp.eq.s32.totalorder %s30, 0
      %p139 = por %p137, %p138
      %p140 = scmp.ne.s32.totalorder %s132, %s134
      %p141 = scmp.eq.s32.totalorder %s35, 1
      %p142 = por %p140, %p141
      %p143 = scmp.ne.s32.totalorder %s134, %s135
      %p144 = scmp.eq.s32.totalorder %s35, 0
      %p145 = por %p143, %p144
      %p146 = scmp.ne.s32.totalorder %s134, %s135
      %p147 = scmp.eq.s32.totalorder %s36, 1
      %p148 = por %p146, %p147
      %p150 = scmp.ne.s32.totalorder %s135, %s149
      %p151 = scmp.eq.s32.totalorder %s36, 0
      %p152 = por %p150, %p151
      %s154 = sadd.s32 %s153, 1
      %p157 = scmp.eq.s32.totalorder %s30, 1
      %p158 = scmp.ne.s32.totalorder %s153, %s155
      %p159 = scmp.eq.s32.totalorder %s30, 0
      %p160 = por %p158, %p159
      %p161 = scmp.ne.s32.totalorder %s153, %s155
      %p162 = scmp.eq.s32.totalorder %s35, 1
      %p163 = por %p161, %p162
      %p164 = scmp.ne.s32.totalorder %s155, %s156
      %p165 = scmp.eq.s32.totalorder %s35, 0
      %p166 = por %p164, %p165
      %p167 = scmp.ne.s32.totalorder %s155, %s156
      %p168 = scmp.eq.s32.totalorder %s36, 1
      %p169 = por %p167, %p168
      %p171 = scmp.ne.s32.totalorder %s156, %s170
      %p172 = scmp.eq.s32.totalorder %s36, 0
      %p173 = por %p171, %p172
      %s175 = sadd.s32 %s174, 1
      %p178 = scmp.eq.s32.totalorder %s30, 1
      %p179 = scmp.ne.s32.totalorder %s174, %s176
      %p180 = scmp.eq.s32.totalorder %s30, 0
      %p181 = por %p179, %p180
      %p182 = scmp.ne.s32.totalorder %s174, %s176
      %p183 = scmp.eq.s32.totalorder %s35, 1
      %p184 = por %p182, %p183
      %p185 = scmp.ne.s32.totalorder %s176, %s177
      %p186 = scmp.eq.s32.totalorder %s35, 0
      %p187 = por %p185, %p186
      %p188 = scmp.ne.s32.totalorder %s176, %s177
      %p189 = scmp.eq.s32.totalorder %s36, 1
      %p190 = por %p188, %p189
      %p192 = scmp.ne.s32.totalorder %s177, %s191
      %p193 = scmp.eq.s32.totalorder %s36, 0
      %p194 = por %p192, %p193
      %s196 = sadd.s32 %s195, 1
      %p199 = scmp.eq.s32.totalorder %s30, 1
      %p200 = scmp.ne.s32.totalorder %s195, %s197
      %p201 = scmp.eq.s32.totalorder %s30, 0
      %p202 = por %p200, %p201
      %p203 = scmp.ne.s32.totalorder %s195, %s197
      %p204 = scmp.eq.s32.totalorder %s35, 1
      %p205 = por %p203, %p204
      %p206 = scmp.ne.s32.totalorder %s197, %s198
      %p207 = scmp.eq.s32.totalorder %s35, 0
      %p208 = por %p206, %p207
      %p209 = scmp.ne.s32.totalorder %s197, %s198
      %p210 = scmp.eq.s32.totalorder %s36, 1
      %p211 = por %p209, %p210
      %p213 = scmp.ne.s32.totalorder %s198, %s212
      %p214 = scmp.eq.s32.totalorder %s36, 0
      %p215 = por %p213, %p214
      %s217 = sadd.s32 %s216, 1
      %p220 = scmp.eq.s32.totalorder %s30, 1
      %p221 = scmp.ne.s32.totalorder %s216, %s218
      %p222 = scmp.eq.s32.totalorder %s30, 0
      %p223 = por %p221, %p222
      %p224 = scmp.ne.s32.totalorder %s216, %s218
      %p225 = scmp.eq.s32.totalorder %s35, 1
      %p226 = por %p224, %p225
      %p227 = scmp.ne.s32.totalorder %s218, %s219
      %p228 = scmp.eq.s32.totalorder %s35, 0
      %p229 = por %p227, %p228
      %p230 = scmp.ne.s32.totalorder %s218, %s219
      %p231 = scmp.eq.s32.totalorder %s36, 1
      %p232 = por %p230, %p231
      %p234 = scmp.ne.s32.totalorder %s219, %s233
      %p235 = scmp.eq.s32.totalorder %s36, 0
      %p236 = por %p234, %p235
      %s238 = sadd.s32 %s237, 1
      %p241 = scmp.eq.s32.totalorder %s30, 1
      %p242 = scmp.ne.s32.totalorder %s237, %s239
      %p243 = scmp.eq.s32.totalorder %s30, 0
      %p244 = por %p242, %p243
      %p245 = scmp.ne.s32.totalorder %s237, %s239
      %p246 = scmp.eq.s32.totalorder %s35, 1
      %p247 = por %p245, %p246
      %p248 = scmp.ne.s32.totalorder %s239, %s240
      %p249 = scmp.eq.s32.totalorder %s35, 0
      %p250 = por %p248, %p249
      %p251 = scmp.ne.s32.totalorder %s239, %s240
      %p252 = scmp.eq.s32.totalorder %s36, 1
      %p253 = por %p251, %p252
      %p255 = scmp.ne.s32.totalorder %s240, %s254
      %p256 = scmp.eq.s32.totalorder %s36, 0
      %p257 = por %p255, %p256
      %s259 = sadd.s32 %s258, 1
      %p262 = scmp.eq.s32.totalorder %s30, 1
      %p263 = scmp.ne.s32.totalorder %s258, %s260
      %p264 = scmp.eq.s32.totalorder %s30, 0
      %p265 = por %p263, %p264
      %p266 = scmp.ne.s32.totalorder %s258, %s260
      %p267 = scmp.eq.s32.totalorder %s35, 1
      %p268 = por %p266, %p267
      %p269 = scmp.ne.s32.totalorder %s260, %s261
      %p270 = scmp.eq.s32.totalorder %s35, 0
      %p271 = por %p269, %p270
      %p272 = scmp.ne.s32.totalorder %s260, %s261
      %p273 = scmp.eq.s32.totalorder %s36, 1
      %p274 = por %p272, %p273
      %p276 = scmp.ne.s32.totalorder %s261, %s275
      %p277 = scmp.eq.s32.totalorder %s36, 0
      %p278 = por %p276, %p277
      %s280 = sadd.s32 %s279, 1
      %p283 = scmp.eq.s32.totalorder %s30, 1
      %p284 = scmp.ne.s32.totalorder %s279, %s281
      %p285 = scmp.eq.s32.totalorder %s30, 0
      %p286 = por %p284, %p285
      %p287 = scmp.ne.s32.totalorder %s279, %s281
      %p288 = scmp.eq.s32.totalorder %s35, 1
      %p289 = por %p287, %p288
      %p290 = scmp.ne.s32.totalorder %s281, %s282
      %p291 = scmp.eq.s32.totalorder %s35, 0
      %p292 = por %p290, %p291
      %p293 = scmp.ne.s32.totalorder %s281, %s282
      %p294 = scmp.eq.s32.totalorder %s36, 1
      %p295 = por %p293, %p294
      %p297 = scmp.ne.s32.totalorder %s282, %s296
      %p298 = scmp.eq.s32.totalorder %s36, 0
      %p299 = por %p297, %p298
      %s301 = sadd.s32 %s300, 1
      %p304 = scmp.eq.s32.totalorder %s30, 1
      %p305 = scmp.ne.s32.totalorder %s300, %s302
      %p306 = scmp.eq.s32.totalorder %s30, 0
      %p307 = por %p305, %p306
      %p308 = scmp.ne.s32.totalorder %s300, %s302
      %p309 = scmp.eq.s32.totalorder %s35, 1
      %p310 = por %p308, %p309
      %p311 = scmp.ne.s32.totalorder %s302, %s303
      %p312 = scmp.eq.s32.totalorder %s35, 0
      %p313 = por %p311, %p312
      %p314 = scmp.ne.s32.totalorder %s302, %s303
      %p315 = scmp.eq.s32.totalorder %s36, 1
      %p316 = por %p314, %p315
      %p318 = scmp.ne.s32.totalorder %s303, %s317
      %p319 = scmp.eq.s32.totalorder %s36, 0
      %p320 = por %p318, %p319
      %s322 = sadd.s32 %s321, 1
      %p325 = scmp.eq.s32.totalorder %s30, 1
      %p326 = scmp.ne.s32.totalorder %s321, %s323
      %p327 = scmp.eq.s32.totalorder %s30, 0
      %p328 = por %p326, %p327
      %p329 = scmp.ne.s32.totalorder %s321, %s323
      %p330 = scmp.eq.s32.totalorder %s35, 1
      %p331 = por %p329, %p330
      %p332 = scmp.ne.s32.totalorder %s323, %s324
      %p333 = scmp.eq.s32.totalorder %s35, 0
      %p334 = por %p332, %p333
      %p335 = scmp.ne.s32.totalorder %s323, %s324
      %p336 = scmp.eq.s32.totalorder %s36, 1
      %p337 = por %p335, %p336
      %p339 = scmp.ne.s32.totalorder %s324, %s338
      %p340 = scmp.eq.s32.totalorder %s36, 0
      %p341 = por %p339, %p340
      %s343 = sadd.s32 %s342, 1
      %p346 = scmp.eq.s32.totalorder %s30, 1
      %p347 = scmp.ne.s32.totalorder %s342, %s344
      %p348 = scmp.eq.s32.totalorder %s30, 0
      %p349 = por %p347, %p348
      %p350 = scmp.ne.s32.totalorder %s342, %s344
      %p351 = scmp.eq.s32.totalorder %s35, 1
      %p352 = por %p350, %p351
      %p353 = scmp.ne.s32.totalorder %s344, %s345
      %p354 = scmp.eq.s32.totalorder %s35, 0
      %p355 = por %p353, %p354
      %p356 = scmp.ne.s32.totalorder %s344, %s345
      %p357 = scmp.eq.s32.totalorder %s36, 1
      %p358 = por %p356, %p357
      %p360 = scmp.ne.s32.totalorder %s345, %s359
      %p361 = scmp.eq.s32.totalorder %s36, 0
      %p362 = por %p360, %p361
      %s364 = sadd.s32 %s363, 1
      %p367 = scmp.eq.s32.totalorder %s30, 1
      %p368 = scmp.ne.s32.totalorder %s363, %s365
      %p369 = scmp.eq.s32.totalorder %s30, 0
      %p370 = por %p368, %p369
      %p371 = scmp.ne.s32.totalorder %s363, %s365
      %p372 = scmp.eq.s32.totalorder %s35, 1
      %p373 = por %p371, %p372
      %p374 = scmp.ne.s32.totalorder %s365, %s366
      %p375 = scmp.eq.s32.totalorder %s35, 0
      %p376 = por %p374, %p375
      %p377 = scmp.ne.s32.totalorder %s365, %s366
      %p378 = scmp.eq.s32.totalorder %s36, 1
      %p379 = por %p377, %p378
      %p381 = scmp.ne.s32.totalorder %s366, %s380
      %p382 = scmp.eq.s32.totalorder %s36, 0
      %p383 = por %p381, %p382
      %s385 = sadd.s32 %s384, 1
      %p388 = scmp.eq.s32.totalorder %s30, 1
      %p389 = scmp.ne.s32.totalorder %s384, %s386
      %p390 = scmp.eq.s32.totalorder %s30, 0
      %p391 = por %p389, %p390
      %p392 = scmp.ne.s32.totalorder %s384, %s386
      %p393 = scmp.eq.s32.totalorder %s35, 1
      %p394 = por %p392, %p393
      %p395 = scmp.ne.s32.totalorder %s386, %s387
      %p396 = scmp.eq.s32.totalorder %s35, 0
      %p397 = por %p395, %p396
      %p398 = scmp.ne.s32.totalorder %s386, %s387
      %p399 = scmp.eq.s32.totalorder %s36, 1
      %p400 = por %p398, %p399
      %p402 = scmp.ne.s32.totalorder %s387, %s401
      %p403 = scmp.eq.s32.totalorder %s36, 0
      %p404 = por %p402, %p403
      %s406 = sadd.s32 %s405, 1
      %p409 = scmp.eq.s32.totalorder %s30, 1
      %p410 = scmp.ne.s32.totalorder %s405, %s407
      %p411 = scmp.eq.s32.totalorder %s30, 0
      %p412 = por %p410, %p411
      %p413 = scmp.ne.s32.totalorder %s405, %s407
      %p414 = scmp.eq.s32.totalorder %s35, 1
      %p415 = por %p413, %p414
      %p416 = scmp.ne.s32.totalorder %s407, %s408
      %p417 = scmp.eq.s32.totalorder %s35, 0
      %p418 = por %p416, %p417
      %p419 = scmp.ne.s32.totalorder %s407, %s408
      %p420 = scmp.eq.s32.totalorder %s36, 1
      %p421 = por %p419, %p420
      %p423 = scmp.ne.s32.totalorder %s408, %s422
      %p424 = scmp.eq.s32.totalorder %s36, 0
      %p425 = por %p423, %p424
      %s427 = sadd.s32 %s426, 1
      %p430 = scmp.eq.s32.totalorder %s30, 1
      %p431 = scmp.ne.s32.totalorder %s426, %s428
      %p432 = scmp.eq.s32.totalorder %s30, 0
      %p433 = por %p431, %p432
      %p434 = scmp.ne.s32.totalorder %s426, %s428
      %p435 = scmp.eq.s32.totalorder %s35, 1
      %p436 = por %p434, %p435
      %p437 = scmp.ne.s32.totalorder %s428, %s429
      %p438 = scmp.eq.s32.totalorder %s35, 0
      %p439 = por %p437, %p438
      %p440 = scmp.ne.s32.totalorder %s428, %s429
      %p441 = scmp.eq.s32.totalorder %s36, 1
      %p442 = por %p440, %p441
      %p444 = scmp.ne.s32.totalorder %s429, %s443
      %p445 = scmp.eq.s32.totalorder %s36, 0
      %p446 = por %p444, %p445
      %s448 = sadd.s32 %s447, 1
      %p451 = scmp.eq.s32.totalorder %s30, 1
      %p452 = scmp.ne.s32.totalorder %s447, %s449
      %p453 = scmp.eq.s32.totalorder %s30, 0
      %p454 = por %p452, %p453
      %p455 = scmp.ne.s32.totalorder %s447, %s449
      %p456 = scmp.eq.s32.totalorder %s35, 1
      %p457 = por %p455, %p456
      %p458 = scmp.ne.s32.totalorder %s449, %s450
      %p459 = scmp.eq.s32.totalorder %s35, 0
      %p460 = por %p458, %p459
      %p461 = scmp.ne.s32.totalorder %s449, %s450
      %p462 = scmp.eq.s32.totalorder %s36, 1
      %p463 = por %p461, %p462
      %p465 = scmp.ne.s32.totalorder %s450, %s464
      %p466 = scmp.eq.s32.totalorder %s36, 0
      %p467 = por %p465, %p466
      %s469 = sadd.s32 %s468, 1
      %p472 = scmp.eq.s32.totalorder %s30, 1
      %p473 = scmp.ne.s32.totalorder %s468, %s470
      %p474 = scmp.eq.s32.totalorder %s30, 0
      %p475 = por %p473, %p474
      %p476 = scmp.ne.s32.totalorder %s468, %s470
      %p477 = scmp.eq.s32.totalorder %s35, 1
      %p478 = por %p476, %p477
      %p479 = scmp.ne.s32.totalorder %s470, %s471
      %p480 = scmp.eq.s32.totalorder %s35, 0
      %p481 = por %p479, %p480
      %p482 = scmp.ne.s32.totalorder %s470, %s471
      %p483 = scmp.eq.s32.totalorder %s36, 1
      %p484 = por %p482, %p483
      %p486 = scmp.ne.s32.totalorder %s471, %s485
      %p487 = scmp.eq.s32.totalorder %s36, 0
      %p488 = por %p486, %p487
      %s489 = ssub.s32 %s30, %s37
      %p490 = scmp.eq.s32.totalorder %s489, 0
      %s492 = sadd.s32 %s491, 1
      %s493 = scalar_select %p490, %s491, %s492
      %p496 = pneg %p490
      %p497 = scmp.eq.s32.totalorder %s30, 1
      %p498 = por %p496, %p497
      %p499 = scmp.ne.s32.totalorder %s491, %s494
      %p500 = scmp.eq.s32.totalorder %s30, 0
      %p501 = por %p499, %p500
      %p502 = scmp.ne.s32.totalorder %s491, %s494
      %p503 = scmp.eq.s32.totalorder %s35, 1
      %p504 = por %p502, %p503
      %p505 = scmp.ne.s32.totalorder %s494, %s495
      %p506 = scmp.eq.s32.totalorder %s35, 0
      %p507 = por %p505, %p506
      %p508 = scmp.ne.s32.totalorder %s494, %s495
      %p509 = scmp.eq.s32.totalorder %s36, 1
      %p510 = por %p508, %p509
      %p512 = scmp.ne.s32.totalorder %s495, %s511
      %p513 = scmp.eq.s32.totalorder %s36, 0
      %p514 = por %p512, %p513
      %p515 = scmp.le.s32.totalorder 1, %s30
      %p516 = scmp.lt.s32.totalorder %s30, 3
      %p517 = pnand %p515, %p516
      %p518 = pneg %p517
      // Predicated region
      $region9: #{tpu_custom_call.1} parent=5 // pred_check
        _
      $region10: #{tpu_custom_call.1} parent=5 // pred_check_branch
        %520 = sbr.rel (%p517) target = $region12
      $region11: #{tpu_custom_call.1} parent=5 // pred_region
        %s521 = ssub.s32 %s30, 1
        // Predicated region
        $region13: #{tpu_custom_call.1} parent=11 // pred_check
          %p522 = pneg %p103
        $region14: #{tpu_custom_call.1} parent=11 // pred_check_branch
          %524 = sbr.rel (%p522) target = $region16
        $region15: #{tpu_custom_call.1} parent=11 // pred_region
          _
        $region16: #{tpu_custom_call.1} parent=11 // pred_fallthru
          _
        // Predicated region
        $region17: #{tpu_custom_call.1} parent=11 // pred_check
          %p525 = pneg %p124
        $region18: #{tpu_custom_call.1} parent=11 // pred_check_branch
          %527 = sbr.rel (%p525) target = $region20
        $region19: #{tpu_custom_call.1} parent=11 // pred_region
          _
        $region20: #{tpu_custom_call.1} parent=11 // pred_fallthru
          _
        // Predicated region
        $region21: #{tpu_custom_call.1} parent=11 // pred_check
          %p528 = pneg %p145
        $region22: #{tpu_custom_call.1} parent=11 // pred_check_branch
          %530 = sbr.rel (%p528) target = $region24
        $region23: #{tpu_custom_call.1} parent=11 // pred_region
          _
        $region24: #{tpu_custom_call.1} parent=11 // pred_fallthru
          _
        // Predicated region
        $region25: #{tpu_custom_call.1} parent=11 // pred_check
          %p531 = pneg %p166
        $region26: #{tpu_custom_call.1} parent=11 // pred_check_branch
          %533 = sbr.rel (%p531) target = $region28
        $region27: #{tpu_custom_call.1} parent=11 // pred_region
          _
        $region28: #{tpu_custom_call.1} parent=11 // pred_fallthru
          _
        // Predicated region
        $region29: #{tpu_custom_call.1} parent=11 // pred_check
          %p534 = pneg %p187
        $region30: #{tpu_custom_call.1} parent=11 // pred_check_branch
          %536 = sbr.rel (%p534) target = $region32
        $region31: #{tpu_custom_call.1} parent=11 // pred_region
          _
        $region32: #{tpu_custom_call.1} parent=11 // pred_fallthru
          _
        // Predicated region
        $region33: #{tpu_custom_call.1} parent=11 // pred_check
          %p537 = pneg %p208
        $region34: #{tpu_custom_call.1} parent=11 // pred_check_branch
          %539 = sbr.rel (%p537) target = $region36
        $region35: #{tpu_custom_call.1} parent=11 // pred_region
          _
        $region36: #{tpu_custom_call.1} parent=11 // pred_fallthru
          _
        // Predicated region
        $region37: #{tpu_custom_call.1} parent=11 // pred_check
          %p540 = pneg %p229
        $region38: #{tpu_custom_call.1} parent=11 // pred_check_branch
          %542 = sbr.rel (%p540) target = $region40
        $region39: #{tpu_custom_call.1} parent=11 // pred_region
          _
        $region40: #{tpu_custom_call.1} parent=11 // pred_fallthru
          _
        // Predicated region
        $region41: #{tpu_custom_call.1} parent=11 // pred_check
          %p543 = pneg %p250
        $region42: #{tpu_custom_call.1} parent=11 // pred_check_branch
          %545 = sbr.rel (%p543) target = $region44
        $region43: #{tpu_custom_call.1} parent=11 // pred_region
          _
        $region44: #{tpu_custom_call.1} parent=11 // pred_fallthru
          _
        // Predicated region
        $region45: #{tpu_custom_call.1} parent=11 // pred_check
          %p546 = pneg %p271
        $region46: #{tpu_custom_call.1} parent=11 // pred_check_branch
          %548 = sbr.rel (%p546) target = $region48
        $region47: #{tpu_custom_call.1} parent=11 // pred_region
          _
        $region48: #{tpu_custom_call.1} parent=11 // pred_fallthru
          _
        // Predicated region
        $region49: #{tpu_custom_call.1} parent=11 // pred_check
          %p549 = pneg %p292
        $region50: #{tpu_custom_call.1} parent=11 // pred_check_branch
          %551 = sbr.rel (%p549) target = $region52
        $region51: #{tpu_custom_call.1} parent=11 // pred_region
          _
        $region52: #{tpu_custom_call.1} parent=11 // pred_fallthru
          _
        // Predicated region
        $region53: #{tpu_custom_call.1} parent=11 // pred_check
          %p552 = pneg %p313
        $region54: #{tpu_custom_call.1} parent=11 // pred_check_branch
          %554 = sbr.rel (%p552) target = $region56
        $region55: #{tpu_custom_call.1} parent=11 // pred_region
          _
        $region56: #{tpu_custom_call.1} parent=11 // pred_fallthru
          _
        // Predicated region
        $region57: #{tpu_custom_call.1} parent=11 // pred_check
          %p555 = pneg %p334
        $region58: #{tpu_custom_call.1} parent=11 // pred_check_branch
          %557 = sbr.rel (%p555) target = $region60
        $region59: #{tpu_custom_call.1} parent=11 // pred_region
          _
        $region60: #{tpu_custom_call.1} parent=11 // pred_fallthru
          _
        // Predicated region
        $region61: #{tpu_custom_call.1} parent=11 // pred_check
          %p558 = pneg %p355
        $region62: #{tpu_custom_call.1} parent=11 // pred_check_branch
          %560 = sbr.rel (%p558) target = $region64
        $region63: #{tpu_custom_call.1} parent=11 // pred_region
          _
        $region64: #{tpu_custom_call.1} parent=11 // pred_fallthru
          _
        // Predicated region
        $region65: #{tpu_custom_call.1} parent=11 // pred_check
          %p561 = pneg %p376
        $region66: #{tpu_custom_call.1} parent=11 // pred_check_branch
          %563 = sbr.rel (%p561) target = $region68
        $region67: #{tpu_custom_call.1} parent=11 // pred_region
          _
        $region68: #{tpu_custom_call.1} parent=11 // pred_fallthru
          _
        // Predicated region
        $region69: #{tpu_custom_call.1} parent=11 // pred_check
          %p564 = pneg %p397
        $region70: #{tpu_custom_call.1} parent=11 // pred_check_branch
          %566 = sbr.rel (%p564) target = $region72
        $region71: #{tpu_custom_call.1} parent=11 // pred_region
          _
        $region72: #{tpu_custom_call.1} parent=11 // pred_fallthru
          _
        // Predicated region
        $region73: #{tpu_custom_call.1} parent=11 // pred_check
          %p567 = pneg %p418
        $region74: #{tpu_custom_call.1} parent=11 // pred_check_branch
          %569 = sbr.rel (%p567) target = $region76
        $region75: #{tpu_custom_call.1} parent=11 // pred_region
          _
        $region76: #{tpu_custom_call.1} parent=11 // pred_fallthru
          _
        // Predicated region
        $region77: #{tpu_custom_call.1} parent=11 // pred_check
          %p570 = pneg %p439
        $region78: #{tpu_custom_call.1} parent=11 // pred_check_branch
          %572 = sbr.rel (%p570) target = $region80
        $region79: #{tpu_custom_call.1} parent=11 // pred_region
          _
        $region80: #{tpu_custom_call.1} parent=11 // pred_fallthru
          _
        // Predicated region
        $region81: #{tpu_custom_call.1} parent=11 // pred_check
          %p573 = pneg %p460
        $region82: #{tpu_custom_call.1} parent=11 // pred_check_branch
          %575 = sbr.rel (%p573) target = $region84
        $region83: #{tpu_custom_call.1} parent=11 // pred_region
          _
        $region84: #{tpu_custom_call.1} parent=11 // pred_fallthru
          _
        // Predicated region
        $region85: #{tpu_custom_call.1} parent=11 // pred_check
          %p576 = pneg %p481
        $region86: #{tpu_custom_call.1} parent=11 // pred_check_branch
          %578 = sbr.rel (%p576) target = $region88
        $region87: #{tpu_custom_call.1} parent=11 // pred_region
          _
        $region88: #{tpu_custom_call.1} parent=11 // pred_fallthru
          _
      $region12: #{tpu_custom_call.1} parent=5 // pred_fallthru
        _
      %p579 = scmp.lt.s32.totalorder %s30, 2
      // Predicated region
      $region89: #{tpu_custom_call.1} parent=5 // pred_check
        %p580 = pneg %p579
      $region90: #{tpu_custom_call.1} parent=5 // pred_check_branch
        %582 = sbr.rel (%p580) target = $region92
      $region91: #{tpu_custom_call.1} parent=5 // pred_region
        // Predicated region
        $region93: #{tpu_custom_call.1} parent=91 // pred_check
          %p583 = pneg %p50
        $region94: #{tpu_custom_call.1} parent=91 // pred_check_branch
          %585 = sbr.rel (%p583) target = $region96
        $region95: #{tpu_custom_call.1} parent=91 // pred_region
          %p586 = scmp.lt.s32.totalorder %s30, 1
          %s587 = scalar_select %p586, %s30, 1
          %s588 = smul.addr %s587, 8
          %s589 = scalar_lea.vmem %s0, %s588
        $region96: #{tpu_custom_call.1} parent=91 // pred_fallthru
          _
        // Predicated region
        $region97: #{tpu_custom_call.1} parent=91 // pred_check
          %p590 = pneg %p76
        $region98: #{tpu_custom_call.1} parent=91 // pred_check_branch
          %592 = sbr.rel (%p590) target = $region100
        $region99: #{tpu_custom_call.1} parent=91 // pred_region
          %p593 = scmp.lt.s32.totalorder %s30, 1
          %s594 = scalar_select %p593, %s30, 1
          %s595 = scalar_lea.vmem %s1, %s594
        $region100: #{tpu_custom_call.1} parent=91 // pred_fallthru
          _
      $region92: #{tpu_custom_call.1} parent=5 // pred_fallthru
        _
      %p596 = scmp.le.s32.totalorder 1, %s30
      %p597 = scmp.lt.s32.totalorder %s30, 3
      %p598 = pnand %p596, %p597
      %p599 = pneg %p598
      // Predicated region
      $region101: #{tpu_custom_call.1} parent=5 // pred_check
        _
      $region102: #{tpu_custom_call.1} parent=5 // pred_check_branch
        %601 = sbr.rel (%p598) target = $region104
      $region103: #{tpu_custom_call.1} parent=5 // pred_region
        %s602 = ssub.s32 %s30, 1
        %p603 = scmp.lt.s32.totalorder %s35, 1
        %s604 = scalar_select %p603, %s35, 1
        %s605 = smul.addr %s604, 8
        %s606 = scalar_lea.vmem %s0, %s605
        %p607 = pneg %p56
        %p608 = pneg %p53
        %p609 = scmp.lt.s32.totalorder %s35, 1
        %s610 = scalar_select %p609, %s35, 1
        %s611 = scalar_lea.vmem %s1, %s610
        %p612 = pneg %p82
        %p613 = pneg %p79
        %p614 = pneg %p103
        %p615 = pneg %p100
        %p616 = pneg %p124
        %p617 = pneg %p121
        %p618 = pneg %p145
        %p619 = pneg %p142
        %p620 = pneg %p166
        %p621 = pneg %p163
        %p622 = pneg %p187
        %p623 = pneg %p184
        %p624 = pneg %p208
        %p625 = pneg %p205
        %p626 = pneg %p229
        %p627 = pneg %p226
        %p628 = pneg %p250
        %p629 = pneg %p247
        %p630 = pneg %p271
        %p631 = pneg %p268
        %p632 = pneg %p292
        %p633 = pneg %p289
        %p634 = pneg %p313
        %p635 = pneg %p310
        %p636 = pneg %p334
        %p637 = pneg %p331
        %p638 = pneg %p355
        %p639 = pneg %p352
        %p640 = pneg %p376
        %p641 = pneg %p373
        %p642 = pneg %p397
        %p643 = pneg %p394
        %p644 = pneg %p418
        %p645 = pneg %p415
        %p646 = pneg %p439
        %p647 = pneg %p436
        %p648 = pneg %p460
        %p649 = pneg %p457
        %p650 = pneg %p481
        %p651 = pneg %p478
        %p652 = pneg %p507
        %p653 = pneg %p504
        %s654 = sand.u32 %s494, 1
        %s655 = scalar_lea.sflag [#allocation3], %s654
        %s656 = sand.u32 %s494, 1
        %s657 = smul.addr %s656, 8
        %s658 = scalar_lea.vmem [#allocation2], %s657
        %p659 = scmp.lt.s32.totalorder %s35, 1
        %s660 = scalar_select %p659, %s35, 1
        %s661 = smul.addr %s660, 8
        %s662 = scalar_lea.vmem %s0, %s661
        %p663 = scmp.lt.s32.totalorder %s35, 1
        %s664 = scalar_select %p663, %s35, 1
        %s665 = scalar_lea.vmem %s1, %s664
        %v667 = vld [vmem:[%s662] sm:$0xff]
        %v668 = vld [vmem:[%s2] sm:$0x1]
        %v669 = vld [vmem:[%s3] sm:$0x1]
        %vm670 = vcmask 261120
        %v671 = vsel %vm670, %v667, 0.0
        %672 = vadd.xlane.f32.xlu0 %v671
        %v673 = vpop.xlane.xlu0 %672
        %v674 = vrcp.pop 32.0
        %v675 = vmul.f32 %v673, %v674
        %v676 = vsub.f32 %v667, %v675
        %v677 = vmul.f32 %v676, %v676
        %v678 = vsel %vm670, %v677, 0.0
        %679 = vadd.xlane.f32.xlu0 %v678
        %v680 = vpop.xlane.xlu0 %679
        %v681 = vmul.f32 %v680, %v674
        %v682 = vadd.f32 %v681, 1e-12
        %v683 = vrsqrt.pop %v682
        %v684 = vmul.f32 %v676, %v683
        %v686 = vlaneseq
        %v687 = vshrl.u32 %v686, 7
        %v688 = vsub.s32 0, %v687
        %v689 = vrot.slane %v668, %v688
        %v691 = vmul.f32 %v684, %v689
        %v693 = vlaneseq
        %v694 = vshrl.u32 %v693, 7
        %v695 = vsub.s32 0, %v694
        %v696 = vrot.slane %v669, %v695
        %v698 = vadd.f32 %v691, %v696
        %v699 = vld [vmem:[%s665] sm:$0x1]
        %v701 = vlaneseq
        %v702 = vshrl.u32 %v701, 7
        %v703 = vsub.s32 0, %v702
        %v704 = vrot.slane %v699, %v703
        %v706 = vpack.c.bf16 %v698, %v698
        %v707 = vld [vmem:[%s4] sm:$0xf]
        %v708 = vld [vmem:[%s4 + $0x4] sm:$0xf]
        %v709 = vld [vmem:[%s4 + $0x8] sm:$0xf]
        %v710 = vld [vmem:[%s4 + $0xc] sm:$0xf]
        %v711 = vld [vmem:[%s4 + $0x10] sm:$0xf]
        %v712 = vld [vmem:[%s4 + $0x14] sm:$0xf]
        %v713 = vld [vmem:[%s4 + $0x18] sm:$0xf]
        %v714 = vld [vmem:[%s4 + $0x1c] sm:$0xf]
        %v715 = vld [vmem:[%s4 + $0x20] sm:$0xf]
        %v716 = vld [vmem:[%s4 + $0x24] sm:$0xf]
        %v717 = vld [vmem:[%s4 + $0x28] sm:$0xf]
        %v718 = vld [vmem:[%s4 + $0x2c] sm:$0xf]
        %v719 = vld [vmem:[%s5] sm:$0xff]
        %v720 = vld [vmem:[%s5 + $0x8] sm:$0xff]
        %v721 = vld [vmem:[%s5 + $0x10] sm:$0xff]
        %v722 = vld [vmem:[%s5 + $0x18] sm:$0xff]
        %v723 = vld [vmem:[%s5 + $0x20] sm:$0xff]
        %v724 = vld [vmem:[%s5 + $0x28] sm:$0xff]
        %v725 = vld [vmem:[%s5 + $0x30] sm:$0xff]
        %v726 = vld [vmem:[%s5 + $0x38] sm:$0xff]
        %v727 = vld [vmem:[%s5 + $0x40] sm:$0xff]
        %v728 = vld [vmem:[%s5 + $0x48] sm:$0xff]
        %v729 = vld [vmem:[%s5 + $0x50] sm:$0xff]
        %v730 = vld [vmem:[%s5 + $0x58] sm:$0xff]
        %732 = vset.pattern.permute.xlu0 0
        %733 = vperm.xlu0 %732, %v719
        %v734 = vpop.permute.xlu0 %733
        %737 = vset.pattern.permute.xlu0 0
        %738 = vperm.xlu0 %737, %v720
        %v739 = vpop.permute.xlu0 %738
        %742 = vset.pattern.permute.xlu0 0
        %743 = vperm.xlu0 %742, %v721
        %v744 = vpop.permute.xlu0 %743
        %747 = vset.pattern.permute.xlu0 0
        %748 = vperm.xlu0 %747, %v722
        %v749 = vpop.permute.xlu0 %748
        %752 = vset.pattern.permute.xlu0 0
        %753 = vperm.xlu0 %752, %v723
        %v754 = vpop.permute.xlu0 %753
        %757 = vset.pattern.permute.xlu0 0
        %758 = vperm.xlu0 %757, %v724
        %v759 = vpop.permute.xlu0 %758
        %762 = vset.pattern.permute.xlu0 0
        %763 = vperm.xlu0 %762, %v725
        %v764 = vpop.permute.xlu0 %763
        %767 = vset.pattern.permute.xlu0 0
        %768 = vperm.xlu0 %767, %v726
        %v769 = vpop.permute.xlu0 %768
        %772 = vset.pattern.permute.xlu0 0
        %773 = vperm.xlu0 %772, %v727
        %v774 = vpop.permute.xlu0 %773
        %777 = vset.pattern.permute.xlu0 0
        %778 = vperm.xlu0 %777, %v728
        %v779 = vpop.permute.xlu0 %778
        %782 = vset.pattern.permute.xlu0 0
        %783 = vperm.xlu0 %782, %v729
        %v784 = vpop.permute.xlu0 %783
        %787 = vset.pattern.permute.xlu0 0
        %788 = vperm.xlu0 %787, %v730
        %v789 = vpop.permute.xlu0 %788
        %v803 = vunpack.c.l.b16 %v707
        %v804 = vunpack.c.l.b16 %v708
        %v805 = vunpack.c.l.b16 %v709
        %v806 = vunpack.c.l.b16 %v710
        %v807 = vunpack.c.l.b16 %v711
        %v808 = vunpack.c.l.b16 %v712
        %v809 = vunpack.c.l.b16 %v713
        %v810 = vunpack.c.l.b16 %v714
        %v811 = vunpack.c.l.b16 %v715
        %v812 = vunpack.c.l.b16 %v716
        %v813 = vunpack.c.l.b16 %v717
        %v814 = vunpack.c.l.b16 %v718
        %v815 = vpack.c.b16 %v804, %v803
        %v816 = vpack.c.b16 %v806, %v805
        %v817 = vpack.c.b16 %v808, %v807
        %v818 = vpack.c.b16 %v810, %v809
        %v819 = vpack.c.b16 %v812, %v811
        %v820 = vpack.c.b16 %v814, %v813
        %v822 = vsel %vm670, %v815, 0
        %v825 = vsel %vm670, %v816, 0
        %v828 = vsel %vm670, %v817, 0
        %v831 = vsel %vm670, %v818, 0
        %v834 = vsel %vm670, %v819, 0
        %v837 = vsel %vm670, %v820, 0
        %v840 = vsel %vm670, %v706, 0
        %842 = vmatprep.subr.bf16.mxu0 0
        %843 = vmatpush1.bf16.xpose.msra.mxu0 %v840
        %844 = vmatprep.subr.bf16.mxu0 0
        %845 = vmatpush1.bf16.xpose.msra.mxu0 0
        %846 = vmatprep.subr.bf16.mxu0 0
        %847 = vmatpush1.bf16.xpose.msra.mxu0 0
        %848 = vmatprep.subr.bf16.mxu0 0
        %849 = vmatpush1.bf16.xpose.msra.mxu0 0
        %850 = vmatprep.subr.bf16.mxu0 0
        %851 = vmatpush1.bf16.xpose.msra.mxu0 0
        %852 = vmatprep.subr.bf16.mxu0 0
        %853 = vmatpush1.bf16.xpose.msra.mxu0 0
        %854 = vmatprep.subr.bf16.mxu0 0
        %855 = vmatpush1.bf16.xpose.msra.mxu0 0
        %856 = vmatprep.subr.bf16.mxu0 0
        %857 = vmatpush1.bf16.xpose.msra.mxu0 0
        %858 = vmatprep.subr.bf16.mxu0 0
        %859 = vmatpush1.bf16.xpose.msra.mxu0 0
        %860 = vmatprep.subr.bf16.mxu0 0
        %861 = vmatpush1.bf16.xpose.msra.mxu0 0
        %862 = vmatprep.subr.bf16.mxu0 0
        %863 = vmatpush1.bf16.xpose.msra.mxu0 0
        %864 = vmatprep.subr.bf16.mxu0 0
        %865 = vmatpush1.bf16.xpose.msra.mxu0 0
        %866 = vmatprep.subr.bf16.mxu0 0
        %867 = vmatpush1.bf16.xpose.msra.mxu0 0
        %868 = vmatprep.subr.bf16.mxu0 0
        %869 = vmatpush1.bf16.xpose.msra.mxu0 0
        %870 = vmatprep.subr.bf16.mxu0 0
        %871 = vmatpush1.bf16.xpose.msra.mxu0 0
        %872 = vmatprep.subr.bf16.mxu0 0
        %873 = vmatpush1.bf16.xpose.msra.mxu0 0
        %874 = vmatprep.mubr.bf16.mxu0 0
        %875 = vmatmul.mubr.bf16.gmra.mrb[0].mxu0 %v822
        %v876 = vpop.f32.mrb[0].mxu0
        %v877 = vadd.f32 %v734, %v876
        %v878 = vpop.f32.mrb[0].mxu0
        %v879 = vpop.f32.mrb[0].mxu0
        %v880 = vadd.f32 %v739, %v879
        %v881 = vpop.f32.mrb[0].mxu0
        %882 = vmatprep.mubr.bf16.mxu0 0
        %883 = vmatmul.mubr.bf16.gmra.mrb[0].mxu0 %v825
        %v884 = vpop.f32.mrb[0].mxu0
        %v885 = vadd.f32 %v744, %v884
        %v886 = vpop.f32.mrb[0].mxu0
        %v887 = vpop.f32.mrb[0].mxu0
        %v888 = vadd.f32 %v749, %v887
        %v889 = vpop.f32.mrb[0].mxu0
        %890 = vmatprep.mubr.bf16.mxu0 0
        %891 = vmatmul.mubr.bf16.gmra.mrb[0].mxu0 %v828
        %v892 = vpop.f32.mrb[0].mxu0
        %v893 = vadd.f32 %v754, %v892
        %v894 = vpop.f32.mrb[0].mxu0
        %v895 = vpop.f32.mrb[0].mxu0
        %v896 = vadd.f32 %v759, %v895
        %v897 = vpop.f32.mrb[0].mxu0
        %898 = vmatprep.mubr.bf16.mxu0 0
        %899 = vmatmul.mubr.bf16.gmra.mrb[0].mxu0 %v831
        %v900 = vpop.f32.mrb[0].mxu0
        %v901 = vadd.f32 %v764, %v900
        %v902 = vpop.f32.mrb[0].mxu0
        %v903 = vpop.f32.mrb[0].mxu0
        %v904 = vadd.f32 %v769, %v903
        %v905 = vpop.f32.mrb[0].mxu0
        %906 = vmatprep.mubr.bf16.mxu0 0
        %907 = vmatmul.mubr.bf16.gmra.mrb[0].mxu0 %v834
        %v908 = vpop.f32.mrb[0].mxu0
        %v909 = vadd.f32 %v774, %v908
        %v910 = vpop.f32.mrb[0].mxu0
        %v911 = vpop.f32.mrb[0].mxu0
        %v912 = vadd.f32 %v779, %v911
        %v913 = vpop.f32.mrb[0].mxu0
        %914 = vmatprep.mubr.bf16.mxu0 0
        %915 = vmatmul.mubr.bf16.gmra.mrb[0].mxu0 %v837
        %v916 = vpop.f32.mrb[0].mxu0
        %v917 = vadd.f32 %v784, %v916
        %v918 = vpop.f32.mrb[0].mxu0
        %v919 = vpop.f32.mrb[0].mxu0
        %v920 = vadd.f32 %v789, %v919
        %v921 = vpop.f32.mrb[0].mxu0
        %922 = vdwg.mxu0
        %v923 = vpack.c.bf16 %v880, %v877
        %v924 = vpack.c.bf16 %v888, %v885
        %v925 = vpack.c.bf16 %v896, %v893
        %v926 = vpack.c.bf16 %v904, %v901
        %v927 = vpack.c.bf16 %v912, %v909
        %v928 = vpack.c.bf16 %v920, %v917
        %929 = vxpose.xlu0.c.b16.start [1/8] %v923, 128
        %930 = vxpose.xlu0.c.b16.cont [2/8] 0, 128
        %931 = vxpose.xlu0.c.b16.cont [3/8] 0, 128
        %932 = vxpose.xlu0.c.b16.cont [4/8] 0, 128
        %933 = vxpose.xlu0.c.b16.cont [5/8] 0, 128
        %934 = vxpose.xlu0.c.b16.cont [6/8] 0, 128
        %935 = vxpose.xlu0.c.b16.cont [7/8] 0, 128
        %936 = vxpose.xlu0.c.b16.end [8/8] 0, 128
        %v937 = vpop.trf.xlu0
        %v938 = vpop.trf.xlu0
        %v939 = vpop.trf.xlu0
        %v940 = vpop.trf.xlu0
        %v941 = vpop.trf.xlu0
        %v942 = vpop.trf.xlu0
        %v943 = vpop.trf.xlu0
        %v944 = vpop.trf.xlu0
        %vm945 = vcmask 130048
        %v947 = vsel %vm945, %v937, 0
        %949 = vmatprep.subr.bf16.mxu0 0
        %950 = vmatpush1.bf16.msra.mxu0 %v925
        %951 = vmatprep.subr.bf16.mxu0 0
        %952 = vmatpush1.bf16.msra.mxu0 0
        %953 = vmatprep.subr.bf16.mxu0 0
        %954 = vmatpush1.bf16.msra.mxu0 0
        %955 = vmatprep.subr.bf16.mxu0 0
        %956 = vmatpush1.bf16.msra.mxu0 0
        %957 = vmatprep.subr.bf16.mxu0 0
        %958 = vmatpush1.bf16.msra.mxu0 0
        %959 = vmatprep.subr.bf16.mxu0 0
        %960 = vmatpush1.bf16.msra.mxu0 0
        %961 = vmatprep.subr.bf16.mxu0 0
        %962 = vmatpush1.bf16.msra.mxu0 0
        %963 = vmatprep.subr.bf16.mxu0 0
        %964 = vmatpush1.bf16.msra.mxu0 0
        %965 = vmatprep.subr.bf16.mxu0 0
        %966 = vmatpush1.bf16.msra.mxu0 0
        %967 = vmatprep.subr.bf16.mxu0 0
        %968 = vmatpush1.bf16.msra.mxu0 0
        %969 = vmatprep.subr.bf16.mxu0 0
        %970 = vmatpush1.bf16.msra.mxu0 0
        %971 = vmatprep.subr.bf16.mxu0 0
        %972 = vmatpush1.bf16.msra.mxu0 0
        %973 = vmatprep.subr.bf16.mxu0 0
        %974 = vmatpush1.bf16.msra.mxu0 0
        %975 = vmatprep.subr.bf16.mxu0 0
        %976 = vmatpush1.bf16.msra.mxu0 0
        %977 = vmatprep.subr.bf16.mxu0 0
        %978 = vmatpush1.bf16.msra.mxu0 0
        %979 = vmatprep.subr.bf16.mxu0 0
        %980 = vmatpush1.bf16.msra.mxu0 0
        %981 = vmatprep.mubr.bf16.mxu0 0
        %982 = vmatmul.mubr.bf16.gmra.mrb[0].mxu0 %v947
        %v983 = vpop.f32.mrb[0].mxu0
        %v984 = vadd.f32 %v704, %v983
        %v985 = vpop.f32.mrb[0].mxu0
        %v986 = vpop.f32.mrb[0].mxu0
        %v987 = vpop.f32.mrb[0].mxu0
        %988 = vdwg.mxu0
        %vm989 = vcmask 64512
        %v990 = vsel %vm989, %v984, -inf
        %991 = vmax.xlane.f32.xlu0 %v990
        %v992 = vpop.xlane.xlu0 %991
        %v993 = vsub.f32 %v984, %v992
        %v994 = vmul.f32 %v993, 1.442695
        %v995 = vpow.pop %v994
        %v996 = vsel %vm989, %v995, 0.0
        %997 = vadd.xlane.f32.xlu0 %v996
        %v998 = vpop.xlane.xlu0 %997
        %v999 = vrcp.pop %v998
        %v1000 = vmul.f32 %v995, %v999
        %v1001 = vpack.c.bf16 %v1000, %v1000
        %v1003 = vsel %vm989, %v927, 0
        %v1006 = vsel %vm989, %v1001, 0
        %1008 = vmatprep.subr.bf16.mxu0 0
        %1009 = vmatpush1.bf16.xpose.msra.mxu0 %v1006
        %1010 = vmatprep.subr.bf16.mxu0 0
        %1011 = vmatpush1.bf16.xpose.msra.mxu0 0
        %1012 = vmatprep.subr.bf16.mxu0 0
        %1013 = vmatpush1.bf16.xpose.msra.mxu0 0
        %1014 = vmatprep.subr.bf16.mxu0 0
        %1015 = vmatpush1.bf16.xpose.msra.mxu0 0
        %1016 = vmatprep.subr.bf16.mxu0 0
        %1017 = vmatpush1.bf16.xpose.msra.mxu0 0
        %1018 = vmatprep.subr.bf16.mxu0 0
        %1019 = vmatpush1.bf16.xpose.msra.mxu0 0
        %1020 = vmatprep.subr.bf16.mxu0 0
        %1021 = vmatpush1.bf16.xpose.msra.mxu0 0
        %1022 = vmatprep.subr.bf16.mxu0 0
        %1023 = vmatpush1.bf16.xpose.msra.mxu0 0
        %1024 = vmatprep.subr.bf16.mxu0 0
        %1025 = vmatpush1.bf16.xpose.msra.mxu0 0
        %1026 = vmatprep.subr.bf16.mxu0 0
        %1027 = vmatpush1.bf16.xpose.msra.mxu0 0
        %1028 = vmatprep.subr.bf16.mxu0 0
        %1029 = vmatpush1.bf16.xpose.msra.mxu0 0
        %1030 = vmatprep.subr.bf16.mxu0 0
        %1031 = vmatpush1.bf16.xpose.msra.mxu0 0
        %1032 = vmatprep.subr.bf16.mxu0 0
        %1033 = vmatpush1.bf16.xpose.msra.mxu0 0
        %1034 = vmatprep.subr.bf16.mxu0 0
        %1035 = vmatpush1.bf16.xpose.msra.mxu0 0
        %1036 = vmatprep.subr.bf16.mxu0 0
        %1037 = vmatpush1.bf16.xpose.msra.mxu0 0
        %1038 = vmatprep.subr.bf16.mxu0 0
        %1039 = vmatpush1.bf16.xpose.msra.mxu0 0
        %1040 = vmatprep.mubr.bf16.mxu0 0
        %1041 = vmatmul.mubr.bf16.gmra.mrb[0].mxu0 %v1003
        %v1042 = vpop.f32.mrb[0].mxu0
        %v1043 = vadd.f32 0.0, %v1042
        %v1044 = vpop.f32.mrb[0].mxu0
        %v1045 = vpop.f32.mrb[0].mxu0
        %v1046 = vadd.f32 0.0, %v1045
        %v1047 = vpop.f32.mrb[0].mxu0
        %1048 = vdwg.mxu0
        %1049 = vxpose.xlu0.c.b16.start [1/8] %v924, 128
        %1050 = vxpose.xlu0.c.b16.cont [2/8] 0, 128
        %1051 = vxpose.xlu0.c.b16.cont [3/8] 0, 128
        %1052 = vxpose.xlu0.c.b16.cont [4/8] 0, 128
        %1053 = vxpose.xlu0.c.b16.cont [5/8] 0, 128
        %1054 = vxpose.xlu0.c.b16.cont [6/8] 0, 128
        %1055 = vxpose.xlu0.c.b16.cont [7/8] 0, 128
        %1056 = vxpose.xlu0.c.b16.end [8/8] 0, 128
        %v1057 = vpop.trf.xlu0
        %v1058 = vpop.trf.xlu0
        %v1059 = vpop.trf.xlu0
        %v1060 = vpop.trf.xlu0
        %v1061 = vpop.trf.xlu0
        %v1062 = vpop.trf.xlu0
        %v1063 = vpop.trf.xlu0
        %v1064 = vpop.trf.xlu0
        %v1066 = vsel %vm945, %v1057, 0
        %1068 = vmatprep.subr.bf16.mxu0 0
        %1069 = vmatpush1.bf16.msra.mxu0 %v926
        %1070 = vmatprep.subr.bf16.mxu0 0
        %1071 = vmatpush1.bf16.msra.mxu0 0
        %1072 = vmatprep.subr.bf16.mxu0 0
        %1073 = vmatpush1.bf16.msra.mxu0 0
        %1074 = vmatprep.subr.bf16.mxu0 0
        %1075 = vmatpush1.bf16.msra.mxu0 0
        %1076 = vmatprep.subr.bf16.mxu0 0
        %1077 = vmatpush1.bf16.msra.mxu0 0
        %1078 = vmatprep.subr.bf16.mxu0 0
        %1079 = vmatpush1.bf16.msra.mxu0 0
        %1080 = vmatprep.subr.bf16.mxu0 0
        %1081 = vmatpush1.bf16.msra.mxu0 0
        %1082 = vmatprep.subr.bf16.mxu0 0
        %1083 = vmatpush1.bf16.msra.mxu0 0
        %1084 = vmatprep.subr.bf16.mxu0 0
        %1085 = vmatpush1.bf16.msra.mxu0 0
        %1086 = vmatprep.subr.bf16.mxu0 0
        %1087 = vmatpush1.bf16.msra.mxu0 0
        %1088 = vmatprep.subr.bf16.mxu0 0
        %1089 = vmatpush1.bf16.msra.mxu0 0
        %1090 = vmatprep.subr.bf16.mxu0 0
        %1091 = vmatpush1.bf16.msra.mxu0 0
        %1092 = vmatprep.subr.bf16.mxu0 0
        %1093 = vmatpush1.bf16.msra.mxu0 0
        %1094 = vmatprep.subr.bf16.mxu0 0
        %1095 = vmatpush1.bf16.msra.mxu0 0
        %1096 = vmatprep.subr.bf16.mxu0 0
        %1097 = vmatpush1.bf16.msra.mxu0 0
        %1098 = vmatprep.subr.bf16.mxu0 0
        %1099 = vmatpush1.bf16.msra.mxu0 0
        %1100 = vmatprep.mubr.bf16.mxu0 0
        %1101 = vmatmul.mubr.bf16.gmra.mrb[0].mxu0 %v1066
        %v1102 = vpop.f32.mrb[0].mxu0
        %v1103 = vadd.f32 %v704, %v1102
        %v1104 = vpop.f32.mrb[0].mxu0
        %v1105 = vpop.f32.mrb[0].mxu0
        %v1106 = vpop.f32.mrb[0].mxu0
        %1107 = vdwg.mxu0
        %v1108 = vsel %vm989, %v1103, -inf
        %1109 = vmax.xlane.f32.xlu0 %v1108
        %v1110 = vpop.xlane.xlu0 %1109
        %v1111 = vsub.f32 %v1103, %v1110
        %v1112 = vmul.f32 %v1111, 1.442695
        %v1113 = vpow.pop %v1112
        %v1114 = vsel %vm989, %v1113, 0.0
        %1115 = vadd.xlane.f32.xlu0 %v1114
        %v1116 = vpop.xlane.xlu0 %1115
        %v1117 = vrcp.pop %v1116
        %v1118 = vmul.f32 %v1113, %v1117
        %v1119 = vpack.c.bf16 %v1118, %v1118
        %v1121 = vsel %vm989, %v928, 0
        %v1124 = vsel %vm989, %v1119, 0
        %1126 = vmatprep.subr.bf16.mxu0 0
        %1127 = vmatpush1.bf16.xpose.msra.mxu0 %v1124
        %1128 = vmatprep.subr.bf16.mxu0 0
        %1129 = vmatpush1.bf16.xpose.msra.mxu0 0
        %1130 = vmatprep.subr.bf16.mxu0 0
        %1131 = vmatpush1.bf16.xpose.msra.mxu0 0
        %1132 = vmatprep.subr.bf16.mxu0 0
        %1133 = vmatpush1.bf16.xpose.msra.mxu0 0
        %1134 = vmatprep.subr.bf16.mxu0 0
        %1135 = vmatpush1.bf16.xpose.msra.mxu0 0
        %1136 = vmatprep.subr.bf16.mxu0 0
        %1137 = vmatpush1.bf16.xpose.msra.mxu0 0
        %1138 = vmatprep.subr.bf16.mxu0 0
        %1139 = vmatpush1.bf16.xpose.msra.mxu0 0
        %1140 = vmatprep.subr.bf16.mxu0 0
        %1141 = vmatpush1.bf16.xpose.msra.mxu0 0
        %1142 = vmatprep.subr.bf16.mxu0 0
        %1143 = vmatpush1.bf16.xpose.msra.mxu0 0
        %1144 = vmatprep.subr.bf16.mxu0 0
        %1145 = vmatpush1.bf16.xpose.msra.mxu0 0
        %1146 = vmatprep.subr.bf16.mxu0 0
        %1147 = vmatpush1.bf16.xpose.msra.mxu0 0
        %1148 = vmatprep.subr.bf16.mxu0 0
        %1149 = vmatpush1.bf16.xpose.msra.mxu0 0
        %1150 = vmatprep.subr.bf16.mxu0 0
        %1151 = vmatpush1.bf16.xpose.msra.mxu0 0
        %1152 = vmatprep.subr.bf16.mxu0 0
        %1153 = vmatpush1.bf16.xpose.msra.mxu0 0
        %1154 = vmatprep.subr.bf16.mxu0 0
        %1155 = vmatpush1.bf16.xpose.msra.mxu0 0
        %1156 = vmatprep.subr.bf16.mxu0 0
        %1157 = vmatpush1.bf16.xpose.msra.mxu0 0
        %1158 = vmatprep.mubr.bf16.mxu0 0
        %1159 = vmatmul.mubr.bf16.gmra.mrb[0].mxu0 %v1121
        %v1160 = vpop.f32.mrb[0].mxu0
        %v1161 = vadd.f32 0.0, %v1160
        %v1162 = vpop.f32.mrb[0].mxu0
        %v1163 = vpop.f32.mrb[0].mxu0
        %v1164 = vadd.f32 0.0, %v1163
        %v1165 = vpop.f32.mrb[0].mxu0
        %1166 = vdwg.mxu0
        %v1167 = vpack.c.bf16 %v1046, %v1043
        %v1168 = vpack.c.bf16 %v1164, %v1161
        %v1169 = vld [vmem:[%s6] sm:$0xf]
        %v1170 = vld [vmem:[%s6 + $0x4] sm:$0xf]
        %v1171 = vld [vmem:[%s6 + $0x8] sm:$0xf]
        %v1172 = vld [vmem:[%s6 + $0xc] sm:$0xf]
        %v1173 = vld [vmem:[%s7] sm:$0x1]
        %v1175 = vlaneseq
        %v1176 = vshrl.u32 %v1175, 7
        %v1177 = vsub.s32 0, %v1176
        %v1178 = vrot.slane %v1173, %v1177
        %1180 = vxpose.xlu0.c.b16.start [1/8] %v1167, 128
        %1181 = vxpose.xlu0.c.b16.cont [2/8] %v1168, 128
        %1182 = vxpose.xlu0.c.b16.cont [3/8] 0, 128
        %1183 = vxpose.xlu0.c.b16.cont [4/8] 0, 128
        %1184 = vxpose.xlu0.c.b16.cont [5/8] 0, 128
        %1185 = vxpose.xlu0.c.b16.cont [6/8] 0, 128
        %1186 = vxpose.xlu0.c.b16.cont [7/8] 0, 128
        %1187 = vxpose.xlu0.c.b16.end [8/8] 0, 128
        %v1188 = vpop.trf.xlu0
        %v1189 = vpop.trf.xlu0
        %v1190 = vpop.trf.xlu0
        %v1191 = vpop.trf.xlu0
        %v1192 = vpop.trf.xlu0
        %v1193 = vpop.trf.xlu0
        %v1194 = vpop.trf.xlu0
        %v1195 = vpop.trf.xlu0
        %v1200 = vunpack.c.l.b16 %v1169
        %v1201 = vunpack.c.l.b16 %v1170
        %v1202 = vunpack.c.l.b16 %v1171
        %v1203 = vunpack.c.l.b16 %v1172
        %v1204 = vpack.c.b16 %v1201, %v1200
        %v1205 = vpack.c.b16 %v1203, %v1202
        %v1209 = vsel %vm670, %v1188, 0
        %1211 = vmatprep.subr.bf16.mxu0 0
        %1212 = vmatpush1.bf16.msra.mxu0 %v1204
        %1213 = vmatprep.subr.bf16.mxu0 0
        %1214 = vmatpush1.bf16.msra.mxu0 %v1205
        %1215 = vmatprep.subr.bf16.mxu0 0
        %1216 = vmatpush1.bf16.msra.mxu0 0
        %1217 = vmatprep.subr.bf16.mxu0 0
        %1218 = vmatpush1.bf16.msra.mxu0 0
        %1219 = vmatprep.subr.bf16.mxu0 0
        %1220 = vmatpush1.bf16.msra.mxu0 0
        %1221 = vmatprep.subr.bf16.mxu0 0
        %1222 = vmatpush1.bf16.msra.mxu0 0
        %1223 = vmatprep.subr.bf16.mxu0 0
        %1224 = vmatpush1.bf16.msra.mxu0 0
        %1225 = vmatprep.subr.bf16.mxu0 0
        %1226 = vmatpush1.bf16.msra.mxu0 0
        %1227 = vmatprep.subr.bf16.mxu0 0
        %1228 = vmatpush1.bf16.msra.mxu0 0
        %1229 = vmatprep.subr.bf16.mxu0 0
        %1230 = vmatpush1.bf16.msra.mxu0 0
        %1231 = vmatprep.subr.bf16.mxu0 0
        %1232 = vmatpush1.bf16.msra.mxu0 0
        %1233 = vmatprep.subr.bf16.mxu0 0
        %1234 = vmatpush1.bf16.msra.mxu0 0
        %1235 = vmatprep.subr.bf16.mxu0 0
        %1236 = vmatpush1.bf16.msra.mxu0 0
        %1237 = vmatprep.subr.bf16.mxu0 0
        %1238 = vmatpush1.bf16.msra.mxu0 0
        %1239 = vmatprep.subr.bf16.mxu0 0
        %1240 = vmatpush1.bf16.msra.mxu0 0
        %1241 = vmatprep.subr.bf16.mxu0 0
        %1242 = vmatpush1.bf16.msra.mxu0 0
        %1243 = vmatprep.mubr.bf16.mxu0 0
        %1244 = vmatmul.mubr.bf16.gmra.mrb[0].mxu0 %v1209
        %v1245 = vpop.f32.mrb[0].mxu0
        %v1246 = vadd.f32 %v1178, %v1245
        %v1247 = vpop.f32.mrb[0].mxu0
        %v1248 = vpop.f32.mrb[0].mxu0
        %v1249 = vpop.f32.mrb[0].mxu0
        %1250 = vdwg.mxu0
        %v1251 = vadd.f32 %v698, %v1246
        %v1252 = vld [vmem:[%s8] sm:$0x1]
        %v1253 = vld [vmem:[%s9] sm:$0x1]
        %v1254 = vsel %vm670, %v1251, 0.0
        %1255 = vadd.xlane.f32.xlu0 %v1254
        %v1256 = vpop.xlane.xlu0 %1255
        %v1257 = vmul.f32 %v1256, %v674
        %v1258 = vsub.f32 %v1251, %v1257
        %v1259 = vmul.f32 %v1258, %v1258
        %v1260 = vsel %vm670, %v1259, 0.0
        %1261 = vadd.xlane.f32.xlu0 %v1260
        %v1262 = vpop.xlane.xlu0 %1261
        %v1263 = vmul.f32 %v1262, %v674
        %v1264 = vadd.f32 %v1263, 1e-12
        %v1265 = vrsqrt.pop %v1264
        %v1266 = vmul.f32 %v1258, %v1265
        %v1268 = vlaneseq
        %v1269 = vshrl.u32 %v1268, 7
        %v1270 = vsub.s32 0, %v1269
        %v1271 = vrot.slane %v1252, %v1270
        %v1273 = vmul.f32 %v1266, %v1271
        %v1275 = vlaneseq
        %v1276 = vshrl.u32 %v1275, 7
        %v1277 = vsub.s32 0, %v1276
        %v1278 = vrot.slane %v1253, %v1277
        %v1280 = vadd.f32 %v1273, %v1278
        %v1281 = vpack.c.bf16 %v1280, %v1280
        %v1282 = vld [vmem:[%s10] sm:$0xf]
        %v1283 = vld [vmem:[%s10 + $0x4] sm:$0xf]
        %v1284 = vld [vmem:[%s10 + $0x8] sm:$0xf]
        %v1285 = vld [vmem:[%s10 + $0xc] sm:$0xf]
        %v1286 = vld [vmem:[%s11] sm:$0x1]
        %v1288 = vlaneseq
        %v1289 = vshrl.u32 %v1288, 7
        %v1290 = vsub.s32 0, %v1289
        %v1291 = vrot.slane %v1286, %v1290
        %v1297 = vunpack.c.l.b16 %v1282
        %v1298 = vunpack.c.l.b16 %v1283
        %v1299 = vunpack.c.l.b16 %v1284
        %v1300 = vunpack.c.l.b16 %v1285
        %v1301 = vpack.c.b16 %v1298, %v1297
        %v1302 = vpack.c.b16 %v1300, %v1299
        %v1306 = vsel %vm670, %v1281, 0
        %1308 = vmatprep.subr.bf16.mxu0 0
        %1309 = vmatpush1.bf16.msra.mxu0 %v1301
        %1310 = vmatprep.subr.bf16.mxu0 0
        %1311 = vmatpush1.bf16.msra.mxu0 %v1302
        %1312 = vmatprep.subr.bf16.mxu0 0
        %1313 = vmatpush1.bf16.msra.mxu0 0
        %1314 = vmatprep.subr.bf16.mxu0 0
        %1315 = vmatpush1.bf16.msra.mxu0 0
        %1316 = vmatprep.subr.bf16.mxu0 0
        %1317 = vmatpush1.bf16.msra.mxu0 0
        %1318 = vmatprep.subr.bf16.mxu0 0
        %1319 = vmatpush1.bf16.msra.mxu0 0
        %1320 = vmatprep.subr.bf16.mxu0 0
        %1321 = vmatpush1.bf16.msra.mxu0 0
        %1322 = vmatprep.subr.bf16.mxu0 0
        %1323 = vmatpush1.bf16.msra.mxu0 0
        %1324 = vmatprep.subr.bf16.mxu0 0
        %1325 = vmatpush1.bf16.msra.mxu0 0
        %1326 = vmatprep.subr.bf16.mxu0 0
        %1327 = vmatpush1.bf16.msra.mxu0 0
        %1328 = vmatprep.subr.bf16.mxu0 0
        %1329 = vmatpush1.bf16.msra.mxu0 0
        %1330 = vmatprep.subr.bf16.mxu0 0
        %1331 = vmatpush1.bf16.msra.mxu0 0
        %1332 = vmatprep.subr.bf16.mxu0 0
        %1333 = vmatpush1.bf16.msra.mxu0 0
        %1334 = vmatprep.subr.bf16.mxu0 0
        %1335 = vmatpush1.bf16.msra.mxu0 0
        %1336 = vmatprep.subr.bf16.mxu0 0
        %1337 = vmatpush1.bf16.msra.mxu0 0
        %1338 = vmatprep.subr.bf16.mxu0 0
        %1339 = vmatpush1.bf16.msra.mxu0 0
        %1340 = vmatprep.mubr.bf16.mxu0 0
        %1341 = vmatmul.mubr.bf16.gmra.mrb[0].mxu0 %v1306
        %v1342 = vpop.f32.mrb[0].mxu0
        %v1343 = vadd.f32 %v1291, %v1342
        %v1344 = vpop.f32.mrb[0].mxu0
        %v1345 = vpop.f32.mrb[0].mxu0
        %v1346 = vpop.f32.mrb[0].mxu0
        %1347 = vdwg.mxu0
        %v1348 = vmul.f32 %v1343, %v1343
        %v1349 = vmul.f32 %v1343, %v1348
        %v1350 = vmul.f32 %v1349, 0.044715
        %v1351 = vadd.f32 %v1343, %v1350
        %v1352 = vmul.f32 %v1351, 0.7978846
        %v1353 = vtanh.pop %v1352
        %v1354 = vadd.f32 %v1353, 1.0
        %v1355 = vmul.f32 %v1354, 0.5
        %v1356 = vmul.f32 %v1343, %v1355
        %v1357 = vpack.c.bf16 %v1356, %v1356
        %v1358 = vld [vmem:[%s12] sm:$0xf]
        %v1359 = vld [vmem:[%s12 + $0x4] sm:$0xf]
        %v1360 = vld [vmem:[%s12 + $0x8] sm:$0xf]
        %v1361 = vld [vmem:[%s12 + $0xc] sm:$0xf]
        %v1362 = vld [vmem:[%s12 + $0x10] sm:$0xf]
        %v1363 = vld [vmem:[%s12 + $0x14] sm:$0xf]
        %v1364 = vld [vmem:[%s12 + $0x18] sm:$0xf]
        %v1365 = vld [vmem:[%s12 + $0x1c] sm:$0xf]
        %v1366 = vld [vmem:[%s13] sm:$0x1]
        %v1368 = vlaneseq
        %v1369 = vshrl.u32 %v1368, 7
        %v1370 = vsub.s32 0, %v1369
        %v1371 = vrot.slane %v1366, %v1370
        %v1381 = vunpack.c.l.b16 %v1358
        %v1382 = vunpack.c.l.b16 %v1359
        %v1383 = vunpack.c.l.b16 %v1360
        %v1384 = vunpack.c.l.b16 %v1361
        %v1385 = vunpack.c.l.b16 %v1362
        %v1386 = vunpack.c.l.b16 %v1363
        %v1387 = vunpack.c.l.b16 %v1364
        %v1388 = vunpack.c.l.b16 %v1365
        %v1389 = vpack.c.b16 %v1382, %v1381
        %v1390 = vpack.c.b16 %v1384, %v1383
        %v1391 = vpack.c.b16 %v1386, %v1385
        %v1392 = vpack.c.b16 %v1388, %v1387
        %vm1397 = vcmask 523264
        %v1399 = vsel %vm1397, %v1357, 0
        %1401 = vmatprep.subr.bf16.mxu0 0
        %1402 = vmatpush1.bf16.msra.mxu0 %v1389
        %1403 = vmatprep.subr.bf16.mxu0 0
        %1404 = vmatpush1.bf16.msra.mxu0 %v1390
        %1405 = vmatprep.subr.bf16.mxu0 0
        %1406 = vmatpush1.bf16.msra.mxu0 %v1391
        %1407 = vmatprep.subr.bf16.mxu0 0
        %1408 = vmatpush1.bf16.msra.mxu0 %v1392
        %1409 = vmatprep.subr.bf16.mxu0 0
        %1410 = vmatpush1.bf16.msra.mxu0 0
        %1411 = vmatprep.subr.bf16.mxu0 0
        %1412 = vmatpush1.bf16.msra.mxu0 0
        %1413 = vmatprep.subr.bf16.mxu0 0
        %1414 = vmatpush1.bf16.msra.mxu0 0
        %1415 = vmatprep.subr.bf16.mxu0 0
        %1416 = vmatpush1.bf16.msra.mxu0 0
        %1417 = vmatprep.subr.bf16.mxu0 0
        %1418 = vmatpush1.bf16.msra.mxu0 0
        %1419 = vmatprep.subr.bf16.mxu0 0
        %1420 = vmatpush1.bf16.msra.mxu0 0
        %1421 = vmatprep.subr.bf16.mxu0 0
        %1422 = vmatpush1.bf16.msra.mxu0 0
        %1423 = vmatprep.subr.bf16.mxu0 0
        %1424 = vmatpush1.bf16.msra.mxu0 0
        %1425 = vmatprep.subr.bf16.mxu0 0
        %1426 = vmatpush1.bf16.msra.mxu0 0
        %1427 = vmatprep.subr.bf16.mxu0 0
        %1428 = vmatpush1.bf16.msra.mxu0 0
        %1429 = vmatprep.subr.bf16.mxu0 0
        %1430 = vmatpush1.bf16.msra.mxu0 0
        %1431 = vmatprep.subr.bf16.mxu0 0
        %1432 = vmatpush1.bf16.msra.mxu0 0
        %1433 = vmatprep.mubr.bf16.mxu0 0
        %1434 = vmatmul.mubr.bf16.gmra.mrb[0].mxu0 %v1399
        %v1435 = vpop.f32.mrb[0].mxu0
        %v1436 = vadd.f32 %v1371, %v1435
        %v1437 = vpop.f32.mrb[0].mxu0
        %v1438 = vpop.f32.mrb[0].mxu0
        %v1439 = vpop.f32.mrb[0].mxu0
        %1440 = vdwg.mxu0
        %v1441 = vadd.f32 %v1280, %v1436
        %v1442 = vld [vmem:[%s14] sm:$0x1]
        %v1443 = vld [vmem:[%s15] sm:$0x1]
        %v1444 = vsel %vm670, %v1441, 0.0
        %1445 = vadd.xlane.f32.xlu0 %v1444
        %v1446 = vpop.xlane.xlu0 %1445
        %v1447 = vmul.f32 %v1446, %v674
        %v1448 = vsub.f32 %v1441, %v1447
        %v1449 = vmul.f32 %v1448, %v1448
        %v1450 = vsel %vm670, %v1449, 0.0
        %1451 = vadd.xlane.f32.xlu0 %v1450
        %v1452 = vpop.xlane.xlu0 %1451
        %v1453 = vmul.f32 %v1452, %v674
        %v1454 = vadd.f32 %v1453, 1e-12
        %v1455 = vrsqrt.pop %v1454
        %v1456 = vmul.f32 %v1448, %v1455
        %v1458 = vlaneseq
        %v1459 = vshrl.u32 %v1458, 7
        %v1460 = vsub.s32 0, %v1459
        %v1461 = vrot.slane %v1442, %v1460
        %v1463 = vmul.f32 %v1456, %v1461
        %v1465 = vlaneseq
        %v1466 = vshrl.u32 %v1465, 7
        %v1467 = vsub.s32 0, %v1466
        %v1468 = vrot.slane %v1443, %v1467
        %v1470 = vadd.f32 %v1463, %v1468
        %v1471 = vpack.c.bf16 %v1470, %v1470
        %s1472 = scalar_lea.vmem %s4, 48
        %v1473 = vld [vmem:[%s1472] sm:$0xf]
        %v1474 = vld [vmem:[%s1472 + $0x4] sm:$0xf]
        %v1475 = vld [vmem:[%s1472 + $0x8] sm:$0xf]
        %v1476 = vld [vmem:[%s1472 + $0xc] sm:$0xf]
        %v1477 = vld [vmem:[%s1472 + $0x10] sm:$0xf]
        %v1478 = vld [vmem:[%s1472 + $0x14] sm:$0xf]
        %v1479 = vld [vmem:[%s1472 + $0x18] sm:$0xf]
        %v1480 = vld [vmem:[%s1472 + $0x1c] sm:$0xf]
        %v1481 = vld [vmem:[%s1472 + $0x20] sm:$0xf]
        %v1482 = vld [vmem:[%s1472 + $0x24] sm:$0xf]
        %v1483 = vld [vmem:[%s1472 + $0x28] sm:$0xf]
        %v1484 = vld [vmem:[%s1472 + $0x2c] sm:$0xf]
        %s1485 = scalar_lea.vmem %s5, 96
        %v1486 = vld [vmem:[%s1485] sm:$0xff]
        %v1487 = vld [vmem:[%s1485 + $0x8] sm:$0xff]
        %v1488 = vld [vmem:[%s1485 + $0x10] sm:$0xff]
        %v1489 = vld [vmem:[%s1485 + $0x18] sm:$0xff]
        %v1490 = vld [vmem:[%s1485 + $0x20] sm:$0xff]
        %v1491 = vld [vmem:[%s1485 + $0x28] sm:$0xff]
        %v1492 = vld [vmem:[%s1485 + $0x30] sm:$0xff]
        %v1493 = vld [vmem:[%s1485 + $0x38] sm:$0xff]
        %v1494 = vld [vmem:[%s1485 + $0x40] sm:$0xff]
        %v1495 = vld [vmem:[%s1485 + $0x48] sm:$0xff]
        %v1496 = vld [vmem:[%s1485 + $0x50] sm:$0xff]
        %v1497 = vld [vmem:[%s1485 + $0x58] sm:$0xff]
        %1499 = vset.pattern.permute.xlu0 0
        %1500 = vperm.xlu0 %1499, %v1486
        %v1501 = vpop.permute.xlu0 %1500
        %1504 = vset.pattern.permute.xlu0 0
        %1505 = vperm.xlu0 %1504, %v1487
        %v1506 = vpop.permute.xlu0 %1505
        %1509 = vset.pattern.permute.xlu0 0
        %1510 = vperm.xlu0 %1509, %v1488
        %v1511 = vpop.permute.xlu0 %1510
        %1514 = vset.pattern.permute.xlu0 0
        %1515 = vperm.xlu0 %1514, %v1489
        %v1516 = vpop.permute.xlu0 %1515
        %1519 = vset.pattern.permute.xlu0 0
        %1520 = vperm.xlu0 %1519, %v1490
        %v1521 = vpop.permute.xlu0 %1520
        %1524 = vset.pattern.permute.xlu0 0
        %1525 = vperm.xlu0 %1524, %v1491
        %v1526 = vpop.permute.xlu0 %1525
        %1529 = vset.pattern.permute.xlu0 0
        %1530 = vperm.xlu0 %1529, %v1492
        %v1531 = vpop.permute.xlu0 %1530
        %1534 = vset.pattern.permute.xlu0 0
        %1535 = vperm.xlu0 %1534, %v1493
        %v1536 = vpop.permute.xlu0 %1535
        %1539 = vset.pattern.permute.xlu0 0
        %1540 = vperm.xlu0 %1539, %v1494
        %v1541 = vpop.permute.xlu0 %1540
        %1544 = vset.pattern.permute.xlu0 0
        %1545 = vperm.xlu0 %1544, %v1495
        %v1546 = vpop.permute.xlu0 %1545
        %1549 = vset.pattern.permute.xlu0 0
        %1550 = vperm.xlu0 %1549, %v1496
        %v1551 = vpop.permute.xlu0 %1550
        %1554 = vset.pattern.permute.xlu0 0
        %1555 = vperm.xlu0 %1554, %v1497
        %v1556 = vpop.permute.xlu0 %1555
        %v1570 = vunpack.c.l.b16 %v1473
        %v1571 = vunpack.c.l.b16 %v1474
        %v1572 = vunpack.c.l.b16 %v1475
        %v1573 = vunpack.c.l.b16 %v1476
        %v1574 = vunpack.c.l.b16 %v1477
        %v1575 = vunpack.c.l.b16 %v1478
        %v1576 = vunpack.c.l.b16 %v1479
        %v1577 = vunpack.c.l.b16 %v1480
        %v1578 = vunpack.c.l.b16 %v1481
        %v1579 = vunpack.c.l.b16 %v1482
        %v1580 = vunpack.c.l.b16 %v1483
        %v1581 = vunpack.c.l.b16 %v1484
        %v1582 = vpack.c.b16 %v1571, %v1570
        %v1583 = vpack.c.b16 %v1573, %v1572
        %v1584 = vpack.c.b16 %v1575, %v1574
        %v1585 = vpack.c.b16 %v1577, %v1576
        %v1586 = vpack.c.b16 %v1579, %v1578
        %v1587 = vpack.c.b16 %v1581, %v1580
        %v1589 = vsel %vm670, %v1582, 0
        %v1592 = vsel %vm670, %v1583, 0
        %v1595 = vsel %vm670, %v1584, 0
        %v1598 = vsel %vm670, %v1585, 0
        %v1601 = vsel %vm670, %v1586, 0
        %v1604 = vsel %vm670, %v1587, 0
        %v1607 = vsel %vm670, %v1471, 0
        %1609 = vmatprep.subr.bf16.mxu0 0
        %1610 = vmatpush1.bf16.xpose.msra.mxu0 %v1607
        %1611 = vmatprep.subr.bf16.mxu0 0
        %1612 = vmatpush1.bf16.xpose.msra.mxu0 0
        %1613 = vmatprep.subr.bf16.mxu0 0
        %1614 = vmatpush1.bf16.xpose.msra.mxu0 0
        %1615 = vmatprep.subr.bf16.mxu0 0
        %1616 = vmatpush1.bf16.xpose.msra.mxu0 0
        %1617 = vmatprep.subr.bf16.mxu0 0
        %1618 = vmatpush1.bf16.xpose.msra.mxu0 0
        %1619 = vmatprep.subr.bf16.mxu0 0
        %1620 = vmatpush1.bf16.xpose.msra.mxu0 0
        %1621 = vmatprep.subr.bf16.mxu0 0
        %1622 = vmatpush1.bf16.xpose.msra.mxu0 0
        %1623 = vmatprep.subr.bf16.mxu0 0
        %1624 = vmatpush1.bf16.xpose.msra.mxu0 0
        %1625 = vmatprep.subr.bf16.mxu0 0
        %1626 = vmatpush1.bf16.xpose.msra.mxu0 0
        %1627 = vmatprep.subr.bf16.mxu0 0
        %1628 = vmatpush1.bf16.xpose.msra.mxu0 0
        %1629 = vmatprep.subr.bf16.mxu0 0
        %1630 = vmatpush1.bf16.xpose.msra.mxu0 0
        %1631 = vmatprep.subr.bf16.mxu0 0
        %1632 = vmatpush1.bf16.xpose.msra.mxu0 0
        %1633 = vmatprep.subr.bf16.mxu0 0
        %1634 = vmatpush1.bf16.xpose.msra.mxu0 0
        %1635 = vmatprep.subr.bf16.mxu0 0
        %1636 = vmatpush1.bf16.xpose.msra.mxu0 0
        %1637 = vmatprep.subr.bf16.mxu0 0
        %1638 = vmatpush1.bf16.xpose.msra.mxu0 0
        %1639 = vmatprep.subr.bf16.mxu0 0
        %1640 = vmatpush1.bf16.xpose.msra.mxu0 0
        %1641 = vmatprep.mubr.bf16.mxu0 0
        %1642 = vmatmul.mubr.bf16.gmra.mrb[0].mxu0 %v1589
        %v1643 = vpop.f32.mrb[0].mxu0
        %v1644 = vadd.f32 %v1501, %v1643
        %v1645 = vpop.f32.mrb[0].mxu0
        %v1646 = vpop.f32.mrb[0].mxu0
        %v1647 = vadd.f32 %v1506, %v1646
        %v1648 = vpop.f32.mrb[0].mxu0
        %1649 = vmatprep.mubr.bf16.mxu0 0
        %1650 = vmatmul.mubr.bf16.gmra.mrb[0].mxu0 %v1592
        %v1651 = vpop.f32.mrb[0].mxu0
        %v1652 = vadd.f32 %v1511, %v1651
        %v1653 = vpop.f32.mrb[0].mxu0
        %v1654 = vpop.f32.mrb[0].mxu0
        %v1655 = vadd.f32 %v1516, %v1654
        %v1656 = vpop.f32.mrb[0].mxu0
        %1657 = vmatprep.mubr.bf16.mxu0 0
        %1658 = vmatmul.mubr.bf16.gmra.mrb[0].mxu0 %v1595
        %v1659 = vpop.f32.mrb[0].mxu0
        %v1660 = vadd.f32 %v1521, %v1659
        %v1661 = vpop.f32.mrb[0].mxu0
        %v1662 = vpop.f32.mrb[0].mxu0
        %v1663 = vadd.f32 %v1526, %v1662
        %v1664 = vpop.f32.mrb[0].mxu0
        %1665 = vmatprep.mubr.bf16.mxu0 0
        %1666 = vmatmul.mubr.bf16.gmra.mrb[0].mxu0 %v1598
        %v1667 = vpop.f32.mrb[0].mxu0
        %v1668 = vadd.f32 %v1531, %v1667
        %v1669 = vpop.f32.mrb[0].mxu0
        %v1670 = vpop.f32.mrb[0].mxu0
        %v1671 = vadd.f32 %v1536, %v1670
        %v1672 = vpop.f32.mrb[0].mxu0
        %1673 = vmatprep.mubr.bf16.mxu0 0
        %1674 = vmatmul.mubr.bf16.gmra.mrb[0].mxu0 %v1601
        %v1675 = vpop.f32.mrb[0].mxu0
        %v1676 = vadd.f32 %v1541, %v1675
        %v1677 = vpop.f32.mrb[0].mxu0
        %v1678 = vpop.f32.mrb[0].mxu0
        %v1679 = vadd.f32 %v1546, %v1678
        %v1680 = vpop.f32.mrb[0].mxu0
        %1681 = vmatprep.mubr.bf16.mxu0 0
        %1682 = vmatmul.mubr.bf16.gmra.mrb[0].mxu0 %v1604
        %v1683 = vpop.f32.mrb[0].mxu0
        %v1684 = vadd.f32 %v1551, %v1683
        %v1685 = vpop.f32.mrb[0].mxu0
        %v1686 = vpop.f32.mrb[0].mxu0
        %v1687 = vadd.f32 %v1556, %v1686
        %v1688 = vpop.f32.mrb[0].mxu0
        %1689 = vdwg.mxu0
        %v1690 = vpack.c.bf16 %v1647, %v1644
        %v1691 = vpack.c.bf16 %v1655, %v1652
        %v1692 = vpack.c.bf16 %v1663, %v1660
        %v1693 = vpack.c.bf16 %v1671, %v1668
        %v1694 = vpack.c.bf16 %v1679, %v1676
        %v1695 = vpack.c.bf16 %v1687, %v1684
        %1696 = vxpose.xlu0.c.b16.start [1/8] %v1690, 128
        %1697 = vxpose.xlu0.c.b16.cont [2/8] 0, 128
        %1698 = vxpose.xlu0.c.b16.cont [3/8] 0, 128
        %1699 = vxpose.xlu0.c.b16.cont [4/8] 0, 128
        %1700 = vxpose.xlu0.c.b16.cont [5/8] 0, 128
        %1701 = vxpose.xlu0.c.b16.cont [6/8] 0, 128
        %1702 = vxpose.xlu0.c.b16.cont [7/8] 0, 128
        %1703 = vxpose.xlu0.c.b16.end [8/8] 0, 128
        %v1704 = vpop.trf.xlu0
        %v1705 = vpop.trf.xlu0
        %v1706 = vpop.trf.xlu0
        %v1707 = vpop.trf.xlu0
        %v1708 = vpop.trf.xlu0
        %v1709 = vpop.trf.xlu0
        %v1710 = vpop.trf.xlu0
        %v1711 = vpop.trf.xlu0
        %v1713 = vsel %vm945, %v1704, 0
        %1715 = vmatprep.subr.bf16.mxu0 0
        %1716 = vmatpush1.bf16.msra.mxu0 %v1692
        %1717 = vmatprep.subr.bf16.mxu0 0
        %1718 = vmatpush1.bf16.msra.mxu0 0
        %1719 = vmatprep.subr.bf16.mxu0 0
        %1720 = vmatpush1.bf16.msra.mxu0 0
        %1721 = vmatprep.subr.bf16.mxu0 0
        %1722 = vmatpush1.bf16.msra.mxu0 0
        %1723 = vmatprep.subr.bf16.mxu0 0
        %1724 = vmatpush1.bf16.msra.mxu0 0
        %1725 = vmatprep.subr.bf16.mxu0 0
        %1726 = vmatpush1.bf16.msra.mxu0 0
        %1727 = vmatprep.subr.bf16.mxu0 0
        %1728 = vmatpush1.bf16.msra.mxu0 0
        %1729 = vmatprep.subr.bf16.mxu0 0
        %1730 = vmatpush1.bf16.msra.mxu0 0
        %1731 = vmatprep.subr.bf16.mxu0 0
        %1732 = vmatpush1.bf16.msra.mxu0 0
        %1733 = vmatprep.subr.bf16.mxu0 0
        %1734 = vmatpush1.bf16.msra.mxu0 0
        %1735 = vmatprep.subr.bf16.mxu0 0
        %1736 = vmatpush1.bf16.msra.mxu0 0
        %1737 = vmatprep.subr.bf16.mxu0 0
        %1738 = vmatpush1.bf16.msra.mxu0 0
        %1739 = vmatprep.subr.bf16.mxu0 0
        %1740 = vmatpush1.bf16.msra.mxu0 0
        %1741 = vmatprep.subr.bf16.mxu0 0
        %1742 = vmatpush1.bf16.msra.mxu0 0
        %1743 = vmatprep.subr.bf16.mxu0 0
        %1744 = vmatpush1.bf16.msra.mxu0 0
        %1745 = vmatprep.subr.bf16.mxu0 0
        %1746 = vmatpush1.bf16.msra.mxu0 0
        %1747 = vmatprep.mubr.bf16.mxu0 0
        %1748 = vmatmul.mubr.bf16.gmra.mrb[0].mxu0 %v1713
        %v1749 = vpop.f32.mrb[0].mxu0
        %v1750 = vadd.f32 %v704, %v1749
        %v1751 = vpop.f32.mrb[0].mxu0
        %v1752 = vpop.f32.mrb[0].mxu0
        %v1753 = vpop.f32.mrb[0].mxu0
        %1754 = vdwg.mxu0
        %v1755 = vsel %vm989, %v1750, -inf
        %1756 = vmax.xlane.f32.xlu0 %v1755
        %v1757 = vpop.xlane.xlu0 %1756
        %v1758 = vsub.f32 %v1750, %v1757
        %v1759 = vmul.f32 %v1758, 1.442695
        %v1760 = vpow.pop %v1759
        %v1761 = vsel %vm989, %v1760, 0.0
        %1762 = vadd.xlane.f32.xlu0 %v1761
        %v1763 = vpop.xlane.xlu0 %1762
        %v1764 = vrcp.pop %v1763
        %v1765 = vmul.f32 %v1760, %v1764
        %v1766 = vpack.c.bf16 %v1765, %v1765
        %v1768 = vsel %vm989, %v1694, 0
        %v1771 = vsel %vm989, %v1766, 0
        %1773 = vmatprep.subr.bf16.mxu0 0
        %1774 = vmatpush1.bf16.xpose.msra.mxu0 %v1771
        %1775 = vmatprep.subr.bf16.mxu0 0
        %1776 = vmatpush1.bf16.xpose.msra.mxu0 0
        %1777 = vmatprep.subr.bf16.mxu0 0
        %1778 = vmatpush1.bf16.xpose.msra.mxu0 0
        %1779 = vmatprep.subr.bf16.mxu0 0
        %1780 = vmatpush1.bf16.xpose.msra.mxu0 0
        %1781 = vmatprep.subr.bf16.mxu0 0
        %1782 = vmatpush1.bf16.xpose.msra.mxu0 0
        %1783 = vmatprep.subr.bf16.mxu0 0
        %1784 = vmatpush1.bf16.xpose.msra.mxu0 0
        %1785 = vmatprep.subr.bf16.mxu0 0
        %1786 = vmatpush1.bf16.xpose.msra.mxu0 0
        %1787 = vmatprep.subr.bf16.mxu0 0
        %1788 = vmatpush1.bf16.xpose.msra.mxu0 0
        %1789 = vmatprep.subr.bf16.mxu0 0
        %1790 = vmatpush1.bf16.xpose.msra.mxu0 0
        %1791 = vmatprep.subr.bf16.mxu0 0
        %1792 = vmatpush1.bf16.xpose.msra.mxu0 0
        %1793 = vmatprep.subr.bf16.mxu0 0
        %1794 = vmatpush1.bf16.xpose.msra.mxu0 0
        %1795 = vmatprep.subr.bf16.mxu0 0
        %1796 = vmatpush1.bf16.xpose.msra.mxu0 0
        %1797 = vmatprep.subr.bf16.mxu0 0
        %1798 = vmatpush1.bf16.xpose.msra.mxu0 0
        %1799 = vmatprep.subr.bf16.mxu0 0
        %1800 = vmatpush1.bf16.xpose.msra.mxu0 0
        %1801 = vmatprep.subr.bf16.mxu0 0
        %1802 = vmatpush1.bf16.xpose.msra.mxu0 0
        %1803 = vmatprep.subr.bf16.mxu0 0
        %1804 = vmatpush1.bf16.xpose.msra.mxu0 0
        %1805 = vmatprep.mubr.bf16.mxu0 0
        %1806 = vmatmul.mubr.bf16.gmra.mrb[0].mxu0 %v1768
        %v1807 = vpop.f32.mrb[0].mxu0
        %v1808 = vadd.f32 0.0, %v1807
        %v1809 = vpop.f32.mrb[0].mxu0
        %v1810 = vpop.f32.mrb[0].mxu0
        %v1811 = vadd.f32 0.0, %v1810
        %v1812 = vpop.f32.mrb[0].mxu0
        %1813 = vdwg.mxu0
        %1814 = vxpose.xlu0.c.b16.start [1/8] %v1691, 128
        %1815 = vxpose.xlu0.c.b16.cont [2/8] 0, 128
        %1816 = vxpose.xlu0.c.b16.cont [3/8] 0, 128
        %1817 = vxpose.xlu0.c.b16.cont [4/8] 0, 128
        %1818 = vxpose.xlu0.c.b16.cont [5/8] 0, 128
        %1819 = vxpose.xlu0.c.b16.cont [6/8] 0, 128
        %1820 = vxpose.xlu0.c.b16.cont [7/8] 0, 128
        %1821 = vxpose.xlu0.c.b16.end [8/8] 0, 128
        %v1822 = vpop.trf.xlu0
        %v1823 = vpop.trf.xlu0
        %v1824 = vpop.trf.xlu0
        %v1825 = vpop.trf.xlu0
        %v1826 = vpop.trf.xlu0
        %v1827 = vpop.trf.xlu0
        %v1828 = vpop.trf.xlu0
        %v1829 = vpop.trf.xlu0
        %v1831 = vsel %vm945, %v1822, 0
        %1833 = vmatprep.subr.bf16.mxu0 0
        %1834 = vmatpush1.bf16.msra.mxu0 %v1693
        %1835 = vmatprep.subr.bf16.mxu0 0
        %1836 = vmatpush1.bf16.msra.mxu0 0
        %1837 = vmatprep.subr.bf16.mxu0 0
        %1838 = vmatpush1.bf16.msra.mxu0 0
        %1839 = vmatprep.subr.bf16.mxu0 0
        %1840 = vmatpush1.bf16.msra.mxu0 0
        %1841 = vmatprep.subr.bf16.mxu0 0
        %1842 = vmatpush1.bf16.msra.mxu0 0
        %1843 = vmatprep.subr.bf16.mxu0 0
        %1844 = vmatpush1.bf16.msra.mxu0 0
        %1845 = vmatprep.subr.bf16.mxu0 0
        %1846 = vmatpush1.bf16.msra.mxu0 0
        %1847 = vmatprep.subr.bf16.mxu0 0
        %1848 = vmatpush1.bf16.msra.mxu0 0
        %1849 = vmatprep.subr.bf16.mxu0 0
        %1850 = vmatpush1.bf16.msra.mxu0 0
        %1851 = vmatprep.subr.bf16.mxu0 0
        %1852 = vmatpush1.bf16.msra.mxu0 0
        %1853 = vmatprep.subr.bf16.mxu0 0
        %1854 = vmatpush1.bf16.msra.mxu0 0
        %1855 = vmatprep.subr.bf16.mxu0 0
        %1856 = vmatpush1.bf16.msra.mxu0 0
        %1857 = vmatprep.subr.bf16.mxu0 0
        %1858 = vmatpush1.bf16.msra.mxu0 0
        %1859 = vmatprep.subr.bf16.mxu0 0
        %1860 = vmatpush1.bf16.msra.mxu0 0
        %1861 = vmatprep.subr.bf16.mxu0 0
        %1862 = vmatpush1.bf16.msra.mxu0 0
        %1863 = vmatprep.subr.bf16.mxu0 0
        %1864 = vmatpush1.bf16.msra.mxu0 0
        %1865 = vmatprep.mubr.bf16.mxu0 0
        %1866 = vmatmul.mubr.bf16.gmra.mrb[0].mxu0 %v1831
        %v1867 = vpop.f32.mrb[0].mxu0
        %v1868 = vadd.f32 %v704, %v1867
        %v1869 = vpop.f32.mrb[0].mxu0
        %v1870 = vpop.f32.mrb[0].mxu0
        %v1871 = vpop.f32.mrb[0].mxu0
        %1872 = vdwg.mxu0
        %v1873 = vsel %vm989, %v1868, -inf
        %1874 = vmax.xlane.f32.xlu0 %v1873
        %v1875 = vpop.xlane.xlu0 %1874
        %v1876 = vsub.f32 %v1868, %v1875
        %v1877 = vmul.f32 %v1876, 1.442695
        %v1878 = vpow.pop %v1877
        %v1879 = vsel %vm989, %v1878, 0.0
        %1880 = vadd.xlane.f32.xlu0 %v1879
        %v1881 = vpop.xlane.xlu0 %1880
        %v1882 = vrcp.pop %v1881
        %v1883 = vmul.f32 %v1878, %v1882
        %v1884 = vpack.c.bf16 %v1883, %v1883
        %v1886 = vsel %vm989, %v1695, 0
        %v1889 = vsel %vm989, %v1884, 0
        %1891 = vmatprep.subr.bf16.mxu0 0
        %1892 = vmatpush1.bf16.xpose.msra.mxu0 %v1889
        %1893 = vmatprep.subr.bf16.mxu0 0
        %1894 = vmatpush1.bf16.xpose.msra.mxu0 0
        %1895 = vmatprep.subr.bf16.mxu0 0
        %1896 = vmatpush1.bf16.xpose.msra.mxu0 0
        %1897 = vmatprep.subr.bf16.mxu0 0
        %1898 = vmatpush1.bf16.xpose.msra.mxu0 0
        %1899 = vmatprep.subr.bf16.mxu0 0
        %1900 = vmatpush1.bf16.xpose.msra.mxu0 0
        %1901 = vmatprep.subr.bf16.mxu0 0
        %1902 = vmatpush1.bf16.xpose.msra.mxu0 0
        %1903 = vmatprep.subr.bf16.mxu0 0
        %1904 = vmatpush1.bf16.xpose.msra.mxu0 0
        %1905 = vmatprep.subr.bf16.mxu0 0
        %1906 = vmatpush1.bf16.xpose.msra.mxu0 0
        %1907 = vmatprep.subr.bf16.mxu0 0
        %1908 = vmatpush1.bf16.xpose.msra.mxu0 0
        %1909 = vmatprep.subr.bf16.mxu0 0
        %1910 = vmatpush1.bf16.xpose.msra.mxu0 0
        %1911 = vmatprep.subr.bf16.mxu0 0
        %1912 = vmatpush1.bf16.xpose.msra.mxu0 0
        %1913 = vmatprep.subr.bf16.mxu0 0
        %1914 = vmatpush1.bf16.xpose.msra.mxu0 0
        %1915 = vmatprep.subr.bf16.mxu0 0
        %1916 = vmatpush1.bf16.xpose.msra.mxu0 0
        %1917 = vmatprep.subr.bf16.mxu0 0
        %1918 = vmatpush1.bf16.xpose.msra.mxu0 0
        %1919 = vmatprep.subr.bf16.mxu0 0
        %1920 = vmatpush1.bf16.xpose.msra.mxu0 0
        %1921 = vmatprep.subr.bf16.mxu0 0
        %1922 = vmatpush1.bf16.xpose.msra.mxu0 0
        %1923 = vmatprep.mubr.bf16.mxu0 0
        %1924 = vmatmul.mubr.bf16.gmra.mrb[0].mxu0 %v1886
        %v1925 = vpop.f32.mrb[0].mxu0
        %v1926 = vadd.f32 0.0, %v1925
        %v1927 = vpop.f32.mrb[0].mxu0
        %v1928 = vpop.f32.mrb[0].mxu0
        %v1929 = vadd.f32 0.0, %v1928
        %v1930 = vpop.f32.mrb[0].mxu0
        %1931 = vdwg.mxu0
        %v1932 = vpack.c.bf16 %v1811, %v1808
        %v1933 = vpack.c.bf16 %v1929, %v1926
        %s1934 = scalar_lea.vmem %s6, 16
        %v1935 = vld [vmem:[%s1934] sm:$0xf]
        %v1936 = vld [vmem:[%s1934 + $0x4] sm:$0xf]
        %v1937 = vld [vmem:[%s1934 + $0x8] sm:$0xf]
        %v1938 = vld [vmem:[%s1934 + $0xc] sm:$0xf]
        %s1939 = scalar_lea.vmem %s7, 1
        %v1940 = vld [vmem:[%s1939] sm:$0x1]
        %v1942 = vlaneseq
        %v1943 = vshrl.u32 %v1942, 7
        %v1944 = vsub.s32 0, %v1943
        %v1945 = vrot.slane %v1940, %v1944
        %1947 = vxpose.xlu0.c.b16.start [1/8] %v1932, 128
        %1948 = vxpose.xlu0.c.b16.cont [2/8] %v1933, 128
        %1949 = vxpose.xlu0.c.b16.cont [3/8] 0, 128
        %1950 = vxpose.xlu0.c.b16.cont [4/8] 0, 128
        %1951 = vxpose.xlu0.c.b16.cont [5/8] 0, 128
        %1952 = vxpose.xlu0.c.b16.cont [6/8] 0, 128
        %1953 = vxpose.xlu0.c.b16.cont [7/8] 0, 128
        %1954 = vxpose.xlu0.c.b16.end [8/8] 0, 128
        %v1955 = vpop.trf.xlu0
        %v1956 = vpop.trf.xlu0
        %v1957 = vpop.trf.xlu0
        %v1958 = vpop.trf.xlu0
        %v1959 = vpop.trf.xlu0
        %v1960 = vpop.trf.xlu0
        %v1961 = vpop.trf.xlu0
        %v1962 = vpop.trf.xlu0
        %v1967 = vunpack.c.l.b16 %v1935
        %v1968 = vunpack.c.l.b16 %v1936
        %v1969 = vunpack.c.l.b16 %v1937
        %v1970 = vunpack.c.l.b16 %v1938
        %v1971 = vpack.c.b16 %v1968, %v1967
        %v1972 = vpack.c.b16 %v1970, %v1969
        %v1976 = vsel %vm670, %v1955, 0
        %1978 = vmatprep.subr.bf16.mxu0 0
        %1979 = vmatpush1.bf16.msra.mxu0 %v1971
        %1980 = vmatprep.subr.bf16.mxu0 0
        %1981 = vmatpush1.bf16.msra.mxu0 %v1972
        %1982 = vmatprep.subr.bf16.mxu0 0
        %1983 = vmatpush1.bf16.msra.mxu0 0
        %1984 = vmatprep.subr.bf16.mxu0 0
        %1985 = vmatpush1.bf16.msra.mxu0 0
        %1986 = vmatprep.subr.bf16.mxu0 0
        %1987 = vmatpush1.bf16.msra.mxu0 0
        %1988 = vmatprep.subr.bf16.mxu0 0
        %1989 = vmatpush1.bf16.msra.mxu0 0
        %1990 = vmatprep.subr.bf16.mxu0 0
        %1991 = vmatpush1.bf16.msra.mxu0 0
        %1992 = vmatprep.subr.bf16.mxu0 0
        %1993 = vmatpush1.bf16.msra.mxu0 0
        %1994 = vmatprep.subr.bf16.mxu0 0
        %1995 = vmatpush1.bf16.msra.mxu0 0
        %1996 = vmatprep.subr.bf16.mxu0 0
        %1997 = vmatpush1.bf16.msra.mxu0 0
        %1998 = vmatprep.subr.bf16.mxu0 0
        %1999 = vmatpush1.bf16.msra.mxu0 0
        %2000 = vmatprep.subr.bf16.mxu0 0
        %2001 = vmatpush1.bf16.msra.mxu0 0
        %2002 = vmatprep.subr.bf16.mxu0 0
        %2003 = vmatpush1.bf16.msra.mxu0 0
        %2004 = vmatprep.subr.bf16.mxu0 0
        %2005 = vmatpush1.bf16.msra.mxu0 0
        %2006 = vmatprep.subr.bf16.mxu0 0
        %2007 = vmatpush1.bf16.msra.mxu0 0
        %2008 = vmatprep.subr.bf16.mxu0 0
        %2009 = vmatpush1.bf16.msra.mxu0 0
        %2010 = vmatprep.mubr.bf16.mxu0 0
        %2011 = vmatmul.mubr.bf16.gmra.mrb[0].mxu0 %v1976
        %v2012 = vpop.f32.mrb[0].mxu0
        %v2013 = vadd.f32 %v1945, %v2012
        %v2014 = vpop.f32.mrb[0].mxu0
        %v2015 = vpop.f32.mrb[0].mxu0
        %v2016 = vpop.f32.mrb[0].mxu0
        %2017 = vdwg.mxu0
        %v2018 = vadd.f32 %v1470, %v2013
        %s2019 = scalar_lea.vmem %s8, 1
        %v2020 = vld [vmem:[%s2019] sm:$0x1]
        %s2021 = scalar_lea.vmem %s9, 1
        %v2022 = vld [vmem:[%s2021] sm:$0x1]
        %v2023 = vsel %vm670, %v2018, 0.0
        %2024 = vadd.xlane.f32.xlu0 %v2023
        %v2025 = vpop.xlane.xlu0 %2024
        %v2026 = vmul.f32 %v2025, %v674
        %v2027 = vsub.f32 %v2018, %v2026
        %v2028 = vmul.f32 %v2027, %v2027
        %v2029 = vsel %vm670, %v2028, 0.0
        %2030 = vadd.xlane.f32.xlu0 %v2029
        %v2031 = vpop.xlane.xlu0 %2030
        %v2032 = vmul.f32 %v2031, %v674
        %v2033 = vadd.f32 %v2032, 1e-12
        %v2034 = vrsqrt.pop %v2033
        %v2035 = vmul.f32 %v2027, %v2034
        %v2037 = vlaneseq
        %v2038 = vshrl.u32 %v2037, 7
        %v2039 = vsub.s32 0, %v2038
        %v2040 = vrot.slane %v2020, %v2039
        %v2042 = vmul.f32 %v2035, %v2040
        %v2044 = vlaneseq
        %v2045 = vshrl.u32 %v2044, 7
        %v2046 = vsub.s32 0, %v2045
        %v2047 = vrot.slane %v2022, %v2046
        %v2049 = vadd.f32 %v2042, %v2047
        %v2050 = vpack.c.bf16 %v2049, %v2049
        %s2051 = scalar_lea.vmem %s10, 16
        %v2052 = vld [vmem:[%s2051] sm:$0xf]
        %v2053 = vld [vmem:[%s2051 + $0x4] sm:$0xf]
        %v2054 = vld [vmem:[%s2051 + $0x8] sm:$0xf]
        %v2055 = vld [vmem:[%s2051 + $0xc] sm:$0xf]
        %s2056 = scalar_lea.vmem %s11, 1
        %v2057 = vld [vmem:[%s2056] sm:$0x1]
        %v2059 = vlaneseq
        %v2060 = vshrl.u32 %v2059, 7
        %v2061 = vsub.s32 0, %v2060
        %v2062 = vrot.slane %v2057, %v2061
        %v2068 = vunpack.c.l.b16 %v2052
        %v2069 = vunpack.c.l.b16 %v2053
        %v2070 = vunpack.c.l.b16 %v2054
        %v2071 = vunpack.c.l.b16 %v2055
        %v2072 = vpack.c.b16 %v2069, %v2068
        %v2073 = vpack.c.b16 %v2071, %v2070
        %v2077 = vsel %vm670, %v2050, 0
        %2079 = vmatprep.subr.bf16.mxu0 0
        %2080 = vmatpush1.bf16.msra.mxu0 %v2072
        %2081 = vmatprep.subr.bf16.mxu0 0
        %2082 = vmatpush1.bf16.msra.mxu0 %v2073
        %2083 = vmatprep.subr.bf16.mxu0 0
        %2084 = vmatpush1.bf16.msra.mxu0 0
        %2085 = vmatprep.subr.bf16.mxu0 0
        %2086 = vmatpush1.bf16.msra.mxu0 0
        %2087 = vmatprep.subr.bf16.mxu0 0
        %2088 = vmatpush1.bf16.msra.mxu0 0
        %2089 = vmatprep.subr.bf16.mxu0 0
        %2090 = vmatpush1.bf16.msra.mxu0 0
        %2091 = vmatprep.subr.bf16.mxu0 0
        %2092 = vmatpush1.bf16.msra.mxu0 0
        %2093 = vmatprep.subr.bf16.mxu0 0
        %2094 = vmatpush1.bf16.msra.mxu0 0
        %2095 = vmatprep.subr.bf16.mxu0 0
        %2096 = vmatpush1.bf16.msra.mxu0 0
        %2097 = vmatprep.subr.bf16.mxu0 0
        %2098 = vmatpush1.bf16.msra.mxu0 0
        %2099 = vmatprep.subr.bf16.mxu0 0
        %2100 = vmatpush1.bf16.msra.mxu0 0
        %2101 = vmatprep.subr.bf16.mxu0 0
        %2102 = vmatpush1.bf16.msra.mxu0 0
        %2103 = vmatprep.subr.bf16.mxu0 0
        %2104 = vmatpush1.bf16.msra.mxu0 0
        %2105 = vmatprep.subr.bf16.mxu0 0
        %2106 = vmatpush1.bf16.msra.mxu0 0
        %2107 = vmatprep.subr.bf16.mxu0 0
        %2108 = vmatpush1.bf16.msra.mxu0 0
        %2109 = vmatprep.subr.bf16.mxu0 0
        %2110 = vmatpush1.bf16.msra.mxu0 0
        %2111 = vmatprep.mubr.bf16.mxu0 0
        %2112 = vmatmul.mubr.bf16.gmra.mrb[0].mxu0 %v2077
        %v2113 = vpop.f32.mrb[0].mxu0
        %v2114 = vadd.f32 %v2062, %v2113
        %v2115 = vpop.f32.mrb[0].mxu0
        %v2116 = vpop.f32.mrb[0].mxu0
        %v2117 = vpop.f32.mrb[0].mxu0
        %2118 = vdwg.mxu0
        %v2119 = vmul.f32 %v2114, %v2114
        %v2120 = vmul.f32 %v2114, %v2119
        %v2121 = vmul.f32 %v2120, 0.044715
        %v2122 = vadd.f32 %v2114, %v2121
        %v2123 = vmul.f32 %v2122, 0.7978846
        %v2124 = vtanh.pop %v2123
        %v2125 = vadd.f32 %v2124, 1.0
        %v2126 = vmul.f32 %v2125, 0.5
        %v2127 = vmul.f32 %v2114, %v2126
        %v2128 = vpack.c.bf16 %v2127, %v2127
        %s2129 = scalar_lea.vmem %s12, 32
        %v2130 = vld [vmem:[%s2129] sm:$0xf]
        %v2131 = vld [vmem:[%s2129 + $0x4] sm:$0xf]
        %v2132 = vld [vmem:[%s2129 + $0x8] sm:$0xf]
        %v2133 = vld [vmem:[%s2129 + $0xc] sm:$0xf]
        %v2134 = vld [vmem:[%s2129 + $0x10] sm:$0xf]
        %v2135 = vld [vmem:[%s2129 + $0x14] sm:$0xf]
        %v2136 = vld [vmem:[%s2129 + $0x18] sm:$0xf]
        %v2137 = vld [vmem:[%s2129 + $0x1c] sm:$0xf]
        %s2138 = scalar_lea.vmem %s13, 1
        %v2139 = vld [vmem:[%s2138] sm:$0x1]
        %v2141 = vlaneseq
        %v2142 = vshrl.u32 %v2141, 7
        %v2143 = vsub.s32 0, %v2142
        %v2144 = vrot.slane %v2139, %v2143
        %v2154 = vunpack.c.l.b16 %v2130
        %v2155 = vunpack.c.l.b16 %v2131
        %v2156 = vunpack.c.l.b16 %v2132
        %v2157 = vunpack.c.l.b16 %v2133
        %v2158 = vunpack.c.l.b16 %v2134
        %v2159 = vunpack.c.l.b16 %v2135
        %v2160 = vunpack.c.l.b16 %v2136
        %v2161 = vunpack.c.l.b16 %v2137
        %v2162 = vpack.c.b16 %v2155, %v2154
        %v2163 = vpack.c.b16 %v2157, %v2156
        %v2164 = vpack.c.b16 %v2159, %v2158
        %v2165 = vpack.c.b16 %v2161, %v2160
        %v2171 = vsel %vm1397, %v2128, 0
        %2173 = vmatprep.subr.bf16.mxu0 0
        %2174 = vmatpush1.bf16.msra.mxu0 %v2162
        %2175 = vmatprep.subr.bf16.mxu0 0
        %2176 = vmatpush1.bf16.msra.mxu0 %v2163
        %2177 = vmatprep.subr.bf16.mxu0 0
        %2178 = vmatpush1.bf16.msra.mxu0 %v2164
        %2179 = vmatprep.subr.bf16.mxu0 0
        %2180 = vmatpush1.bf16.msra.mxu0 %v2165
        %2181 = vmatprep.subr.bf16.mxu0 0
        %2182 = vmatpush1.bf16.msra.mxu0 0
        %2183 = vmatprep.subr.bf16.mxu0 0
        %2184 = vmatpush1.bf16.msra.mxu0 0
        %2185 = vmatprep.subr.bf16.mxu0 0
        %2186 = vmatpush1.bf16.msra.mxu0 0
        %2187 = vmatprep.subr.bf16.mxu0 0
        %2188 = vmatpush1.bf16.msra.mxu0 0
        %2189 = vmatprep.subr.bf16.mxu0 0
        %2190 = vmatpush1.bf16.msra.mxu0 0
        %2191 = vmatprep.subr.bf16.mxu0 0
        %2192 = vmatpush1.bf16.msra.mxu0 0
        %2193 = vmatprep.subr.bf16.mxu0 0
        %2194 = vmatpush1.bf16.msra.mxu0 0
        %2195 = vmatprep.subr.bf16.mxu0 0
        %2196 = vmatpush1.bf16.msra.mxu0 0
        %2197 = vmatprep.subr.bf16.mxu0 0
        %2198 = vmatpush1.bf16.msra.mxu0 0
        %2199 = vmatprep.subr.bf16.mxu0 0
        %2200 = vmatpush1.bf16.msra.mxu0 0
        %2201 = vmatprep.subr.bf16.mxu0 0
        %2202 = vmatpush1.bf16.msra.mxu0 0
        %2203 = vmatprep.subr.bf16.mxu0 0
        %2204 = vmatpush1.bf16.msra.mxu0 0
        %2205 = vmatprep.mubr.bf16.mxu0 0
        %2206 = vmatmul.mubr.bf16.gmra.mrb[0].mxu0 %v2171
        %v2207 = vpop.f32.mrb[0].mxu0
        %v2208 = vadd.f32 %v2144, %v2207
        %v2209 = vpop.f32.mrb[0].mxu0
        %v2210 = vpop.f32.mrb[0].mxu0
        %v2211 = vpop.f32.mrb[0].mxu0
        %2212 = vdwg.mxu0
        %v2213 = vadd.f32 %v2049, %v2208
        %s2214 = scalar_lea.vmem %s14, 1
        %v2215 = vld [vmem:[%s2214] sm:$0x1]
        %s2216 = scalar_lea.vmem %s15, 1
        %v2217 = vld [vmem:[%s2216] sm:$0x1]
        %v2218 = vsel %vm670, %v2213, 0.0
        %2219 = vadd.xlane.f32.xlu0 %v2218
        %v2220 = vpop.xlane.xlu0 %2219
        %v2221 = vmul.f32 %v2220, %v674
        %v2222 = vsub.f32 %v2213, %v2221
        %v2223 = vmul.f32 %v2222, %v2222
        %v2224 = vsel %vm670, %v2223, 0.0
        %2225 = vadd.xlane.f32.xlu0 %v2224
        %v2226 = vpop.xlane.xlu0 %2225
        %v2227 = vmul.f32 %v2226, %v674
        %v2228 = vadd.f32 %v2227, 1e-12
        %v2229 = vrsqrt.pop %v2228
        %v2230 = vmul.f32 %v2222, %v2229
        %v2232 = vlaneseq
        %v2233 = vshrl.u32 %v2232, 7
        %v2234 = vsub.s32 0, %v2233
        %v2235 = vrot.slane %v2215, %v2234
        %v2237 = vmul.f32 %v2230, %v2235
        %v2239 = vlaneseq
        %v2240 = vshrl.u32 %v2239, 7
        %v2241 = vsub.s32 0, %v2240
        %v2242 = vrot.slane %v2217, %v2241
        %v2244 = vadd.f32 %v2237, %v2242
        %v2245 = vpack.c.bf16 %v2244, %v2244
        %v2246 = vld [vmem:[%s16] sm:$0xf]
        %v2247 = vld [vmem:[%s16 + $0x4] sm:$0xf]
        %v2248 = vld [vmem:[%s16 + $0x8] sm:$0xf]
        %v2249 = vld [vmem:[%s16 + $0xc] sm:$0xf]
        %v2250 = vld [vmem:[%s17] sm:$0x1]
        %v2252 = vlaneseq
        %v2253 = vshrl.u32 %v2252, 7
        %v2254 = vsub.s32 0, %v2253
        %v2255 = vrot.slane %v2250, %v2254
        %v2261 = vunpack.c.l.b16 %v2246
        %v2262 = vunpack.c.l.b16 %v2247
        %v2263 = vunpack.c.l.b16 %v2248
        %v2264 = vunpack.c.l.b16 %v2249
        %v2265 = vpack.c.b16 %v2262, %v2261
        %v2266 = vpack.c.b16 %v2264, %v2263
        %v2270 = vsel %vm670, %v2245, 0
        %2272 = vmatprep.subr.bf16.mxu0 0
        %2273 = vmatpush1.bf16.msra.mxu0 %v2265
        %2274 = vmatprep.subr.bf16.mxu0 0
        %2275 = vmatpush1.bf16.msra.mxu0 %v2266
        %2276 = vmatprep.subr.bf16.mxu0 0
        %2277 = vmatpush1.bf16.msra.mxu0 0
        %2278 = vmatprep.subr.bf16.mxu0 0
        %2279 = vmatpush1.bf16.msra.mxu0 0
        %2280 = vmatprep.subr.bf16.mxu0 0
        %2281 = vmatpush1.bf16.msra.mxu0 0
        %2282 = vmatprep.subr.bf16.mxu0 0
        %2283 = vmatpush1.bf16.msra.mxu0 0
        %2284 = vmatprep.subr.bf16.mxu0 0
        %2285 = vmatpush1.bf16.msra.mxu0 0
        %2286 = vmatprep.subr.bf16.mxu0 0
        %2287 = vmatpush1.bf16.msra.mxu0 0
        %2288 = vmatprep.subr.bf16.mxu0 0
        %2289 = vmatpush1.bf16.msra.mxu0 0
        %2290 = vmatprep.subr.bf16.mxu0 0
        %2291 = vmatpush1.bf16.msra.mxu0 0
        %2292 = vmatprep.subr.bf16.mxu0 0
        %2293 = vmatpush1.bf16.msra.mxu0 0
        %2294 = vmatprep.subr.bf16.mxu0 0
        %2295 = vmatpush1.bf16.msra.mxu0 0
        %2296 = vmatprep.subr.bf16.mxu0 0
        %2297 = vmatpush1.bf16.msra.mxu0 0
        %2298 = vmatprep.subr.bf16.mxu0 0
        %2299 = vmatpush1.bf16.msra.mxu0 0
        %2300 = vmatprep.subr.bf16.mxu0 0
        %2301 = vmatpush1.bf16.msra.mxu0 0
        %2302 = vmatprep.subr.bf16.mxu0 0
        %2303 = vmatpush1.bf16.msra.mxu0 0
        %2304 = vmatprep.mubr.bf16.mxu0 0
        %2305 = vmatmul.mubr.bf16.gmra.mrb[0].mxu0 %v2270
        %v2306 = vpop.f32.mrb[0].mxu0
        %v2307 = vadd.f32 %v2255, %v2306
        %v2308 = vpop.f32.mrb[0].mxu0
        %v2309 = vpop.f32.mrb[0].mxu0
        %v2310 = vpop.f32.mrb[0].mxu0
        %2311 = vdwg.mxu0
        %v2312 = vld [vmem:[%s18] sm:$0xf]
        %v2313 = vld [vmem:[%s18 + $0x4] sm:$0xf]
        %v2314 = vld [vmem:[%s18 + $0x8] sm:$0xf]
        %v2315 = vld [vmem:[%s18 + $0xc] sm:$0xf]
        %v2316 = vld [vmem:[%s19] sm:$0x1]
        %v2318 = vlaneseq
        %v2319 = vshrl.u32 %v2318, 7
        %v2320 = vsub.s32 0, %v2319
        %v2321 = vrot.slane %v2316, %v2320
        %v2327 = vunpack.c.l.b16 %v2312
        %v2328 = vunpack.c.l.b16 %v2313
        %v2329 = vunpack.c.l.b16 %v2314
        %v2330 = vunpack.c.l.b16 %v2315
        %v2331 = vpack.c.b16 %v2328, %v2327
        %v2332 = vpack.c.b16 %v2330, %v2329
        %2335 = vmatprep.subr.bf16.mxu0 0
        %2336 = vmatpush1.bf16.msra.mxu0 %v2331
        %2337 = vmatprep.subr.bf16.mxu0 0
        %2338 = vmatpush1.bf16.msra.mxu0 %v2332
        %2339 = vmatprep.subr.bf16.mxu0 0
        %2340 = vmatpush1.bf16.msra.mxu0 0
        %2341 = vmatprep.subr.bf16.mxu0 0
        %2342 = vmatpush1.bf16.msra.mxu0 0
        %2343 = vmatprep.subr.bf16.mxu0 0
        %2344 = vmatpush1.bf16.msra.mxu0 0
        %2345 = vmatprep.subr.bf16.mxu0 0
        %2346 = vmatpush1.bf16.msra.mxu0 0
        %2347 = vmatprep.subr.bf16.mxu0 0
        %2348 = vmatpush1.bf16.msra.mxu0 0
        %2349 = vmatprep.subr.bf16.mxu0 0
        %2350 = vmatpush1.bf16.msra.mxu0 0
        %2351 = vmatprep.subr.bf16.mxu0 0
        %2352 = vmatpush1.bf16.msra.mxu0 0
        %2353 = vmatprep.subr.bf16.mxu0 0
        %2354 = vmatpush1.bf16.msra.mxu0 0
        %2355 = vmatprep.subr.bf16.mxu0 0
        %2356 = vmatpush1.bf16.msra.mxu0 0
        %2357 = vmatprep.subr.bf16.mxu0 0
        %2358 = vmatpush1.bf16.msra.mxu0 0
        %2359 = vmatprep.subr.bf16.mxu0 0
        %2360 = vmatpush1.bf16.msra.mxu0 0
        %2361 = vmatprep.subr.bf16.mxu0 0
        %2362 = vmatpush1.bf16.msra.mxu0 0
        %2363 = vmatprep.subr.bf16.mxu0 0
        %2364 = vmatpush1.bf16.msra.mxu0 0
        %2365 = vmatprep.subr.bf16.mxu0 0
        %2366 = vmatpush1.bf16.msra.mxu0 0
        %2367 = vmatprep.mubr.bf16.mxu0 0
        %2368 = vmatmul.mubr.bf16.gmra.mrb[0].mxu0 %v840
        %v2369 = vpop.f32.mrb[0].mxu0
        %v2370 = vadd.f32 %v2321, %v2369
        %v2371 = vpop.f32.mrb[0].mxu0
        %v2372 = vpop.f32.mrb[0].mxu0
        %v2373 = vpop.f32.mrb[0].mxu0
        %2374 = vdwg.mxu0
        %vm2375 = vcmask 31744
        %v2376 = vsel %vm2375, %v2370, -inf
        %2377 = vmax.xlane.f32.xlu0 %v2376
        %v2378 = vpop.xlane.xlu0 %2377
        %v2379 = vsub.f32 %v2370, %v2378
        %v2380 = vmul.f32 %v2379, 1.442695
        %v2381 = vpow.pop %v2380
        %v2382 = vsel %vm2375, %v2381, 0.0
        %2383 = vadd.xlane.f32.xlu0 %v2382
        %v2384 = vpop.xlane.xlu0 %2383
        %v2385 = vrcp.pop %v2384
        %v2386 = vmul.f32 %v2381, %v2385
        %v2387 = vld [vmem:[%s20] sm:$0xf]
        %v2389 = vsel %vm2375, %v2386, 0
        %vm2391 = vcmask 1043456
        %v2393 = vsel %vm2391, %v2387, 0
        %2395 = vmatprep.subr.mxu0 0.0
        %2396 = vmatpush1.msra.mxu0 %v2393
        %2397 = vmatprep.subr.mxu0 0.0
        %2398 = vmatpush1.msra.mxu0 0.0
        %2399 = vmatprep.subr.mxu0 0.0
        %2400 = vmatpush1.msra.mxu0 0.0
        %2401 = vmatprep.subr.mxu0 0.0
        %2402 = vmatpush1.msra.mxu0 0.0
        %2403 = vmatprep.subr.mxu0 0.0
        %2404 = vmatpush1.msra.mxu0 0.0
        %2405 = vmatprep.subr.mxu0 0.0
        %2406 = vmatpush1.msra.mxu0 0.0
        %2407 = vmatprep.subr.mxu0 0.0
        %2408 = vmatpush1.msra.mxu0 0.0
        %2409 = vmatprep.subr.mxu0 0.0
        %2410 = vmatpush1.msra.mxu0 0.0
        %2411 = vmatprep.subr.mxu0 0.0
        %2412 = vmatpush1.msra.mxu0 0.0
        %2413 = vmatprep.subr.mxu0 0.0
        %2414 = vmatpush1.msra.mxu0 0.0
        %2415 = vmatprep.subr.mxu0 0.0
        %2416 = vmatpush1.msra.mxu0 0.0
        %2417 = vmatprep.subr.mxu0 0.0
        %2418 = vmatpush1.msra.mxu0 0.0
        %2419 = vmatprep.subr.mxu0 0.0
        %2420 = vmatpush1.msra.mxu0 0.0
        %2421 = vmatprep.subr.mxu0 0.0
        %2422 = vmatpush1.msra.mxu0 0.0
        %2423 = vmatprep.subr.mxu0 0.0
        %2424 = vmatpush1.msra.mxu0 0.0
        %2425 = vmatprep.subr.mxu0 0.0
        %2426 = vmatpush1.msra.mxu0 0.0
        %2427 = vmatprep.subr.mxu0 0.0
        %2428 = vmatpush1.msra.mxu0 0.0
        %2429 = vmatprep.subr.mxu0 0.0
        %2430 = vmatpush1.msra.mxu0 0.0
        %2431 = vmatprep.subr.mxu0 0.0
        %2432 = vmatpush1.msra.mxu0 0.0
        %2433 = vmatprep.subr.mxu0 0.0
        %2434 = vmatpush1.msra.mxu0 0.0
        %2435 = vmatprep.subr.mxu0 0.0
        %2436 = vmatpush1.msra.mxu0 0.0
        %2437 = vmatprep.subr.mxu0 0.0
        %2438 = vmatpush1.msra.mxu0 0.0
        %2439 = vmatprep.subr.mxu0 0.0
        %2440 = vmatpush1.msra.mxu0 0.0
        %2441 = vmatprep.subr.mxu0 0.0
        %2442 = vmatpush1.msra.mxu0 0.0
        %2443 = vmatprep.subr.mxu0 0.0
        %2444 = vmatpush1.msra.mxu0 0.0
        %2445 = vmatprep.subr.mxu0 0.0
        %2446 = vmatpush1.msra.mxu0 0.0
        %2447 = vmatprep.subr.mxu0 0.0
        %2448 = vmatpush1.msra.mxu0 0.0
        %2449 = vmatprep.subr.mxu0 0.0
        %2450 = vmatpush1.msra.mxu0 0.0
        %2451 = vmatprep.subr.mxu0 0.0
        %2452 = vmatpush1.msra.mxu0 0.0
        %2453 = vmatprep.subr.mxu0 0.0
        %2454 = vmatpush1.msra.mxu0 0.0
        %2455 = vmatprep.subr.mxu0 0.0
        %2456 = vmatpush1.msra.mxu0 0.0
        %2457 = vmatprep.subr.mxu0 0.0
        %2458 = vmatpush1.msra.mxu0 0.0
        %2459 = vmatprep.mubr.f32.mxu0 0.0
        %2460 = vmatmul.mubr.f32.gmra.mrb[0].mxu0 %v2389
        %v2461 = vpop.f32.mrb[0].mxu0
        %v2462 = vadd.f32 0.0, %v2461
        %v2463 = vpop.f32.mrb[0].mxu0
        %2464 = vdwg.mxu0
        %v2465 = vadd.f32 %v2307, %v2462
        %2466 = vst [vmem:[%s658] sm:$0xff] %v2465
        %s2467 = sand.u32 %s494, 1
        %s2468 = scalar_lea.sflag [#allocation3], %s2467
        %s2469 = sand.u32 %s494, 1
        %s2470 = smul.addr %s2469, 8
        %s2471 = scalar_lea.vmem [#allocation2], %s2470
        // Predicated region
        $region105: #{tpu_custom_call.1} parent=103 // pred_check
          %p2472 = pneg %p504
        $region106: #{tpu_custom_call.1} parent=103 // pred_check_branch
          %2474 = sbr.rel (%p2472) target = $region108
        $region107: #{tpu_custom_call.1} parent=103 // pred_region
          %s2476 = ssub.s32 128, 128
          %2477 = vsyncadd %s2468, %s2476
          %s2478 = smul.addr %s35, 128
          %s2479 = scalar_lea.hbm %s21, %s2478
          %s2481 = sshll.u32 %s2471, 4
          %s2482 = int_to_ptr.vmem [resolvable:$true] %s2481
          %2484 = dma.vmem_to_hbm [thread:$0]  %s2482, 128, %s2479, %s2468
        $region108: #{tpu_custom_call.1} parent=103 // pred_fallthru
          _
      $region104: #{tpu_custom_call.1} parent=5 // pred_fallthru
        _
      %p2485 = scmp.le.s32.totalorder 2, %s30
      // Predicated region
      $region109: #{tpu_custom_call.1} parent=5 // pred_check
        %p2486 = pneg %p2485
      $region110: #{tpu_custom_call.1} parent=5 // pred_check_branch
        %2488 = sbr.rel (%p2486) target = $region112
      $region111: #{tpu_custom_call.1} parent=5 // pred_region
        %s2489 = ssub.s32 %s30, 2
        // Predicated region
        $region113: #{tpu_custom_call.1} parent=111 // pred_check
          %p2490 = pneg %p510
        $region114: #{tpu_custom_call.1} parent=111 // pred_check_branch
          %2492 = sbr.rel (%p2490) target = $region116
        $region115: #{tpu_custom_call.1} parent=111 // pred_region
          %s2493 = sand.u32 %s495, 1
          %s2494 = scalar_lea.sflag [#allocation3], %s2493
          %s2495 = sand.u32 %s495, 1
          %s2496 = smul.addr %s2495, 8
          %s2497 = scalar_lea.vmem [#allocation2], %s2496
          %2498 = dma.done %s2494, 128
        $region116: #{tpu_custom_call.1} parent=111 // pred_fallthru
          _
      $region112: #{tpu_custom_call.1} parent=5 // pred_fallthru
        _
    $region6: #{tpu_custom_call.1} parent=1 // loop_footer
      %s34 = sadd.s32 1, %s30
    $region7: #{tpu_custom_call.1} parent=1 // loop_footer_branch
      %29 = sbr.rel target = $region3
    $region8: #{tpu_custom_call.1} parent=1 // loop_exit
      _
    %2499 = vsyncpa [#allocation3], 1
    %s2500 = scalar_lea.sflag [#allocation3], 1
    %2501 = vsyncpa %s2500, 1

</llo_original>
